<compile_context>
chip_gen: v5e
topology: v5e:2x2
jax: 0.10.0
libtpu: 0.0.40
codegen_flags: <defaults>
</compile_context>

<pallas_src>
import functools

import jax
import jax.numpy as jnp
from jax.experimental import pallas as pl
from jax.experimental.pallas import tpu as pltpu


# ---------------------------------------------------------------------------
# Fused encoder-block kernel (one batch element per grid step)
# ---------------------------------------------------------------------------
def encoder_block_kernel(
    x_ref, pos_ref,
    wq_ref, wk_ref, wv_ref, bq_ref, bk_ref, bv_ref,
    wo_ref, bo_ref,
    ln1_g_ref, ln1_b_ref,
    w1_ref, b1_ref, w2_ref, b2_ref,
    ln2_g_ref, ln2_b_ref,
    o_ref,
    *, heads, compute_dtype,
):
    x = x_ref[0].astype(jnp.float32)          # (L, E) residual stream
    pos = pos_ref[0].astype(jnp.float32)      # (L, E) positional encoding
    L, E = x.shape
    D = E // heads
    scale = 1.0 / (D ** 0.5)

    # --- QKV projections (weights already (in, out); q/k get pos, v does not)
    xp = (x + pos).astype(compute_dtype)
    xv = x.astype(compute_dtype)
    q = jnp.dot(xp, wq_ref[...], preferred_element_type=jnp.float32) + bq_ref[...]
    k = jnp.dot(xp, wk_ref[...], preferred_element_type=jnp.float32) + bk_ref[...]
    v = jnp.dot(xv, wv_ref[...], preferred_element_type=jnp.float32) + bv_ref[...]

    # --- batched multi-head attention (heads as leading batch dim)
    qh = q.astype(compute_dtype).reshape(L, heads, D).transpose(1, 0, 2)  # (H,L,D)
    kh = k.astype(compute_dtype).reshape(L, heads, D).transpose(1, 0, 2)
    vh = v.astype(compute_dtype).reshape(L, heads, D).transpose(1, 0, 2)

    s = jnp.einsum("hqd,hkd->hqk", qh, kh,
                   preferred_element_type=jnp.float32) * scale              # (H,L,L)
    s = s - jnp.max(s, axis=-1, keepdims=True)
    p = jnp.exp(s)
    p = p * pl.reciprocal(jnp.sum(p, axis=-1, keepdims=True), approx=True)  # softmax

    ctx = jnp.einsum("hqk,hkd->hqd", p.astype(compute_dtype), vh,
                     preferred_element_type=jnp.float32)                    # (H,L,D)
    ctx = ctx.transpose(1, 0, 2).reshape(L, E).astype(compute_dtype)

    attn = jnp.dot(ctx, wo_ref[...], preferred_element_type=jnp.float32) + bo_ref[...]

    # --- residual + LayerNorm1 (eps = 1e-5, PyTorch default)
    y1 = attn + x
    m1 = jnp.mean(y1, axis=-1, keepdims=True)
    c1 = y1 - m1
    v1 = jnp.mean(c1 * c1, axis=-1, keepdims=True)
    out1 = c1 * jax.lax.rsqrt(v1 + 1e-5) * ln1_g_ref[...] + ln1_b_ref[...]

    # --- feed-forward: Linear(E -> 8E) -> ReLU -> Linear(8E -> E)
    h = jnp.dot(out1.astype(compute_dtype), w1_ref[...],
                preferred_element_type=jnp.float32) + b1_ref[...]
    h = jnp.maximum(h, 0.0)
    ff = jnp.dot(h.astype(compute_dtype), w2_ref[...],
                 preferred_element_type=jnp.float32) + b2_ref[...]

    # --- residual + LayerNorm2
    y2 = out1 + ff
    m2 = jnp.mean(y2, axis=-1, keepdims=True)
    c2 = y2 - m2
    v2 = jnp.mean(c2 * c2, axis=-1, keepdims=True)
    out2 = c2 * jax.lax.rsqrt(v2 + 1e-5) * ln2_g_ref[...] + ln2_b_ref[...]

    o_ref[0] = out2.astype(o_ref.dtype)


# ---------------------------------------------------------------------------
# pallas_call wrapper
# ---------------------------------------------------------------------------
def _rep(shape):
    """Weight replicated across all grid steps (constant block index)."""
    zeros = (0,) * len(shape)
    return pl.BlockSpec(shape, lambda b, _z=zeros: _z)


def encoder_block(x, pos, lp, *, heads, compute_dtype=jnp.bfloat16):
    B, L, E = x.shape
    H = lp["w1"].shape[1]
    kernel = functools.partial(encoder_block_kernel, heads=heads,
                               compute_dtype=compute_dtype)
    return pl.pallas_call(
        kernel,
        out_shape=jax.ShapeDtypeStruct((B, L, E), x.dtype),
        grid=(B,),
        in_specs=[
            pl.BlockSpec((1, L, E), lambda b: (b, 0, 0)),   # x
            pl.BlockSpec((1, L, E), lambda b: (b, 0, 0)),   # pos
            _rep((E, E)), _rep((E, E)), _rep((E, E)),       # wq wk wv
            _rep((1, E)), _rep((1, E)), _rep((1, E)),       # bq bk bv
            _rep((E, E)), _rep((1, E)),                     # wo bo
            _rep((1, E)), _rep((1, E)),                     # ln1 gamma/beta
            _rep((E, H)), _rep((1, H)),                     # ffn w1 b1
            _rep((H, E)), _rep((1, E)),                     # ffn w2 b2
            _rep((1, E)), _rep((1, E)),                     # ln2 gamma/beta
        ],
        out_specs=pl.BlockSpec((1, L, E), lambda b: (b, 0, 0)),
        compiler_params=pltpu.CompilerParams(
            dimension_semantics=("parallel",),              # v7x: shard batch over 2 TCs
        ),
    )(x, pos,
      lp["wq"], lp["wk"], lp["wv"], lp["bq"], lp["bk"], lp["bv"],
      lp["wo"], lp["bo"], lp["ln1_g"], lp["ln1_b"],
      lp["w1"], lp["b1"], lp["w2"], lp["b2"],
      lp["ln2_g"], lp["ln2_b"])


def transformer_encoder(query, pos, layer_params, *, heads,
                        compute_dtype=jnp.bfloat16):
    """TransformerEncoder.forward: output = layer(output, output, output, pos, pos)."""
    out = query
    for lp in layer_params:
        out = encoder_block(out, pos, lp, heads=heads, compute_dtype=compute_dtype)
    return out


# ---------------------------------------------------------------------------
# Parameters: PyTorch-style init, then host-side layout conversion
# ---------------------------------------------------------------------------
def init_torch_style_params(key, embed_dim, n_layers):
    """Mimics the PyTorch module's parameter shapes (Linear weights are (out, in))."""
    E = embed_dim
    H = 8 * E
    layers = []
    for _ in range(n_layers):
        key, *ks = jax.random.split(key, 9)

        def w(k, shape, scale=0.02):
            return (scale * jax.random.normal(k, shape)).astype(jnp.float32)

        layers.append({
            "in_proj_weight": w(ks[0], (3 * E, E)),   # packed [Wq; Wk; Wv]
            "in_proj_bias": w(ks[1], (3 * E,)),
            "out_proj_weight": w(ks[2], (E, E)),
            "out_proj_bias": w(ks[3], (E,)),
            "ln1_weight": jnp.ones((E,), jnp.float32),
            "ln1_bias": jnp.zeros((E,), jnp.float32),
            "ff_w1": w(ks[4], (H, E)),
            "ff_b1": w(ks[5], (H,)),
            "ff_w2": w(ks[6], (E, H)),
            "ff_b2": w(ks[7], (E,)),
            "ln2_weight": jnp.ones((E,), jnp.float32),
            "ln2_bias": jnp.zeros((E,), jnp.float32),
        })
    return layers


def convert_layer_params(tp, compute_dtype=jnp.bfloat16):
    """Pre-transpose / split weights to (in, out) layout; cast MXU operands to bf16."""
    E = tp["out_proj_weight"].shape[0]
    wi_t = tp["in_proj_weight"].T  # (E, 3E)
    return {
        "wq": wi_t[:, 0:E].astype(compute_dtype),
        "wk": wi_t[:, E:2 * E].astype(compute_dtype),
        "wv": wi_t[:, 2 * E:3 * E].astype(compute_dtype),
        "bq": tp["in_proj_bias"][0:E].reshape(1, E),
        "bk": tp["in_proj_bias"][E:2 * E].reshape(1, E),
        "bv": tp["in_proj_bias"][2 * E:3 * E].reshape(1, E),
        "wo": tp["out_proj_weight"].T.astype(compute_dtype),
        "bo": tp["out_proj_bias"].reshape(1, E),
        "ln1_g": tp["ln1_weight"].reshape(1, E),
        "ln1_b": tp["ln1_bias"].reshape(1, E),
        "w1": tp["ff_w1"].T.astype(compute_dtype),   # (E, 8E)
        "b1": tp["ff_b1"].reshape(1, -1),
        "w2": tp["ff_w2"].T.astype(compute_dtype),   # (8E, E)
        "b2": tp["ff_b2"].reshape(1, E),
        "ln2_g": tp["ln2_weight"].reshape(1, E),
        "ln2_b": tp["ln2_bias"].reshape(1, E),
    }


if __name__ == "__main__":
    B, L, E, heads, n_layers = 2, 16, 32, 4, 2

    key = jax.random.PRNGKey(0)
    k_q, k_pos, k_p = jax.random.split(key, 3)

    query = jax.random.normal(k_q, (B, L, E), jnp.float32)
    pos = jax.random.normal(k_pos, (B, L, E), jnp.float32)

    torch_params = init_torch_style_params(k_p, E, n_layers)
    params = [convert_layer_params(tp, jnp.bfloat16) for tp in torch_params]

    fwd = jax.jit(functools.partial(transformer_encoder, heads=heads,
                                    compute_dtype=jnp.bfloat16))
    out = fwd(query, pos, params)
    jax.block_until_ready(out)
    assert out.shape == (B, L, E)
    print("KERNEL_OK")
</pallas_src>

<mosaic_0001>
module attributes {stable_mosaic.version = 11 : i64} {
  func.func @encoder_block_kernel(%arg0: i32, %arg1: memref<1x16x32xf32, #tpu.memory_space<vmem>>, %arg2: memref<1x16x32xf32, #tpu.memory_space<vmem>>, %arg3: memref<32x32xbf16, #tpu.memory_space<vmem>>, %arg4: memref<32x32xbf16, #tpu.memory_space<vmem>>, %arg5: memref<32x32xbf16, #tpu.memory_space<vmem>>, %arg6: memref<1x32xf32, #tpu.memory_space<vmem>>, %arg7: memref<1x32xf32, #tpu.memory_space<vmem>>, %arg8: memref<1x32xf32, #tpu.memory_space<vmem>>, %arg9: memref<32x32xbf16, #tpu.memory_space<vmem>>, %arg10: memref<1x32xf32, #tpu.memory_space<vmem>>, %arg11: memref<1x32xf32, #tpu.memory_space<vmem>>, %arg12: memref<1x32xf32, #tpu.memory_space<vmem>>, %arg13: memref<32x256xbf16, #tpu.memory_space<vmem>>, %arg14: memref<1x256xf32, #tpu.memory_space<vmem>>, %arg15: memref<256x32xbf16, #tpu.memory_space<vmem>>, %arg16: memref<1x32xf32, #tpu.memory_space<vmem>>, %arg17: memref<1x32xf32, #tpu.memory_space<vmem>>, %arg18: memref<1x32xf32, #tpu.memory_space<vmem>>, %arg19: memref<1x16x32xf32, #tpu.memory_space<vmem>>) attributes {dimension_semantics = [#tpu.dimension_semantics<parallel>], iteration_bounds = array<i64: 2>, scalar_prefetch = 0 : i64, scratch_operands = 0 : i64, tpu.core_type = #tpu.core_type<tc>, window_params = [{transform_indices = @transform_0, window_bounds = array<i64: 1, 16, 32>}, {transform_indices = @transform_1, window_bounds = array<i64: 1, 16, 32>}, {pipeline_mode = #tpu.pipeline_mode<synchronous>, transform_indices = @transform_2, window_bounds = array<i64: 32, 32>}, {pipeline_mode = #tpu.pipeline_mode<synchronous>, transform_indices = @transform_3, window_bounds = array<i64: 32, 32>}, {pipeline_mode = #tpu.pipeline_mode<synchronous>, transform_indices = @transform_4, window_bounds = array<i64: 32, 32>}, {pipeline_mode = #tpu.pipeline_mode<synchronous>, transform_indices = @transform_5, window_bounds = array<i64: 1, 32>}, {pipeline_mode = #tpu.pipeline_mode<synchronous>, transform_indices = @transform_6, window_bounds = array<i64: 1, 32>}, {pipeline_mode = #tpu.pipeline_mode<synchronous>, transform_indices = @transform_7, window_bounds = array<i64: 1, 32>}, {pipeline_mode = #tpu.pipeline_mode<synchronous>, transform_indices = @transform_8, window_bounds = array<i64: 32, 32>}, {pipeline_mode = #tpu.pipeline_mode<synchronous>, transform_indices = @transform_9, window_bounds = array<i64: 1, 32>}, {pipeline_mode = #tpu.pipeline_mode<synchronous>, transform_indices = @transform_10, window_bounds = array<i64: 1, 32>}, {pipeline_mode = #tpu.pipeline_mode<synchronous>, transform_indices = @transform_11, window_bounds = array<i64: 1, 32>}, {pipeline_mode = #tpu.pipeline_mode<synchronous>, transform_indices = @transform_12, window_bounds = array<i64: 32, 256>}, {pipeline_mode = #tpu.pipeline_mode<synchronous>, transform_indices = @transform_13, window_bounds = array<i64: 1, 256>}, {pipeline_mode = #tpu.pipeline_mode<synchronous>, transform_indices = @transform_14, window_bounds = array<i64: 256, 32>}, {pipeline_mode = #tpu.pipeline_mode<synchronous>, transform_indices = @transform_15, window_bounds = array<i64: 1, 32>}, {pipeline_mode = #tpu.pipeline_mode<synchronous>, transform_indices = @transform_16, window_bounds = array<i64: 1, 32>}, {pipeline_mode = #tpu.pipeline_mode<synchronous>, transform_indices = @transform_17, window_bounds = array<i64: 1, 32>}, {transform_indices = @transform_18, window_bounds = array<i64: 1, 16, 32>}]} {
    %c0 = arith.constant 0 : index
    %c0_0 = arith.constant 0 : index
    %c0_1 = arith.constant 0 : index
    %0 = vector.load %arg1[%c0, %c0_0, %c0_1] : memref<1x16x32xf32, #tpu.memory_space<vmem>>, vector<1x16x32xf32>
    %1 = vector.shape_cast %0 : vector<1x16x32xf32> to vector<16x32xf32>
    %c0_2 = arith.constant 0 : index
    %c0_3 = arith.constant 0 : index
    %c0_4 = arith.constant 0 : index
    %2 = vector.load %arg2[%c0_2, %c0_3, %c0_4] : memref<1x16x32xf32, #tpu.memory_space<vmem>>, vector<1x16x32xf32>
    %3 = vector.shape_cast %2 : vector<1x16x32xf32> to vector<16x32xf32>
    %4 = arith.addf %1, %3 : vector<16x32xf32>
    %5 = arith.truncf %4 : vector<16x32xf32> to vector<16x32xbf16>
    %6 = arith.truncf %1 : vector<16x32xf32> to vector<16x32xbf16>
    %c0_5 = arith.constant 0 : index
    %c0_6 = arith.constant 0 : index
    %7 = vector.load %arg3[%c0_5, %c0_6] : memref<32x32xbf16, #tpu.memory_space<vmem>>, vector<32x32xbf16>
    %cst = arith.constant dense<0.000000e+00> : vector<16x32xf32>
    %8 = tpu.matmul %5, %7, %cst {dimension_numbers = #tpu.dot_dimension_numbers<[1], [0], [0], [1], [0, 0, 1, 1], [], []>} : vector<16x32xbf16>, vector<32x32xbf16>, vector<16x32xf32> -> vector<16x32xf32>
    %c0_7 = arith.constant 0 : index
    %c0_8 = arith.constant 0 : index
    %9 = vector.load %arg6[%c0_7, %c0_8] : memref<1x32xf32, #tpu.memory_space<vmem>>, vector<1x32xf32>
    %10 = vector.broadcast %9 : vector<1x32xf32> to vector<16x32xf32>
    %11 = arith.addf %8, %10 : vector<16x32xf32>
    %c0_9 = arith.constant 0 : index
    %c0_10 = arith.constant 0 : index
    %12 = vector.load %arg4[%c0_9, %c0_10] : memref<32x32xbf16, #tpu.memory_space<vmem>>, vector<32x32xbf16>
    %cst_11 = arith.constant dense<0.000000e+00> : vector<16x32xf32>
    %13 = tpu.matmul %5, %12, %cst_11 {dimension_numbers = #tpu.dot_dimension_numbers<[1], [0], [0], [1], [0, 0, 1, 1], [], []>} : vector<16x32xbf16>, vector<32x32xbf16>, vector<16x32xf32> -> vector<16x32xf32>
    %c0_12 = arith.constant 0 : index
    %c0_13 = arith.constant 0 : index
    %14 = vector.load %arg7[%c0_12, %c0_13] : memref<1x32xf32, #tpu.memory_space<vmem>>, vector<1x32xf32>
    %15 = vector.broadcast %14 : vector<1x32xf32> to vector<16x32xf32>
    %16 = arith.addf %13, %15 : vector<16x32xf32>
    %c0_14 = arith.constant 0 : index
    %c0_15 = arith.constant 0 : index
    %17 = vector.load %arg5[%c0_14, %c0_15] : memref<32x32xbf16, #tpu.memory_space<vmem>>, vector<32x32xbf16>
    %cst_16 = arith.constant dense<0.000000e+00> : vector<16x32xf32>
    %18 = tpu.matmul %6, %17, %cst_16 {dimension_numbers = #tpu.dot_dimension_numbers<[1], [0], [0], [1], [0, 0, 1, 1], [], []>} : vector<16x32xbf16>, vector<32x32xbf16>, vector<16x32xf32> -> vector<16x32xf32>
    %c0_17 = arith.constant 0 : index
    %c0_18 = arith.constant 0 : index
    %19 = vector.load %arg8[%c0_17, %c0_18] : memref<1x32xf32, #tpu.memory_space<vmem>>, vector<1x32xf32>
    %20 = vector.broadcast %19 : vector<1x32xf32> to vector<16x32xf32>
    %21 = arith.addf %18, %20 : vector<16x32xf32>
    %22 = arith.truncf %11 : vector<16x32xf32> to vector<16x32xbf16>
    %23 = vector.shape_cast %22 : vector<16x32xbf16> to vector<16x4x8xbf16>
    %24 = tpu.transpose %23, [1, 0, 2] : vector<16x4x8xbf16> -> vector<4x16x8xbf16>
    %25 = arith.truncf %16 : vector<16x32xf32> to vector<16x32xbf16>
    %26 = vector.shape_cast %25 : vector<16x32xbf16> to vector<16x4x8xbf16>
    %27 = tpu.transpose %26, [1, 0, 2] : vector<16x4x8xbf16> -> vector<4x16x8xbf16>
    %28 = arith.truncf %21 : vector<16x32xf32> to vector<16x32xbf16>
    %29 = vector.shape_cast %28 : vector<16x32xbf16> to vector<16x4x8xbf16>
    %30 = tpu.transpose %29, [1, 0, 2] : vector<16x4x8xbf16> -> vector<4x16x8xbf16>
    "tpu.trace_start"() <{level = 10 : i32, message = "hqd,hkd->hqk"}> : () -> ()
    %cst_19 = arith.constant dense<0.000000e+00> : vector<4x16x16xf32>
    %31 = tpu.matmul %24, %27, %cst_19 {dimension_numbers = #tpu.dot_dimension_numbers<[2], [2], [1], [1], [0, 0, 0, 1, 1, 1], [0], [0]>} : vector<4x16x8xbf16>, vector<4x16x8xbf16>, vector<4x16x16xf32> -> vector<4x16x16xf32>
    "tpu.trace_stop"() : () -> ()
    %cst_20 = arith.constant 0.353553385 : f32
    %32 = vector.broadcast %cst_20 : f32 to vector<4x16x16xf32>
    %33 = arith.mulf %31, %32 : vector<4x16x16xf32>
    %cst_21 = arith.constant dense<0xFF800000> : vector<4x16xf32>
    %34 = vector.multi_reduction <maximumf>, %33, %cst_21 [2] : vector<4x16x16xf32> to vector<4x16xf32>
    %35 = vector.shape_cast %34 : vector<4x16xf32> to vector<4x16x1xf32>
    %36 = vector.broadcast %35 : vector<4x16x1xf32> to vector<4x16x16xf32>
    %37 = arith.subf %33, %36 : vector<4x16x16xf32>
    %38 = math.exp %37 : vector<4x16x16xf32>
    %cst_22 = arith.constant dense<0.000000e+00> : vector<4x16xf32>
    %39 = vector.multi_reduction <add>, %38, %cst_22 [2] : vector<4x16x16xf32> to vector<4x16xf32>
    %40 = vector.shape_cast %39 : vector<4x16xf32> to vector<4x16x1xf32>
    %41 = tpu.reciprocal %40 {approx = true} : vector<4x16x1xf32> -> vector<4x16x1xf32>
    %42 = vector.broadcast %41 : vector<4x16x1xf32> to vector<4x16x16xf32>
    %43 = arith.mulf %38, %42 : vector<4x16x16xf32>
    %44 = arith.truncf %43 : vector<4x16x16xf32> to vector<4x16x16xbf16>
    "tpu.trace_start"() <{level = 10 : i32, message = "hqk,hkd->hqd"}> : () -> ()
    %cst_23 = arith.constant dense<0.000000e+00> : vector<4x16x8xf32>
    %45 = tpu.matmul %44, %30, %cst_23 {dimension_numbers = #tpu.dot_dimension_numbers<[2], [1], [1], [2], [0, 0, 0, 1, 1, 2], [0], [0]>} : vector<4x16x16xbf16>, vector<4x16x8xbf16>, vector<4x16x8xf32> -> vector<4x16x8xf32>
    "tpu.trace_stop"() : () -> ()
    %46 = tpu.transpose %45, [1, 0, 2] : vector<4x16x8xf32> -> vector<16x4x8xf32>
    %47 = vector.shape_cast %46 : vector<16x4x8xf32> to vector<16x32xf32>
    %48 = arith.truncf %47 : vector<16x32xf32> to vector<16x32xbf16>
    %c0_24 = arith.constant 0 : index
    %c0_25 = arith.constant 0 : index
    %49 = vector.load %arg9[%c0_24, %c0_25] : memref<32x32xbf16, #tpu.memory_space<vmem>>, vector<32x32xbf16>
    %cst_26 = arith.constant dense<0.000000e+00> : vector<16x32xf32>
    %50 = tpu.matmul %48, %49, %cst_26 {dimension_numbers = #tpu.dot_dimension_numbers<[1], [0], [0], [1], [0, 0, 1, 1], [], []>} : vector<16x32xbf16>, vector<32x32xbf16>, vector<16x32xf32> -> vector<16x32xf32>
    %c0_27 = arith.constant 0 : index
    %c0_28 = arith.constant 0 : index
    %51 = vector.load %arg10[%c0_27, %c0_28] : memref<1x32xf32, #tpu.memory_space<vmem>>, vector<1x32xf32>
    %52 = vector.broadcast %51 : vector<1x32xf32> to vector<16x32xf32>
    %53 = arith.addf %50, %52 : vector<16x32xf32>
    %54 = arith.addf %53, %1 : vector<16x32xf32>
    %cst_29 = arith.constant dense<0.000000e+00> : vector<16xf32>
    %55 = vector.multi_reduction <add>, %54, %cst_29 [1] : vector<16x32xf32> to vector<16xf32>
    %56 = vector.shape_cast %55 : vector<16xf32> to vector<16x1xf32>
    %cst_30 = arith.constant 3.200000e+01 : f32
    %57 = vector.broadcast %cst_30 : f32 to vector<16x1xf32>
    %58 = arith.divf %56, %57 : vector<16x1xf32>
    %59 = vector.broadcast %58 : vector<16x1xf32> to vector<16x32xf32>
    %60 = arith.subf %54, %59 : vector<16x32xf32>
    %61 = arith.mulf %60, %60 : vector<16x32xf32>
    %cst_31 = arith.constant dense<0.000000e+00> : vector<16xf32>
    %62 = vector.multi_reduction <add>, %61, %cst_31 [1] : vector<16x32xf32> to vector<16xf32>
    %63 = vector.shape_cast %62 : vector<16xf32> to vector<16x1xf32>
    %cst_32 = arith.constant 3.200000e+01 : f32
    %64 = vector.broadcast %cst_32 : f32 to vector<16x1xf32>
    %65 = arith.divf %63, %64 : vector<16x1xf32>
    %cst_33 = arith.constant 9.99999974E-6 : f32
    %66 = vector.broadcast %cst_33 : f32 to vector<16x1xf32>
    %67 = arith.addf %65, %66 : vector<16x1xf32>
    %68 = math.rsqrt %67 : vector<16x1xf32>
    %69 = vector.broadcast %68 : vector<16x1xf32> to vector<16x32xf32>
    %70 = arith.mulf %60, %69 : vector<16x32xf32>
    %c0_34 = arith.constant 0 : index
    %c0_35 = arith.constant 0 : index
    %71 = vector.load %arg11[%c0_34, %c0_35] : memref<1x32xf32, #tpu.memory_space<vmem>>, vector<1x32xf32>
    %72 = vector.broadcast %71 : vector<1x32xf32> to vector<16x32xf32>
    %73 = arith.mulf %70, %72 : vector<16x32xf32>
    %c0_36 = arith.constant 0 : index
    %c0_37 = arith.constant 0 : index
    %74 = vector.load %arg12[%c0_36, %c0_37] : memref<1x32xf32, #tpu.memory_space<vmem>>, vector<1x32xf32>
    %75 = vector.broadcast %74 : vector<1x32xf32> to vector<16x32xf32>
    %76 = arith.addf %73, %75 : vector<16x32xf32>
    %77 = arith.truncf %76 : vector<16x32xf32> to vector<16x32xbf16>
    %c0_38 = arith.constant 0 : index
    %c0_39 = arith.constant 0 : index
    %78 = vector.load %arg13[%c0_38, %c0_39] : memref<32x256xbf16, #tpu.memory_space<vmem>>, vector<32x256xbf16>
    %cst_40 = arith.constant dense<0.000000e+00> : vector<16x256xf32>
    %79 = tpu.matmul %77, %78, %cst_40 {dimension_numbers = #tpu.dot_dimension_numbers<[1], [0], [0], [1], [0, 0, 1, 1], [], []>} : vector<16x32xbf16>, vector<32x256xbf16>, vector<16x256xf32> -> vector<16x256xf32>
    %c0_41 = arith.constant 0 : index
    %c0_42 = arith.constant 0 : index
    %80 = vector.load %arg14[%c0_41, %c0_42] : memref<1x256xf32, #tpu.memory_space<vmem>>, vector<1x256xf32>
    %81 = vector.broadcast %80 : vector<1x256xf32> to vector<16x256xf32>
    %82 = arith.addf %79, %81 : vector<16x256xf32>
    %cst_43 = arith.constant 0.000000e+00 : f32
    %83 = vector.broadcast %cst_43 : f32 to vector<16x256xf32>
    %84 = arith.maximumf %82, %83 : vector<16x256xf32>
    %85 = arith.truncf %84 : vector<16x256xf32> to vector<16x256xbf16>
    %c0_44 = arith.constant 0 : index
    %c0_45 = arith.constant 0 : index
    %86 = vector.load %arg15[%c0_44, %c0_45] : memref<256x32xbf16, #tpu.memory_space<vmem>>, vector<256x32xbf16>
    %cst_46 = arith.constant dense<0.000000e+00> : vector<16x32xf32>
    %87 = tpu.matmul %85, %86, %cst_46 {dimension_numbers = #tpu.dot_dimension_numbers<[1], [0], [0], [1], [0, 0, 1, 1], [], []>} : vector<16x256xbf16>, vector<256x32xbf16>, vector<16x32xf32> -> vector<16x32xf32>
    %c0_47 = arith.constant 0 : index
    %c0_48 = arith.constant 0 : index
    %88 = vector.load %arg16[%c0_47, %c0_48] : memref<1x32xf32, #tpu.memory_space<vmem>>, vector<1x32xf32>
    %89 = vector.broadcast %88 : vector<1x32xf32> to vector<16x32xf32>
    %90 = arith.addf %87, %89 : vector<16x32xf32>
    %91 = arith.addf %76, %90 : vector<16x32xf32>
    %cst_49 = arith.constant dense<0.000000e+00> : vector<16xf32>
    %92 = vector.multi_reduction <add>, %91, %cst_49 [1] : vector<16x32xf32> to vector<16xf32>
    %93 = vector.shape_cast %92 : vector<16xf32> to vector<16x1xf32>
    %cst_50 = arith.constant 3.200000e+01 : f32
    %94 = vector.broadcast %cst_50 : f32 to vector<16x1xf32>
    %95 = arith.divf %93, %94 : vector<16x1xf32>
    %96 = vector.broadcast %95 : vector<16x1xf32> to vector<16x32xf32>
    %97 = arith.subf %91, %96 : vector<16x32xf32>
    %98 = arith.mulf %97, %97 : vector<16x32xf32>
    %cst_51 = arith.constant dense<0.000000e+00> : vector<16xf32>
    %99 = vector.multi_reduction <add>, %98, %cst_51 [1] : vector<16x32xf32> to vector<16xf32>
    %100 = vector.shape_cast %99 : vector<16xf32> to vector<16x1xf32>
    %cst_52 = arith.constant 3.200000e+01 : f32
    %101 = vector.broadcast %cst_52 : f32 to vector<16x1xf32>
    %102 = arith.divf %100, %101 : vector<16x1xf32>
    %cst_53 = arith.constant 9.99999974E-6 : f32
    %103 = vector.broadcast %cst_53 : f32 to vector<16x1xf32>
    %104 = arith.addf %102, %103 : vector<16x1xf32>
    %105 = math.rsqrt %104 : vector<16x1xf32>
    %106 = vector.broadcast %105 : vector<16x1xf32> to vector<16x32xf32>
    %107 = arith.mulf %97, %106 : vector<16x32xf32>
    %c0_54 = arith.constant 0 : index
    %c0_55 = arith.constant 0 : index
    %108 = vector.load %arg17[%c0_54, %c0_55] : memref<1x32xf32, #tpu.memory_space<vmem>>, vector<1x32xf32>
    %109 = vector.broadcast %108 : vector<1x32xf32> to vector<16x32xf32>
    %110 = arith.mulf %107, %109 : vector<16x32xf32>
    %c0_56 = arith.constant 0 : index
    %c0_57 = arith.constant 0 : index
    %111 = vector.load %arg18[%c0_56, %c0_57] : memref<1x32xf32, #tpu.memory_space<vmem>>, vector<1x32xf32>
    %112 = vector.broadcast %111 : vector<1x32xf32> to vector<16x32xf32>
    %113 = arith.addf %110, %112 : vector<16x32xf32>
    %c0_58 = arith.constant 0 : index
    %c0_59 = arith.constant 0 : index
    %c0_60 = arith.constant 0 : index
    %114 = vector.load %arg19[%c0_58, %c0_59, %c0_60] : memref<1x16x32xf32, #tpu.memory_space<vmem>>, vector<1x16x32xf32>
    %115 = vector.shape_cast %114 : vector<1x16x32xf32> to vector<16x32xf32>
    %116 = vector.shape_cast %113 : vector<16x32xf32> to vector<1x16x32xf32>
    tpu.vector_store %arg19[%c0_58, %c0_59, %c0_60], %116 {strides = array<i32>} : memref<1x16x32xf32, #tpu.memory_space<vmem>>, vector<1x16x32xf32>,
    return
  }
  func.func @transform_0(%arg0: i32) -> (i32, i32, i32) {
    %c0_i32 = arith.constant 0 : i32
    %c0_i32_0 = arith.constant 0 : i32
    %c0_i32_1 = arith.constant 0 : i32
    return %arg0, %c0_i32, %c0_i32_0 : i32, i32, i32
  }
  func.func @transform_1(%arg0: i32) -> (i32, i32, i32) {
    %c0_i32 = arith.constant 0 : i32
    %c0_i32_0 = arith.constant 0 : i32
    %c0_i32_1 = arith.constant 0 : i32
    return %arg0, %c0_i32, %c0_i32_0 : i32, i32, i32
  }
  func.func @transform_2(%arg0: i32) -> (i32, i32) {
    %c0_i32 = arith.constant 0 : i32
    %c0_i32_0 = arith.constant 0 : i32
    %c0_i32_1 = arith.constant 0 : i32
    return %c0_i32, %c0_i32_0 : i32, i32
  }
  func.func @transform_3(%arg0: i32) -> (i32, i32) {
    %c0_i32 = arith.constant 0 : i32
    %c0_i32_0 = arith.constant 0 : i32
    %c0_i32_1 = arith.constant 0 : i32
    return %c0_i32, %c0_i32_0 : i32, i32
  }
  func.func @transform_4(%arg0: i32) -> (i32, i32) {
    %c0_i32 = arith.constant 0 : i32
    %c0_i32_0 = arith.constant 0 : i32
    %c0_i32_1 = arith.constant 0 : i32
    return %c0_i32, %c0_i32_0 : i32, i32
  }
  func.func @transform_5(%arg0: i32) -> (i32, i32) {
    %c0_i32 = arith.constant 0 : i32
    %c0_i32_0 = arith.constant 0 : i32
    %c0_i32_1 = arith.constant 0 : i32
    return %c0_i32, %c0_i32_0 : i32, i32
  }
  func.func @transform_6(%arg0: i32) -> (i32, i32) {
    %c0_i32 = arith.constant 0 : i32
    %c0_i32_0 = arith.constant 0 : i32
    %c0_i32_1 = arith.constant 0 : i32
    return %c0_i32, %c0_i32_0 : i32, i32
  }
  func.func @transform_7(%arg0: i32) -> (i32, i32) {
    %c0_i32 = arith.constant 0 : i32
    %c0_i32_0 = arith.constant 0 : i32
    %c0_i32_1 = arith.constant 0 : i32
    return %c0_i32, %c0_i32_0 : i32, i32
  }
  func.func @transform_8(%arg0: i32) -> (i32, i32) {
    %c0_i32 = arith.constant 0 : i32
    %c0_i32_0 = arith.constant 0 : i32
    %c0_i32_1 = arith.constant 0 : i32
    return %c0_i32, %c0_i32_0 : i32, i32
  }
  func.func @transform_9(%arg0: i32) -> (i32, i32) {
    %c0_i32 = arith.constant 0 : i32
    %c0_i32_0 = arith.constant 0 : i32
    %c0_i32_1 = arith.constant 0 : i32
    return %c0_i32, %c0_i32_0 : i32, i32
  }
  func.func @transform_10(%arg0: i32) -> (i32, i32) {
    %c0_i32 = arith.constant 0 : i32
    %c0_i32_0 = arith.constant 0 : i32
    %c0_i32_1 = arith.constant 0 : i32
    return %c0_i32, %c0_i32_0 : i32, i32
  }
  func.func @transform_11(%arg0: i32) -> (i32, i32) {
    %c0_i32 = arith.constant 0 : i32
    %c0_i32_0 = arith.constant 0 : i32
    %c0_i32_1 = arith.constant 0 : i32
    return %c0_i32, %c0_i32_0 : i32, i32
  }
  func.func @transform_12(%arg0: i32) -> (i32, i32) {
    %c0_i32 = arith.constant 0 : i32
    %c0_i32_0 = arith.constant 0 : i32
    %c0_i32_1 = arith.constant 0 : i32
    return %c0_i32, %c0_i32_0 : i32, i32
  }
  func.func @transform_13(%arg0: i32) -> (i32, i32) {
    %c0_i32 = arith.constant 0 : i32
    %c0_i32_0 = arith.constant 0 : i32
    %c0_i32_1 = arith.constant 0 : i32
    return %c0_i32, %c0_i32_0 : i32, i32
  }
  func.func @transform_14(%arg0: i32) -> (i32, i32) {
    %c0_i32 = arith.constant 0 : i32
    %c0_i32_0 = arith.constant 0 : i32
    %c0_i32_1 = arith.constant 0 : i32
    return %c0_i32, %c0_i32_0 : i32, i32
  }
  func.func @transform_15(%arg0: i32) -> (i32, i32) {
    %c0_i32 = arith.constant 0 : i32
    %c0_i32_0 = arith.constant 0 : i32
    %c0_i32_1 = arith.constant 0 : i32
    return %c0_i32, %c0_i32_0 : i32, i32
  }
  func.func @transform_16(%arg0: i32) -> (i32, i32) {
    %c0_i32 = arith.constant 0 : i32
    %c0_i32_0 = arith.constant 0 : i32
    %c0_i32_1 = arith.constant 0 : i32
    return %c0_i32, %c0_i32_0 : i32, i32
  }
  func.func @transform_17(%arg0: i32) -> (i32, i32) {
    %c0_i32 = arith.constant 0 : i32
    %c0_i32_0 = arith.constant 0 : i32
    %c0_i32_1 = arith.constant 0 : i32
    return %c0_i32, %c0_i32_0 : i32, i32
  }
  func.func @transform_18(%arg0: i32) -> (i32, i32, i32) {
    %c0_i32 = arith.constant 0 : i32
    %c0_i32_0 = arith.constant 0 : i32
    %c0_i32_1 = arith.constant 0 : i32
    return %arg0, %c0_i32, %c0_i32_0 : i32, i32, i32
  }
}

module attributes {stable_mosaic.version = 11 : i64} {
  func.func @encoder_block_kernel(%arg0: i32, %arg1: memref<1x16x32xf32, #tpu.memory_space<vmem>>, %arg2: memref<1x16x32xf32, #tpu.memory_space<vmem>>, %arg3: memref<32x32xbf16, #tpu.memory_space<vmem>>, %arg4: memref<32x32xbf16, #tpu.memory_space<vmem>>, %arg5: memref<32x32xbf16, #tpu.memory_space<vmem>>, %arg6: memref<1x32xf32, #tpu.memory_space<vmem>>, %arg7: memref<1x32xf32, #tpu.memory_space<vmem>>, %arg8: memref<1x32xf32, #tpu.memory_space<vmem>>, %arg9: memref<32x32xbf16, #tpu.memory_space<vmem>>, %arg10: memref<1x32xf32, #tpu.memory_space<vmem>>, %arg11: memref<1x32xf32, #tpu.memory_space<vmem>>, %arg12: memref<1x32xf32, #tpu.memory_space<vmem>>, %arg13: memref<32x256xbf16, #tpu.memory_space<vmem>>, %arg14: memref<1x256xf32, #tpu.memory_space<vmem>>, %arg15: memref<256x32xbf16, #tpu.memory_space<vmem>>, %arg16: memref<1x32xf32, #tpu.memory_space<vmem>>, %arg17: memref<1x32xf32, #tpu.memory_space<vmem>>, %arg18: memref<1x32xf32, #tpu.memory_space<vmem>>, %arg19: memref<1x16x32xf32, #tpu.memory_space<vmem>>) attributes {dimension_semantics = [#tpu.dimension_semantics<parallel>], iteration_bounds = array<i64: 2>, scalar_prefetch = 0 : i64, scratch_operands = 0 : i64, tpu.core_type = #tpu.core_type<tc>, window_params = [{transform_indices = @transform_0, window_bounds = array<i64: 1, 16, 32>}, {transform_indices = @transform_1, window_bounds = array<i64: 1, 16, 32>}, {pipeline_mode = #tpu.pipeline_mode<synchronous>, transform_indices = @transform_2, window_bounds = array<i64: 32, 32>}, {pipeline_mode = #tpu.pipeline_mode<synchronous>, transform_indices = @transform_3, window_bounds = array<i64: 32, 32>}, {pipeline_mode = #tpu.pipeline_mode<synchronous>, transform_indices = @transform_4, window_bounds = array<i64: 32, 32>}, {pipeline_mode = #tpu.pipeline_mode<synchronous>, transform_indices = @transform_5, window_bounds = array<i64: 1, 32>}, {pipeline_mode = #tpu.pipeline_mode<synchronous>, transform_indices = @transform_6, window_bounds = array<i64: 1, 32>}, {pipeline_mode = #tpu.pipeline_mode<synchronous>, transform_indices = @transform_7, window_bounds = array<i64: 1, 32>}, {pipeline_mode = #tpu.pipeline_mode<synchronous>, transform_indices = @transform_8, window_bounds = array<i64: 32, 32>}, {pipeline_mode = #tpu.pipeline_mode<synchronous>, transform_indices = @transform_9, window_bounds = array<i64: 1, 32>}, {pipeline_mode = #tpu.pipeline_mode<synchronous>, transform_indices = @transform_10, window_bounds = array<i64: 1, 32>}, {pipeline_mode = #tpu.pipeline_mode<synchronous>, transform_indices = @transform_11, window_bounds = array<i64: 1, 32>}, {pipeline_mode = #tpu.pipeline_mode<synchronous>, transform_indices = @transform_12, window_bounds = array<i64: 32, 256>}, {pipeline_mode = #tpu.pipeline_mode<synchronous>, transform_indices = @transform_13, window_bounds = array<i64: 1, 256>}, {pipeline_mode = #tpu.pipeline_mode<synchronous>, transform_indices = @transform_14, window_bounds = array<i64: 256, 32>}, {pipeline_mode = #tpu.pipeline_mode<synchronous>, transform_indices = @transform_15, window_bounds = array<i64: 1, 32>}, {pipeline_mode = #tpu.pipeline_mode<synchronous>, transform_indices = @transform_16, window_bounds = array<i64: 1, 32>}, {pipeline_mode = #tpu.pipeline_mode<synchronous>, transform_indices = @transform_17, window_bounds = array<i64: 1, 32>}, {transform_indices = @transform_18, window_bounds = array<i64: 1, 16, 32>}]} {
    %c0 = arith.constant 0 : index
    %c0_0 = arith.constant 0 : index
    %c0_1 = arith.constant 0 : index
    %0 = vector.load %arg1[%c0, %c0_0, %c0_1] : memref<1x16x32xf32, #tpu.memory_space<vmem>>, vector<1x16x32xf32>
    %1 = vector.shape_cast %0 : vector<1x16x32xf32> to vector<16x32xf32>
    %c0_2 = arith.constant 0 : index
    %c0_3 = arith.constant 0 : index
    %c0_4 = arith.constant 0 : index
    %2 = vector.load %arg2[%c0_2, %c0_3, %c0_4] : memref<1x16x32xf32, #tpu.memory_space<vmem>>, vector<1x16x32xf32>
    %3 = vector.shape_cast %2 : vector<1x16x32xf32> to vector<16x32xf32>
    %4 = arith.addf %1, %3 : vector<16x32xf32>
    %5 = arith.truncf %4 : vector<16x32xf32> to vector<16x32xbf16>
    %6 = arith.truncf %1 : vector<16x32xf32> to vector<16x32xbf16>
    %c0_5 = arith.constant 0 : index
    %c0_6 = arith.constant 0 : index
    %7 = vector.load %arg3[%c0_5, %c0_6] : memref<32x32xbf16, #tpu.memory_space<vmem>>, vector<32x32xbf16>
    %cst = arith.constant dense<0.000000e+00> : vector<16x32xf32>
    %8 = tpu.matmul %5, %7, %cst {dimension_numbers = #tpu.dot_dimension_numbers<[1], [0], [0], [1], [0, 0, 1, 1], [], []>} : vector<16x32xbf16>, vector<32x32xbf16>, vector<16x32xf32> -> vector<16x32xf32>
    %c0_7 = arith.constant 0 : index
    %c0_8 = arith.constant 0 : index
    %9 = vector.load %arg6[%c0_7, %c0_8] : memref<1x32xf32, #tpu.memory_space<vmem>>, vector<1x32xf32>
    %10 = vector.broadcast %9 : vector<1x32xf32> to vector<16x32xf32>
    %11 = arith.addf %8, %10 : vector<16x32xf32>
    %c0_9 = arith.constant 0 : index
    %c0_10 = arith.constant 0 : index
    %12 = vector.load %arg4[%c0_9, %c0_10] : memref<32x32xbf16, #tpu.memory_space<vmem>>, vector<32x32xbf16>
    %cst_11 = arith.constant dense<0.000000e+00> : vector<16x32xf32>
    %13 = tpu.matmul %5, %12, %cst_11 {dimension_numbers = #tpu.dot_dimension_numbers<[1], [0], [0], [1], [0, 0, 1, 1], [], []>} : vector<16x32xbf16>, vector<32x32xbf16>, vector<16x32xf32> -> vector<16x32xf32>
    %c0_12 = arith.constant 0 : index
    %c0_13 = arith.constant 0 : index
    %14 = vector.load %arg7[%c0_12, %c0_13] : memref<1x32xf32, #tpu.memory_space<vmem>>, vector<1x32xf32>
    %15 = vector.broadcast %14 : vector<1x32xf32> to vector<16x32xf32>
    %16 = arith.addf %13, %15 : vector<16x32xf32>
    %c0_14 = arith.constant 0 : index
    %c0_15 = arith.constant 0 : index
    %17 = vector.load %arg5[%c0_14, %c0_15] : memref<32x32xbf16, #tpu.memory_space<vmem>>, vector<32x32xbf16>
    %cst_16 = arith.constant dense<0.000000e+00> : vector<16x32xf32>
    %18 = tpu.matmul %6, %17, %cst_16 {dimension_numbers = #tpu.dot_dimension_numbers<[1], [0], [0], [1], [0, 0, 1, 1], [], []>} : vector<16x32xbf16>, vector<32x32xbf16>, vector<16x32xf32> -> vector<16x32xf32>
    %c0_17 = arith.constant 0 : index
    %c0_18 = arith.constant 0 : index
    %19 = vector.load %arg8[%c0_17, %c0_18] : memref<1x32xf32, #tpu.memory_space<vmem>>, vector<1x32xf32>
    %20 = vector.broadcast %19 : vector<1x32xf32> to vector<16x32xf32>
    %21 = arith.addf %18, %20 : vector<16x32xf32>
    %22 = arith.truncf %11 : vector<16x32xf32> to vector<16x32xbf16>
    %23 = vector.shape_cast %22 : vector<16x32xbf16> to vector<16x4x8xbf16>
    %24 = tpu.transpose %23, [1, 0, 2] : vector<16x4x8xbf16> -> vector<4x16x8xbf16>
    %25 = arith.truncf %16 : vector<16x32xf32> to vector<16x32xbf16>
    %26 = vector.shape_cast %25 : vector<16x32xbf16> to vector<16x4x8xbf16>
    %27 = tpu.transpose %26, [1, 0, 2] : vector<16x4x8xbf16> -> vector<4x16x8xbf16>
    %28 = arith.truncf %21 : vector<16x32xf32> to vector<16x32xbf16>
    %29 = vector.shape_cast %28 : vector<16x32xbf16> to vector<16x4x8xbf16>
    %30 = tpu.transpose %29, [1, 0, 2] : vector<16x4x8xbf16> -> vector<4x16x8xbf16>
    "tpu.trace_start"() <{level = 10 : i32, message = "hqd,hkd->hqk"}> : () -> ()
    %cst_19 = arith.constant dense<0.000000e+00> : vector<4x16x16xf32>
    %31 = tpu.matmul %24, %27, %cst_19 {dimension_numbers = #tpu.dot_dimension_numbers<[2], [2], [1], [1], [0, 0, 0, 1, 1, 1], [0], [0]>} : vector<4x16x8xbf16>, vector<4x16x8xbf16>, vector<4x16x16xf32> -> vector<4x16x16xf32>
    "tpu.trace_stop"() : () -> ()
    %cst_20 = arith.constant 0.353553385 : f32
    %32 = vector.broadcast %cst_20 : f32 to vector<4x16x16xf32>
    %33 = arith.mulf %31, %32 : vector<4x16x16xf32>
    %cst_21 = arith.constant dense<0xFF800000> : vector<4x16xf32>
    %34 = vector.multi_reduction <maximumf>, %33, %cst_21 [2] : vector<4x16x16xf32> to vector<4x16xf32>
    %35 = vector.shape_cast %34 : vector<4x16xf32> to vector<4x16x1xf32>
    %36 = vector.broadcast %35 : vector<4x16x1xf32> to vector<4x16x16xf32>
    %37 = arith.subf %33, %36 : vector<4x16x16xf32>
    %38 = math.exp %37 : vector<4x16x16xf32>
    %cst_22 = arith.constant dense<0.000000e+00> : vector<4x16xf32>
    %39 = vector.multi_reduction <add>, %38, %cst_22 [2] : vector<4x16x16xf32> to vector<4x16xf32>
    %40 = vector.shape_cast %39 : vector<4x16xf32> to vector<4x16x1xf32>
    %41 = tpu.reciprocal %40 {approx = true} : vector<4x16x1xf32> -> vector<4x16x1xf32>
    %42 = vector.broadcast %41 : vector<4x16x1xf32> to vector<4x16x16xf32>
    %43 = arith.mulf %38, %42 : vector<4x16x16xf32>
    %44 = arith.truncf %43 : vector<4x16x16xf32> to vector<4x16x16xbf16>
    "tpu.trace_start"() <{level = 10 : i32, message = "hqk,hkd->hqd"}> : () -> ()
    %cst_23 = arith.constant dense<0.000000e+00> : vector<4x16x8xf32>
    %45 = tpu.matmul %44, %30, %cst_23 {dimension_numbers = #tpu.dot_dimension_numbers<[2], [1], [1], [2], [0, 0, 0, 1, 1, 2], [0], [0]>} : vector<4x16x16xbf16>, vector<4x16x8xbf16>, vector<4x16x8xf32> -> vector<4x16x8xf32>
    "tpu.trace_stop"() : () -> ()
    %46 = tpu.transpose %45, [1, 0, 2] : vector<4x16x8xf32> -> vector<16x4x8xf32>
    %47 = vector.shape_cast %46 : vector<16x4x8xf32> to vector<16x32xf32>
    %48 = arith.truncf %47 : vector<16x32xf32> to vector<16x32xbf16>
    %c0_24 = arith.constant 0 : index
    %c0_25 = arith.constant 0 : index
    %49 = vector.load %arg9[%c0_24, %c0_25] : memref<32x32xbf16, #tpu.memory_space<vmem>>, vector<32x32xbf16>
    %cst_26 = arith.constant dense<0.000000e+00> : vector<16x32xf32>
    %50 = tpu.matmul %48, %49, %cst_26 {dimension_numbers = #tpu.dot_dimension_numbers<[1], [0], [0], [1], [0, 0, 1, 1], [], []>} : vector<16x32xbf16>, vector<32x32xbf16>, vector<16x32xf32> -> vector<16x32xf32>
    %c0_27 = arith.constant 0 : index
    %c0_28 = arith.constant 0 : index
    %51 = vector.load %arg10[%c0_27, %c0_28] : memref<1x32xf32, #tpu.memory_space<vmem>>, vector<1x32xf32>
    %52 = vector.broadcast %51 : vector<1x32xf32> to vector<16x32xf32>
    %53 = arith.addf %50, %52 : vector<16x32xf32>
    %54 = arith.addf %53, %1 : vector<16x32xf32>
    %cst_29 = arith.constant dense<0.000000e+00> : vector<16xf32>
    %55 = vector.multi_reduction <add>, %54, %cst_29 [1] : vector<16x32xf32> to vector<16xf32>
    %56 = vector.shape_cast %55 : vector<16xf32> to vector<16x1xf32>
    %cst_30 = arith.constant 3.200000e+01 : f32
    %57 = vector.broadcast %cst_30 : f32 to vector<16x1xf32>
    %58 = arith.divf %56, %57 : vector<16x1xf32>
    %59 = vector.broadcast %58 : vector<16x1xf32> to vector<16x32xf32>
    %60 = arith.subf %54, %59 : vector<16x32xf32>
    %61 = arith.mulf %60, %60 : vector<16x32xf32>
    %cst_31 = arith.constant dense<0.000000e+00> : vector<16xf32>
    %62 = vector.multi_reduction <add>, %61, %cst_31 [1] : vector<16x32xf32> to vector<16xf32>
    %63 = vector.shape_cast %62 : vector<16xf32> to vector<16x1xf32>
    %cst_32 = arith.constant 3.200000e+01 : f32
    %64 = vector.broadcast %cst_32 : f32 to vector<16x1xf32>
    %65 = arith.divf %63, %64 : vector<16x1xf32>
    %cst_33 = arith.constant 9.99999974E-6 : f32
    %66 = vector.broadcast %cst_33 : f32 to vector<16x1xf32>
    %67 = arith.addf %65, %66 : vector<16x1xf32>
    %68 = math.rsqrt %67 : vector<16x1xf32>
    %69 = vector.broadcast %68 : vector<16x1xf32> to vector<16x32xf32>
    %70 = arith.mulf %60, %69 : vector<16x32xf32>
    %c0_34 = arith.constant 0 : index
    %c0_35 = arith.constant 0 : index
    %71 = vector.load %arg11[%c0_34, %c0_35] : memref<1x32xf32, #tpu.memory_space<vmem>>, vector<1x32xf32>
    %72 = vector.broadcast %71 : vector<1x32xf32> to vector<16x32xf32>
    %73 = arith.mulf %70, %72 : vector<16x32xf32>
    %c0_36 = arith.constant 0 : index
    %c0_37 = arith.constant 0 : index
    %74 = vector.load %arg12[%c0_36, %c0_37] : memref<1x32xf32, #tpu.memory_space<vmem>>, vector<1x32xf32>
    %75 = vector.broadcast %74 : vector<1x32xf32> to vector<16x32xf32>
    %76 = arith.addf %73, %75 : vector<16x32xf32>
    %77 = arith.truncf %76 : vector<16x32xf32> to vector<16x32xbf16>
    %c0_38 = arith.constant 0 : index
    %c0_39 = arith.constant 0 : index
    %78 = vector.load %arg13[%c0_38, %c0_39] : memref<32x256xbf16, #tpu.memory_space<vmem>>, vector<32x256xbf16>
    %cst_40 = arith.constant dense<0.000000e+00> : vector<16x256xf32>
    %79 = tpu.matmul %77, %78, %cst_40 {dimension_numbers = #tpu.dot_dimension_numbers<[1], [0], [0], [1], [0, 0, 1, 1], [], []>} : vector<16x32xbf16>, vector<32x256xbf16>, vector<16x256xf32> -> vector<16x256xf32>
    %c0_41 = arith.constant 0 : index
    %c0_42 = arith.constant 0 : index
    %80 = vector.load %arg14[%c0_41, %c0_42] : memref<1x256xf32, #tpu.memory_space<vmem>>, vector<1x256xf32>
    %81 = vector.broadcast %80 : vector<1x256xf32> to vector<16x256xf32>
    %82 = arith.addf %79, %81 : vector<16x256xf32>
    %cst_43 = arith.constant 0.000000e+00 : f32
    %83 = vector.broadcast %cst_43 : f32 to vector<16x256xf32>
    %84 = arith.maximumf %82, %83 : vector<16x256xf32>
    %85 = arith.truncf %84 : vector<16x256xf32> to vector<16x256xbf16>
    %c0_44 = arith.constant 0 : index
    %c0_45 = arith.constant 0 : index
    %86 = vector.load %arg15[%c0_44, %c0_45] : memref<256x32xbf16, #tpu.memory_space<vmem>>, vector<256x32xbf16>
    %cst_46 = arith.constant dense<0.000000e+00> : vector<16x32xf32>
    %87 = tpu.matmul %85, %86, %cst_46 {dimension_numbers = #tpu.dot_dimension_numbers<[1], [0], [0], [1], [0, 0, 1, 1], [], []>} : vector<16x256xbf16>, vector<256x32xbf16>, vector<16x32xf32> -> vector<16x32xf32>
    %c0_47 = arith.constant 0 : index
    %c0_48 = arith.constant 0 : index
    %88 = vector.load %arg16[%c0_47, %c0_48] : memref<1x32xf32, #tpu.memory_space<vmem>>, vector<1x32xf32>
    %89 = vector.broadcast %88 : vector<1x32xf32> to vector<16x32xf32>
    %90 = arith.addf %87, %89 : vector<16x32xf32>
    %91 = arith.addf %76, %90 : vector<16x32xf32>
    %cst_49 = arith.constant dense<0.000000e+00> : vector<16xf32>
    %92 = vector.multi_reduction <add>, %91, %cst_49 [1] : vector<16x32xf32> to vector<16xf32>
    %93 = vector.shape_cast %92 : vector<16xf32> to vector<16x1xf32>
    %cst_50 = arith.constant 3.200000e+01 : f32
    %94 = vector.broadcast %cst_50 : f32 to vector<16x1xf32>
    %95 = arith.divf %93, %94 : vector<16x1xf32>
    %96 = vector.broadcast %95 : vector<16x1xf32> to vector<16x32xf32>
    %97 = arith.subf %91, %96 : vector<16x32xf32>
    %98 = arith.mulf %97, %97 : vector<16x32xf32>
    %cst_51 = arith.constant dense<0.000000e+00> : vector<16xf32>
    %99 = vector.multi_reduction <add>, %98, %cst_51 [1] : vector<16x32xf32> to vector<16xf32>
    %100 = vector.shape_cast %99 : vector<16xf32> to vector<16x1xf32>
    %cst_52 = arith.constant 3.200000e+01 : f32
    %101 = vector.broadcast %cst_52 : f32 to vector<16x1xf32>
    %102 = arith.divf %100, %101 : vector<16x1xf32>
    %cst_53 = arith.constant 9.99999974E-6 : f32
    %103 = vector.broadcast %cst_53 : f32 to vector<16x1xf32>
    %104 = arith.addf %102, %103 : vector<16x1xf32>
    %105 = math.rsqrt %104 : vector<16x1xf32>
    %106 = vector.broadcast %105 : vector<16x1xf32> to vector<16x32xf32>
    %107 = arith.mulf %97, %106 : vector<16x32xf32>
    %c0_54 = arith.constant 0 : index
    %c0_55 = arith.constant 0 : index
    %108 = vector.load %arg17[%c0_54, %c0_55] : memref<1x32xf32, #tpu.memory_space<vmem>>, vector<1x32xf32>
    %109 = vector.broadcast %108 : vector<1x32xf32> to vector<16x32xf32>
    %110 = arith.mulf %107, %109 : vector<16x32xf32>
    %c0_56 = arith.constant 0 : index
    %c0_57 = arith.constant 0 : index
    %111 = vector.load %arg18[%c0_56, %c0_57] : memref<1x32xf32, #tpu.memory_space<vmem>>, vector<1x32xf32>
    %112 = vector.broadcast %111 : vector<1x32xf32> to vector<16x32xf32>
    %113 = arith.addf %110, %112 : vector<16x32xf32>
    %c0_58 = arith.constant 0 : index
    %c0_59 = arith.constant 0 : index
    %c0_60 = arith.constant 0 : index
    %114 = vector.load %arg19[%c0_58, %c0_59, %c0_60] : memref<1x16x32xf32, #tpu.memory_space<vmem>>, vector<1x16x32xf32>
    %115 = vector.shape_cast %114 : vector<1x16x32xf32> to vector<16x32xf32>
    %116 = vector.shape_cast %113 : vector<16x32xf32> to vector<1x16x32xf32>
    tpu.vector_store %arg19[%c0_58, %c0_59, %c0_60], %116 {strides = array<i32>} : memref<1x16x32xf32, #tpu.memory_space<vmem>>, vector<1x16x32xf32>,
    return
  }
  func.func @transform_0(%arg0: i32) -> (i32, i32, i32) {
    %c0_i32 = arith.constant 0 : i32
    %c0_i32_0 = arith.constant 0 : i32
    %c0_i32_1 = arith.constant 0 : i32
    return %arg0, %c0_i32, %c0_i32_0 : i32, i32, i32
  }
  func.func @transform_1(%arg0: i32) -> (i32, i32, i32) {
    %c0_i32 = arith.constant 0 : i32
    %c0_i32_0 = arith.constant 0 : i32
    %c0_i32_1 = arith.constant 0 : i32
    return %arg0, %c0_i32, %c0_i32_0 : i32, i32, i32
  }
  func.func @transform_2(%arg0: i32) -> (i32, i32) {
    %c0_i32 = arith.constant 0 : i32
    %c0_i32_0 = arith.constant 0 : i32
    %c0_i32_1 = arith.constant 0 : i32
    return %c0_i32, %c0_i32_0 : i32, i32
  }
  func.func @transform_3(%arg0: i32) -> (i32, i32) {
    %c0_i32 = arith.constant 0 : i32
    %c0_i32_0 = arith.constant 0 : i32
    %c0_i32_1 = arith.constant 0 : i32
    return %c0_i32, %c0_i32_0 : i32, i32
  }
  func.func @transform_4(%arg0: i32) -> (i32, i32) {
    %c0_i32 = arith.constant 0 : i32
    %c0_i32_0 = arith.constant 0 : i32
    %c0_i32_1 = arith.constant 0 : i32
    return %c0_i32, %c0_i32_0 : i32, i32
  }
  func.func @transform_5(%arg0: i32) -> (i32, i32) {
    %c0_i32 = arith.constant 0 : i32
    %c0_i32_0 = arith.constant 0 : i32
    %c0_i32_1 = arith.constant 0 : i32
    return %c0_i32, %c0_i32_0 : i32, i32
  }
  func.func @transform_6(%arg0: i32) -> (i32, i32) {
    %c0_i32 = arith.constant 0 : i32
    %c0_i32_0 = arith.constant 0 : i32
    %c0_i32_1 = arith.constant 0 : i32
    return %c0_i32, %c0_i32_0 : i32, i32
  }
  func.func @transform_7(%arg0: i32) -> (i32, i32) {
    %c0_i32 = arith.constant 0 : i32
    %c0_i32_0 = arith.constant 0 : i32
    %c0_i32_1 = arith.constant 0 : i32
    return %c0_i32, %c0_i32_0 : i32, i32
  }
  func.func @transform_8(%arg0: i32) -> (i32, i32) {
    %c0_i32 = arith.constant 0 : i32
    %c0_i32_0 = arith.constant 0 : i32
    %c0_i32_1 = arith.constant 0 : i32
    return %c0_i32, %c0_i32_0 : i32, i32
  }
  func.func @transform_9(%arg0: i32) -> (i32, i32) {
    %c0_i32 = arith.constant 0 : i32
    %c0_i32_0 = arith.constant 0 : i32
    %c0_i32_1 = arith.constant 0 : i32
    return %c0_i32, %c0_i32_0 : i32, i32
  }
  func.func @transform_10(%arg0: i32) -> (i32, i32) {
    %c0_i32 = arith.constant 0 : i32
    %c0_i32_0 = arith.constant 0 : i32
    %c0_i32_1 = arith.constant 0 : i32
    return %c0_i32, %c0_i32_0 : i32, i32
  }
  func.func @transform_11(%arg0: i32) -> (i32, i32) {
    %c0_i32 = arith.constant 0 : i32
    %c0_i32_0 = arith.constant 0 : i32
    %c0_i32_1 = arith.constant 0 : i32
    return %c0_i32, %c0_i32_0 : i32, i32
  }
  func.func @transform_12(%arg0: i32) -> (i32, i32) {
    %c0_i32 = arith.constant 0 : i32
    %c0_i32_0 = arith.constant 0 : i32
    %c0_i32_1 = arith.constant 0 : i32
    return %c0_i32, %c0_i32_0 : i32, i32
  }
  func.func @transform_13(%arg0: i32) -> (i32, i32) {
    %c0_i32 = arith.constant 0 : i32
    %c0_i32_0 = arith.constant 0 : i32
    %c0_i32_1 = arith.constant 0 : i32
    return %c0_i32, %c0_i32_0 : i32, i32
  }
  func.func @transform_14(%arg0: i32) -> (i32, i32) {
    %c0_i32 = arith.constant 0 : i32
    %c0_i32_0 = arith.constant 0 : i32
    %c0_i32_1 = arith.constant 0 : i32
    return %c0_i32, %c0_i32_0 : i32, i32
  }
  func.func @transform_15(%arg0: i32) -> (i32, i32) {
    %c0_i32 = arith.constant 0 : i32
    %c0_i32_0 = arith.constant 0 : i32
    %c0_i32_1 = arith.constant 0 : i32
    return %c0_i32, %c0_i32_0 : i32, i32
  }
  func.func @transform_16(%arg0: i32) -> (i32, i32) {
    %c0_i32 = arith.constant 0 : i32
    %c0_i32_0 = arith.constant 0 : i32
    %c0_i32_1 = arith.constant 0 : i32
    return %c0_i32, %c0_i32_0 : i32, i32
  }
  func.func @transform_17(%arg0: i32) -> (i32, i32) {
    %c0_i32 = arith.constant 0 : i32
    %c0_i32_0 = arith.constant 0 : i32
    %c0_i32_1 = arith.constant 0 : i32
    return %c0_i32, %c0_i32_0 : i32, i32
  }
  func.func @transform_18(%arg0: i32) -> (i32, i32, i32) {
    %c0_i32 = arith.constant 0 : i32
    %c0_i32_0 = arith.constant 0 : i32
    %c0_i32_1 = arith.constant 0 : i32
    return %arg0, %c0_i32, %c0_i32_0 : i32, i32, i32
  }
}

</mosaic_0001>

<llo_original>
// kernel: transformer_encoder.3
$region0: #{transformer_encoder.3}
  #allocation0 [shape = 'u32[]', space=smem, size = 0x4, offset = 0x4, fixed_abs, tag = 'smem constant byte address 0x4 - core index']
  #allocation1 [shape = 'u32[72,128]{1,0:T(1,128)}', space=vmem, size = 0x9000, scoped, tag = 'internal scratch']
  %s0 = inlined_call_operand.vmem [shape: f32[2,16,32], index: 0, kind: input, shape index: {}]
  %s1 = inlined_call_operand.vmem [shape: f32[2,16,32], index: 1, kind: input, shape index: {}]
  %s2 = inlined_call_operand.vmem [shape: bf16[32,32], index: 2, kind: input, shape index: {}]
  %s3 = inlined_call_operand.vmem [shape: bf16[32,32], index: 3, kind: input, shape index: {}]
  %s4 = inlined_call_operand.vmem [shape: bf16[32,32], index: 4, kind: input, shape index: {}]
  %s5 = inlined_call_operand.vmem [shape: f32[1,32], index: 5, kind: input, shape index: {}]
  %s6 = inlined_call_operand.vmem [shape: f32[1,32], index: 6, kind: input, shape index: {}]
  %s7 = inlined_call_operand.vmem [shape: f32[1,32], index: 7, kind: input, shape index: {}]
  %s8 = inlined_call_operand.vmem [shape: bf16[32,32], index: 8, kind: input, shape index: {}]
  %s9 = inlined_call_operand.vmem [shape: f32[1,32], index: 9, kind: input, shape index: {}]
  %s10 = inlined_call_operand.vmem [shape: f32[1,32], index: 10, kind: input, shape index: {}]
  %s11 = inlined_call_operand.vmem [shape: f32[1,32], index: 11, kind: input, shape index: {}]
  %s12 = inlined_call_operand.vmem [shape: bf16[32,256], index: 12, kind: input, shape index: {}]
  %s13 = inlined_call_operand.vmem [shape: f32[1,256], index: 13, kind: input, shape index: {}]
  %s14 = inlined_call_operand.vmem [shape: bf16[256,32], index: 14, kind: input, shape index: {}]
  %s15 = inlined_call_operand.vmem [shape: f32[1,32], index: 15, kind: input, shape index: {}]
  %s16 = inlined_call_operand.vmem [shape: f32[1,32], index: 16, kind: input, shape index: {}]
  %s17 = inlined_call_operand.vmem [shape: f32[1,32], index: 17, kind: input, shape index: {}]
  %s18 = inlined_call_operand.hbm [shape: f32[2,16,32], index: 18, kind: output, shape index: {}]
  %s19 = sld [smem:[#allocation0]]
  $region105: #{transformer_encoder.3} parent=0
    _
  %s21 = ssub.s32 1, %s19
  %s22 = scalar_select 0, %s21, %s19
  $region1: #{transformer_encoder.3} parent=0
    #allocation2 [shape = 'u8[16384]{0}', space=vmem, size = 0x4000, scoped, tag = 'output window, operand 0']
    #allocation3 [shape = 's32[2]{0}', space=sflag, size = 0x8, scoped, tag = 'scoped memory for transformer_encoder.3']
    %23 = vsyncpa [#allocation3], 0
    %s24 = scalar_lea.sflag [#allocation3], 1
    %25 = vsyncpa %s24, 0
    loop: start=0, step=1, limit=4
    $region2: #{transformer_encoder.3} parent=1 // loop_pre_header
      _
    $region3: #{transformer_encoder.3} parent=1 // loop_header
      %s27 = sphi 0, %s31
      %p28 = scmp.ge.s32.totalorder %s27, 4
      %s37 = sphi 0, %s39
      %s40 = sphi 0, %s37
      %s41 = sphi 0, %s40
      %s57 = sphi 0, %s41
      %s63 = sphi 0, %s65
      %s66 = sphi 0, %s63
      %s67 = sphi 0, %s66
      %s83 = sphi 0, %s67
      %s87 = sphi 0, %s87
      %s89 = sphi 0, %s87
      %s90 = sphi 0, %s89
      %s104 = sphi 0, %s90
      %s108 = sphi 0, %s108
      %s110 = sphi 0, %s108
      %s111 = sphi 0, %s110
      %s125 = sphi 0, %s111
      %s129 = sphi 0, %s129
      %s131 = sphi 0, %s129
      %s132 = sphi 0, %s131
      %s146 = sphi 0, %s132
      %s150 = sphi 0, %s150
      %s152 = sphi 0, %s150
      %s153 = sphi 0, %s152
      %s167 = sphi 0, %s153
      %s171 = sphi 0, %s171
      %s173 = sphi 0, %s171
      %s174 = sphi 0, %s173
      %s188 = sphi 0, %s174
      %s192 = sphi 0, %s192
      %s194 = sphi 0, %s192
      %s195 = sphi 0, %s194
      %s209 = sphi 0, %s195
      %s213 = sphi 0, %s213
      %s215 = sphi 0, %s213
      %s216 = sphi 0, %s215
      %s230 = sphi 0, %s216
      %s234 = sphi 0, %s234
      %s236 = sphi 0, %s234
      %s237 = sphi 0, %s236
      %s251 = sphi 0, %s237
      %s255 = sphi 0, %s255
      %s257 = sphi 0, %s255
      %s258 = sphi 0, %s257
      %s272 = sphi 0, %s258
      %s276 = sphi 0, %s276
      %s278 = sphi 0, %s276
      %s279 = sphi 0, %s278
      %s293 = sphi 0, %s279
      %s297 = sphi 0, %s297
      %s299 = sphi 0, %s297
      %s300 = sphi 0, %s299
      %s314 = sphi 0, %s300
      %s318 = sphi 0, %s318
      %s320 = sphi 0, %s318
      %s321 = sphi 0, %s320
      %s335 = sphi 0, %s321
      %s339 = sphi 0, %s339
      %s341 = sphi 0, %s339
      %s342 = sphi 0, %s341
      %s356 = sphi 0, %s342
      %s360 = sphi 0, %s360
      %s362 = sphi 0, %s360
      %s363 = sphi 0, %s362
      %s377 = sphi 0, %s363
      %s381 = sphi 0, %s381
      %s383 = sphi 0, %s381
      %s384 = sphi 0, %s383
      %s398 = sphi 0, %s384
      %s402 = sphi 0, %s402
      %s404 = sphi 0, %s402
      %s405 = sphi 0, %s404
      %s419 = sphi 0, %s405
      %s425 = sphi 0, %s427
      %s428 = sphi 0, %s425
      %s429 = sphi 0, %s428
      %s445 = sphi 0, %s429
    $region4: #{transformer_encoder.3} parent=1 // loop_header_branch
      %30 = sbr.rel (%p28) target = $region8
    $region5: #{transformer_encoder.3} parent=1 // loop_body
      %s32 = ssub.s32 %s27, 1
      %s33 = ssub.s32 %s27, 2
      %s34 = sadd.s32 %s27, 1
      %s35 = ssub.s32 %s27, %s34
      %p36 = scmp.eq.s32.totalorder %s35, 0
      %s38 = sadd.s32 %s37, 1
      %s39 = scalar_select %p36, %s37, %s38
      %p42 = pneg %p36
      %p43 = scmp.eq.s32.totalorder %s27, 1
      %p44 = por %p42, %p43
      %p45 = scmp.ne.s32.totalorder %s37, %s40
      %p46 = scmp.eq.s32.totalorder %s27, 0
      %p47 = por %p45, %p46
      %p48 = scmp.ne.s32.totalorder %s37, %s40
      %p49 = scmp.eq.s32.totalorder %s32, 1
      %p50 = por %p48, %p49
      %p51 = scmp.ne.s32.totalorder %s40, %s41
      %p52 = scmp.eq.s32.totalorder %s32, 0
      %p53 = por %p51, %p52
      %p54 = scmp.ne.s32.totalorder %s40, %s41
      %p55 = scmp.eq.s32.totalorder %s33, 1
      %p56 = por %p54, %p55
      %p58 = scmp.ne.s32.totalorder %s41, %s57
      %p59 = scmp.eq.s32.totalorder %s33, 0
      %p60 = por %p58, %p59
      %s61 = ssub.s32 %s27, %s34
      %p62 = scmp.eq.s32.totalorder %s61, 0
      %s64 = sadd.s32 %s63, 1
      %s65 = scalar_select %p62, %s63, %s64
      %p68 = pneg %p62
      %p69 = scmp.eq.s32.totalorder %s27, 1
      %p70 = por %p68, %p69
      %p71 = scmp.ne.s32.totalorder %s63, %s66
      %p72 = scmp.eq.s32.totalorder %s27, 0
      %p73 = por %p71, %p72
      %p74 = scmp.ne.s32.totalorder %s63, %s66
      %p75 = scmp.eq.s32.totalorder %s32, 1
      %p76 = por %p74, %p75
      %p77 = scmp.ne.s32.totalorder %s66, %s67
      %p78 = scmp.eq.s32.totalorder %s32, 0
      %p79 = por %p77, %p78
      %p80 = scmp.ne.s32.totalorder %s66, %s67
      %p81 = scmp.eq.s32.totalorder %s33, 1
      %p82 = por %p80, %p81
      %p84 = scmp.ne.s32.totalorder %s67, %s83
      %p85 = scmp.eq.s32.totalorder %s33, 0
      %p86 = por %p84, %p85
      %s88 = sadd.s32 %s87, 1
      %p91 = scmp.eq.s32.totalorder %s27, 1
      %p92 = scmp.ne.s32.totalorder %s87, %s89
      %p93 = scmp.eq.s32.totalorder %s27, 0
      %p94 = por %p92, %p93
      %p95 = scmp.ne.s32.totalorder %s87, %s89
      %p96 = scmp.eq.s32.totalorder %s32, 1
      %p97 = por %p95, %p96
      %p98 = scmp.ne.s32.totalorder %s89, %s90
      %p99 = scmp.eq.s32.totalorder %s32, 0
      %p100 = por %p98, %p99
      %p101 = scmp.ne.s32.totalorder %s89, %s90
      %p102 = scmp.eq.s32.totalorder %s33, 1
      %p103 = por %p101, %p102
      %p105 = scmp.ne.s32.totalorder %s90, %s104
      %p106 = scmp.eq.s32.totalorder %s33, 0
      %p107 = por %p105, %p106
      %s109 = sadd.s32 %s108, 1
      %p112 = scmp.eq.s32.totalorder %s27, 1
      %p113 = scmp.ne.s32.totalorder %s108, %s110
      %p114 = scmp.eq.s32.totalorder %s27, 0
      %p115 = por %p113, %p114
      %p116 = scmp.ne.s32.totalorder %s108, %s110
      %p117 = scmp.eq.s32.totalorder %s32, 1
      %p118 = por %p116, %p117
      %p119 = scmp.ne.s32.totalorder %s110, %s111
      %p120 = scmp.eq.s32.totalorder %s32, 0
      %p121 = por %p119, %p120
      %p122 = scmp.ne.s32.totalorder %s110, %s111
      %p123 = scmp.eq.s32.totalorder %s33, 1
      %p124 = por %p122, %p123
      %p126 = scmp.ne.s32.totalorder %s111, %s125
      %p127 = scmp.eq.s32.totalorder %s33, 0
      %p128 = por %p126, %p127
      %s130 = sadd.s32 %s129, 1
      %p133 = scmp.eq.s32.totalorder %s27, 1
      %p134 = scmp.ne.s32.totalorder %s129, %s131
      %p135 = scmp.eq.s32.totalorder %s27, 0
      %p136 = por %p134, %p135
      %p137 = scmp.ne.s32.totalorder %s129, %s131
      %p138 = scmp.eq.s32.totalorder %s32, 1
      %p139 = por %p137, %p138
      %p140 = scmp.ne.s32.totalorder %s131, %s132
      %p141 = scmp.eq.s32.totalorder %s32, 0
      %p142 = por %p140, %p141
      %p143 = scmp.ne.s32.totalorder %s131, %s132
      %p144 = scmp.eq.s32.totalorder %s33, 1
      %p145 = por %p143, %p144
      %p147 = scmp.ne.s32.totalorder %s132, %s146
      %p148 = scmp.eq.s32.totalorder %s33, 0
      %p149 = por %p147, %p148
      %s151 = sadd.s32 %s150, 1
      %p154 = scmp.eq.s32.totalorder %s27, 1
      %p155 = scmp.ne.s32.totalorder %s150, %s152
      %p156 = scmp.eq.s32.totalorder %s27, 0
      %p157 = por %p155, %p156
      %p158 = scmp.ne.s32.totalorder %s150, %s152
      %p159 = scmp.eq.s32.totalorder %s32, 1
      %p160 = por %p158, %p159
      %p161 = scmp.ne.s32.totalorder %s152, %s153
      %p162 = scmp.eq.s32.totalorder %s32, 0
      %p163 = por %p161, %p162
      %p164 = scmp.ne.s32.totalorder %s152, %s153
      %p165 = scmp.eq.s32.totalorder %s33, 1
      %p166 = por %p164, %p165
      %p168 = scmp.ne.s32.totalorder %s153, %s167
      %p169 = scmp.eq.s32.totalorder %s33, 0
      %p170 = por %p168, %p169
      %s172 = sadd.s32 %s171, 1
      %p175 = scmp.eq.s32.totalorder %s27, 1
      %p176 = scmp.ne.s32.totalorder %s171, %s173
      %p177 = scmp.eq.s32.totalorder %s27, 0
      %p178 = por %p176, %p177
      %p179 = scmp.ne.s32.totalorder %s171, %s173
      %p180 = scmp.eq.s32.totalorder %s32, 1
      %p181 = por %p179, %p180
      %p182 = scmp.ne.s32.totalorder %s173, %s174
      %p183 = scmp.eq.s32.totalorder %s32, 0
      %p184 = por %p182, %p183
      %p185 = scmp.ne.s32.totalorder %s173, %s174
      %p186 = scmp.eq.s32.totalorder %s33, 1
      %p187 = por %p185, %p186
      %p189 = scmp.ne.s32.totalorder %s174, %s188
      %p190 = scmp.eq.s32.totalorder %s33, 0
      %p191 = por %p189, %p190
      %s193 = sadd.s32 %s192, 1
      %p196 = scmp.eq.s32.totalorder %s27, 1
      %p197 = scmp.ne.s32.totalorder %s192, %s194
      %p198 = scmp.eq.s32.totalorder %s27, 0
      %p199 = por %p197, %p198
      %p200 = scmp.ne.s32.totalorder %s192, %s194
      %p201 = scmp.eq.s32.totalorder %s32, 1
      %p202 = por %p200, %p201
      %p203 = scmp.ne.s32.totalorder %s194, %s195
      %p204 = scmp.eq.s32.totalorder %s32, 0
      %p205 = por %p203, %p204
      %p206 = scmp.ne.s32.totalorder %s194, %s195
      %p207 = scmp.eq.s32.totalorder %s33, 1
      %p208 = por %p206, %p207
      %p210 = scmp.ne.s32.totalorder %s195, %s209
      %p211 = scmp.eq.s32.totalorder %s33, 0
      %p212 = por %p210, %p211
      %s214 = sadd.s32 %s213, 1
      %p217 = scmp.eq.s32.totalorder %s27, 1
      %p218 = scmp.ne.s32.totalorder %s213, %s215
      %p219 = scmp.eq.s32.totalorder %s27, 0
      %p220 = por %p218, %p219
      %p221 = scmp.ne.s32.totalorder %s213, %s215
      %p222 = scmp.eq.s32.totalorder %s32, 1
      %p223 = por %p221, %p222
      %p224 = scmp.ne.s32.totalorder %s215, %s216
      %p225 = scmp.eq.s32.totalorder %s32, 0
      %p226 = por %p224, %p225
      %p227 = scmp.ne.s32.totalorder %s215, %s216
      %p228 = scmp.eq.s32.totalorder %s33, 1
      %p229 = por %p227, %p228
      %p231 = scmp.ne.s32.totalorder %s216, %s230
      %p232 = scmp.eq.s32.totalorder %s33, 0
      %p233 = por %p231, %p232
      %s235 = sadd.s32 %s234, 1
      %p238 = scmp.eq.s32.totalorder %s27, 1
      %p239 = scmp.ne.s32.totalorder %s234, %s236
      %p240 = scmp.eq.s32.totalorder %s27, 0
      %p241 = por %p239, %p240
      %p242 = scmp.ne.s32.totalorder %s234, %s236
      %p243 = scmp.eq.s32.totalorder %s32, 1
      %p244 = por %p242, %p243
      %p245 = scmp.ne.s32.totalorder %s236, %s237
      %p246 = scmp.eq.s32.totalorder %s32, 0
      %p247 = por %p245, %p246
      %p248 = scmp.ne.s32.totalorder %s236, %s237
      %p249 = scmp.eq.s32.totalorder %s33, 1
      %p250 = por %p248, %p249
      %p252 = scmp.ne.s32.totalorder %s237, %s251
      %p253 = scmp.eq.s32.totalorder %s33, 0
      %p254 = por %p252, %p253
      %s256 = sadd.s32 %s255, 1
      %p259 = scmp.eq.s32.totalorder %s27, 1
      %p260 = scmp.ne.s32.totalorder %s255, %s257
      %p261 = scmp.eq.s32.totalorder %s27, 0
      %p262 = por %p260, %p261
      %p263 = scmp.ne.s32.totalorder %s255, %s257
      %p264 = scmp.eq.s32.totalorder %s32, 1
      %p265 = por %p263, %p264
      %p266 = scmp.ne.s32.totalorder %s257, %s258
      %p267 = scmp.eq.s32.totalorder %s32, 0
      %p268 = por %p266, %p267
      %p269 = scmp.ne.s32.totalorder %s257, %s258
      %p270 = scmp.eq.s32.totalorder %s33, 1
      %p271 = por %p269, %p270
      %p273 = scmp.ne.s32.totalorder %s258, %s272
      %p274 = scmp.eq.s32.totalorder %s33, 0
      %p275 = por %p273, %p274
      %s277 = sadd.s32 %s276, 1
      %p280 = scmp.eq.s32.totalorder %s27, 1
      %p281 = scmp.ne.s32.totalorder %s276, %s278
      %p282 = scmp.eq.s32.totalorder %s27, 0
      %p283 = por %p281, %p282
      %p284 = scmp.ne.s32.totalorder %s276, %s278
      %p285 = scmp.eq.s32.totalorder %s32, 1
      %p286 = por %p284, %p285
      %p287 = scmp.ne.s32.totalorder %s278, %s279
      %p288 = scmp.eq.s32.totalorder %s32, 0
      %p289 = por %p287, %p288
      %p290 = scmp.ne.s32.totalorder %s278, %s279
      %p291 = scmp.eq.s32.totalorder %s33, 1
      %p292 = por %p290, %p291
      %p294 = scmp.ne.s32.totalorder %s279, %s293
      %p295 = scmp.eq.s32.totalorder %s33, 0
      %p296 = por %p294, %p295
      %s298 = sadd.s32 %s297, 1
      %p301 = scmp.eq.s32.totalorder %s27, 1
      %p302 = scmp.ne.s32.totalorder %s297, %s299
      %p303 = scmp.eq.s32.totalorder %s27, 0
      %p304 = por %p302, %p303
      %p305 = scmp.ne.s32.totalorder %s297, %s299
      %p306 = scmp.eq.s32.totalorder %s32, 1
      %p307 = por %p305, %p306
      %p308 = scmp.ne.s32.totalorder %s299, %s300
      %p309 = scmp.eq.s32.totalorder %s32, 0
      %p310 = por %p308, %p309
      %p311 = scmp.ne.s32.totalorder %s299, %s300
      %p312 = scmp.eq.s32.totalorder %s33, 1
      %p313 = por %p311, %p312
      %p315 = scmp.ne.s32.totalorder %s300, %s314
      %p316 = scmp.eq.s32.totalorder %s33, 0
      %p317 = por %p315, %p316
      %s319 = sadd.s32 %s318, 1
      %p322 = scmp.eq.s32.totalorder %s27, 1
      %p323 = scmp.ne.s32.totalorder %s318, %s320
      %p324 = scmp.eq.s32.totalorder %s27, 0
      %p325 = por %p323, %p324
      %p326 = scmp.ne.s32.totalorder %s318, %s320
      %p327 = scmp.eq.s32.totalorder %s32, 1
      %p328 = por %p326, %p327
      %p329 = scmp.ne.s32.totalorder %s320, %s321
      %p330 = scmp.eq.s32.totalorder %s32, 0
      %p331 = por %p329, %p330
      %p332 = scmp.ne.s32.totalorder %s320, %s321
      %p333 = scmp.eq.s32.totalorder %s33, 1
      %p334 = por %p332, %p333
      %p336 = scmp.ne.s32.totalorder %s321, %s335
      %p337 = scmp.eq.s32.totalorder %s33, 0
      %p338 = por %p336, %p337
      %s340 = sadd.s32 %s339, 1
      %p343 = scmp.eq.s32.totalorder %s27, 1
      %p344 = scmp.ne.s32.totalorder %s339, %s341
      %p345 = scmp.eq.s32.totalorder %s27, 0
      %p346 = por %p344, %p345
      %p347 = scmp.ne.s32.totalorder %s339, %s341
      %p348 = scmp.eq.s32.totalorder %s32, 1
      %p349 = por %p347, %p348
      %p350 = scmp.ne.s32.totalorder %s341, %s342
      %p351 = scmp.eq.s32.totalorder %s32, 0
      %p352 = por %p350, %p351
      %p353 = scmp.ne.s32.totalorder %s341, %s342
      %p354 = scmp.eq.s32.totalorder %s33, 1
      %p355 = por %p353, %p354
      %p357 = scmp.ne.s32.totalorder %s342, %s356
      %p358 = scmp.eq.s32.totalorder %s33, 0
      %p359 = por %p357, %p358
      %s361 = sadd.s32 %s360, 1
      %p364 = scmp.eq.s32.totalorder %s27, 1
      %p365 = scmp.ne.s32.totalorder %s360, %s362
      %p366 = scmp.eq.s32.totalorder %s27, 0
      %p367 = por %p365, %p366
      %p368 = scmp.ne.s32.totalorder %s360, %s362
      %p369 = scmp.eq.s32.totalorder %s32, 1
      %p370 = por %p368, %p369
      %p371 = scmp.ne.s32.totalorder %s362, %s363
      %p372 = scmp.eq.s32.totalorder %s32, 0
      %p373 = por %p371, %p372
      %p374 = scmp.ne.s32.totalorder %s362, %s363
      %p375 = scmp.eq.s32.totalorder %s33, 1
      %p376 = por %p374, %p375
      %p378 = scmp.ne.s32.totalorder %s363, %s377
      %p379 = scmp.eq.s32.totalorder %s33, 0
      %p380 = por %p378, %p379
      %s382 = sadd.s32 %s381, 1
      %p385 = scmp.eq.s32.totalorder %s27, 1
      %p386 = scmp.ne.s32.totalorder %s381, %s383
      %p387 = scmp.eq.s32.totalorder %s27, 0
      %p388 = por %p386, %p387
      %p389 = scmp.ne.s32.totalorder %s381, %s383
      %p390 = scmp.eq.s32.totalorder %s32, 1
      %p391 = por %p389, %p390
      %p392 = scmp.ne.s32.totalorder %s383, %s384
      %p393 = scmp.eq.s32.totalorder %s32, 0
      %p394 = por %p392, %p393
      %p395 = scmp.ne.s32.totalorder %s383, %s384
      %p396 = scmp.eq.s32.totalorder %s33, 1
      %p397 = por %p395, %p396
      %p399 = scmp.ne.s32.totalorder %s384, %s398
      %p400 = scmp.eq.s32.totalorder %s33, 0
      %p401 = por %p399, %p400
      %s403 = sadd.s32 %s402, 1
      %p406 = scmp.eq.s32.totalorder %s27, 1
      %p407 = scmp.ne.s32.totalorder %s402, %s404
      %p408 = scmp.eq.s32.totalorder %s27, 0
      %p409 = por %p407, %p408
      %p410 = scmp.ne.s32.totalorder %s402, %s404
      %p411 = scmp.eq.s32.totalorder %s32, 1
      %p412 = por %p410, %p411
      %p413 = scmp.ne.s32.totalorder %s404, %s405
      %p414 = scmp.eq.s32.totalorder %s32, 0
      %p415 = por %p413, %p414
      %p416 = scmp.ne.s32.totalorder %s404, %s405
      %p417 = scmp.eq.s32.totalorder %s33, 1
      %p418 = por %p416, %p417
      %p420 = scmp.ne.s32.totalorder %s405, %s419
      %p421 = scmp.eq.s32.totalorder %s33, 0
      %p422 = por %p420, %p421
      %s423 = ssub.s32 %s27, %s34
      %p424 = scmp.eq.s32.totalorder %s423, 0
      %s426 = sadd.s32 %s425, 1
      %s427 = scalar_select %p424, %s425, %s426
      %p430 = pneg %p424
      %p431 = scmp.eq.s32.totalorder %s27, 1
      %p432 = por %p430, %p431
      %p433 = scmp.ne.s32.totalorder %s425, %s428
      %p434 = scmp.eq.s32.totalorder %s27, 0
      %p435 = por %p433, %p434
      %p436 = scmp.ne.s32.totalorder %s425, %s428
      %p437 = scmp.eq.s32.totalorder %s32, 1
      %p438 = por %p436, %p437
      %p439 = scmp.ne.s32.totalorder %s428, %s429
      %p440 = scmp.eq.s32.totalorder %s32, 0
      %p441 = por %p439, %p440
      %p442 = scmp.ne.s32.totalorder %s428, %s429
      %p443 = scmp.eq.s32.totalorder %s33, 1
      %p444 = por %p442, %p443
      %p446 = scmp.ne.s32.totalorder %s429, %s445
      %p447 = scmp.eq.s32.totalorder %s33, 0
      %p448 = por %p446, %p447
      %p449 = scmp.le.s32.totalorder 1, %s27
      %p450 = scmp.lt.s32.totalorder %s27, 3
      %p451 = pnand %p449, %p450
      %p452 = pneg %p451
      // Predicated region
      $region9: #{transformer_encoder.3} parent=5 // pred_check
        _
      $region10: #{transformer_encoder.3} parent=5 // pred_check_branch
        %454 = sbr.rel (%p451) target = $region12
      $region11: #{transformer_encoder.3} parent=5 // pred_region
        %s455 = ssub.s32 %s27, 1
        // Predicated region
        $region13: #{transformer_encoder.3} parent=11 // pred_check
          %p456 = pneg %p100
        $region14: #{transformer_encoder.3} parent=11 // pred_check_branch
          %458 = sbr.rel (%p456) target = $region16
        $region15: #{transformer_encoder.3} parent=11 // pred_region
          _
        $region16: #{transformer_encoder.3} parent=11 // pred_fallthru
          _
        // Predicated region
        $region17: #{transformer_encoder.3} parent=11 // pred_check
          %p459 = pneg %p121
        $region18: #{transformer_encoder.3} parent=11 // pred_check_branch
          %461 = sbr.rel (%p459) target = $region20
        $region19: #{transformer_encoder.3} parent=11 // pred_region
          _
        $region20: #{transformer_encoder.3} parent=11 // pred_fallthru
          _
        // Predicated region
        $region21: #{transformer_encoder.3} parent=11 // pred_check
          %p462 = pneg %p142
        $region22: #{transformer_encoder.3} parent=11 // pred_check_branch
          %464 = sbr.rel (%p462) target = $region24
        $region23: #{transformer_encoder.3} parent=11 // pred_region
          _
        $region24: #{transformer_encoder.3} parent=11 // pred_fallthru
          _
        // Predicated region
        $region25: #{transformer_encoder.3} parent=11 // pred_check
          %p465 = pneg %p163
        $region26: #{transformer_encoder.3} parent=11 // pred_check_branch
          %467 = sbr.rel (%p465) target = $region28
        $region27: #{transformer_encoder.3} parent=11 // pred_region
          _
        $region28: #{transformer_encoder.3} parent=11 // pred_fallthru
          _
        // Predicated region
        $region29: #{transformer_encoder.3} parent=11 // pred_check
          %p468 = pneg %p184
        $region30: #{transformer_encoder.3} parent=11 // pred_check_branch
          %470 = sbr.rel (%p468) target = $region32
        $region31: #{transformer_encoder.3} parent=11 // pred_region
          _
        $region32: #{transformer_encoder.3} parent=11 // pred_fallthru
          _
        // Predicated region
        $region33: #{transformer_encoder.3} parent=11 // pred_check
          %p471 = pneg %p205
        $region34: #{transformer_encoder.3} parent=11 // pred_check_branch
          %473 = sbr.rel (%p471) target = $region36
        $region35: #{transformer_encoder.3} parent=11 // pred_region
          _
        $region36: #{transformer_encoder.3} parent=11 // pred_fallthru
          _
        // Predicated region
        $region37: #{transformer_encoder.3} parent=11 // pred_check
          %p474 = pneg %p226
        $region38: #{transformer_encoder.3} parent=11 // pred_check_branch
          %476 = sbr.rel (%p474) target = $region40
        $region39: #{transformer_encoder.3} parent=11 // pred_region
          _
        $region40: #{transformer_encoder.3} parent=11 // pred_fallthru
          _
        // Predicated region
        $region41: #{transformer_encoder.3} parent=11 // pred_check
          %p477 = pneg %p247
        $region42: #{transformer_encoder.3} parent=11 // pred_check_branch
          %479 = sbr.rel (%p477) target = $region44
        $region43: #{transformer_encoder.3} parent=11 // pred_region
          _
        $region44: #{transformer_encoder.3} parent=11 // pred_fallthru
          _
        // Predicated region
        $region45: #{transformer_encoder.3} parent=11 // pred_check
          %p480 = pneg %p268
        $region46: #{transformer_encoder.3} parent=11 // pred_check_branch
          %482 = sbr.rel (%p480) target = $region48
        $region47: #{transformer_encoder.3} parent=11 // pred_region
          _
        $region48: #{transformer_encoder.3} parent=11 // pred_fallthru
          _
        // Predicated region
        $region49: #{transformer_encoder.3} parent=11 // pred_check
          %p483 = pneg %p289
        $region50: #{transformer_encoder.3} parent=11 // pred_check_branch
          %485 = sbr.rel (%p483) target = $region52
        $region51: #{transformer_encoder.3} parent=11 // pred_region
          _
        $region52: #{transformer_encoder.3} parent=11 // pred_fallthru
          _
        // Predicated region
        $region53: #{transformer_encoder.3} parent=11 // pred_check
          %p486 = pneg %p310
        $region54: #{transformer_encoder.3} parent=11 // pred_check_branch
          %488 = sbr.rel (%p486) target = $region56
        $region55: #{transformer_encoder.3} parent=11 // pred_region
          _
        $region56: #{transformer_encoder.3} parent=11 // pred_fallthru
          _
        // Predicated region
        $region57: #{transformer_encoder.3} parent=11 // pred_check
          %p489 = pneg %p331
        $region58: #{transformer_encoder.3} parent=11 // pred_check_branch
          %491 = sbr.rel (%p489) target = $region60
        $region59: #{transformer_encoder.3} parent=11 // pred_region
          _
        $region60: #{transformer_encoder.3} parent=11 // pred_fallthru
          _
        // Predicated region
        $region61: #{transformer_encoder.3} parent=11 // pred_check
          %p492 = pneg %p352
        $region62: #{transformer_encoder.3} parent=11 // pred_check_branch
          %494 = sbr.rel (%p492) target = $region64
        $region63: #{transformer_encoder.3} parent=11 // pred_region
          _
        $region64: #{transformer_encoder.3} parent=11 // pred_fallthru
          _
        // Predicated region
        $region65: #{transformer_encoder.3} parent=11 // pred_check
          %p495 = pneg %p373
        $region66: #{transformer_encoder.3} parent=11 // pred_check_branch
          %497 = sbr.rel (%p495) target = $region68
        $region67: #{transformer_encoder.3} parent=11 // pred_region
          _
        $region68: #{transformer_encoder.3} parent=11 // pred_fallthru
          _
        // Predicated region
        $region69: #{transformer_encoder.3} parent=11 // pred_check
          %p498 = pneg %p394
        $region70: #{transformer_encoder.3} parent=11 // pred_check_branch
          %500 = sbr.rel (%p498) target = $region72
        $region71: #{transformer_encoder.3} parent=11 // pred_region
          _
        $region72: #{transformer_encoder.3} parent=11 // pred_fallthru
          _
        // Predicated region
        $region73: #{transformer_encoder.3} parent=11 // pred_check
          %p501 = pneg %p415
        $region74: #{transformer_encoder.3} parent=11 // pred_check_branch
          %503 = sbr.rel (%p501) target = $region76
        $region75: #{transformer_encoder.3} parent=11 // pred_region
          _
        $region76: #{transformer_encoder.3} parent=11 // pred_fallthru
          _
      $region12: #{transformer_encoder.3} parent=5 // pred_fallthru
        _
      %p504 = scmp.lt.s32.totalorder %s27, 2
      // Predicated region
      $region77: #{transformer_encoder.3} parent=5 // pred_check
        %p505 = pneg %p504
      $region78: #{transformer_encoder.3} parent=5 // pred_check_branch
        %507 = sbr.rel (%p505) target = $region80
      $region79: #{transformer_encoder.3} parent=5 // pred_region
        // Predicated region
        $region81: #{transformer_encoder.3} parent=79 // pred_check
          %p508 = pneg %p47
        $region82: #{transformer_encoder.3} parent=79 // pred_check_branch
          %510 = sbr.rel (%p508) target = $region84
        $region83: #{transformer_encoder.3} parent=79 // pred_region
          %p511 = scmp.lt.s32.totalorder %s27, 1
          %s512 = scalar_select %p511, %s27, 1
          %s513 = smul.addr %s512, 2
          %s514 = smul.addr %s513, 8
          %s515 = scalar_lea.vmem %s0, %s514
        $region84: #{transformer_encoder.3} parent=79 // pred_fallthru
          _
        // Predicated region
        $region85: #{transformer_encoder.3} parent=79 // pred_check
          %p516 = pneg %p73
        $region86: #{transformer_encoder.3} parent=79 // pred_check_branch
          %518 = sbr.rel (%p516) target = $region88
        $region87: #{transformer_encoder.3} parent=79 // pred_region
          %p519 = scmp.lt.s32.totalorder %s27, 1
          %s520 = scalar_select %p519, %s27, 1
          %s521 = smul.addr %s520, 2
          %s522 = smul.addr %s521, 8
          %s523 = scalar_lea.vmem %s1, %s522
        $region88: #{transformer_encoder.3} parent=79 // pred_fallthru
          _
      $region80: #{transformer_encoder.3} parent=5 // pred_fallthru
        _
      %p524 = scmp.le.s32.totalorder 1, %s27
      %p525 = scmp.lt.s32.totalorder %s27, 3
      %p526 = pnand %p524, %p525
      %p527 = pneg %p526
      // Predicated region
      $region89: #{transformer_encoder.3} parent=5 // pred_check
        _
      $region90: #{transformer_encoder.3} parent=5 // pred_check_branch
        %529 = sbr.rel (%p526) target = $region92
      $region91: #{transformer_encoder.3} parent=5 // pred_region
        %s530 = ssub.s32 %s27, 1
        %p531 = scmp.lt.s32.totalorder %s32, 1
        %s532 = scalar_select %p531, %s32, 1
        %s533 = smul.addr %s532, 2
        %s534 = smul.addr %s533, 8
        %s535 = scalar_lea.vmem %s0, %s534
        %p536 = pneg %p53
        %p537 = pneg %p50
        %p538 = scmp.lt.s32.totalorder %s32, 1
        %s539 = scalar_select %p538, %s32, 1
        %s540 = smul.addr %s539, 2
        %s541 = smul.addr %s540, 8
        %s542 = scalar_lea.vmem %s1, %s541
        %p543 = pneg %p79
        %p544 = pneg %p76
        %p545 = pneg %p100
        %p546 = pneg %p97
        %p547 = pneg %p121
        %p548 = pneg %p118
        %p549 = pneg %p142
        %p550 = pneg %p139
        %p551 = pneg %p163
        %p552 = pneg %p160
        %p553 = pneg %p184
        %p554 = pneg %p181
        %p555 = pneg %p205
        %p556 = pneg %p202
        %p557 = pneg %p226
        %p558 = pneg %p223
        %p559 = pneg %p247
        %p560 = pneg %p244
        %p561 = pneg %p268
        %p562 = pneg %p265
        %p563 = pneg %p289
        %p564 = pneg %p286
        %p565 = pneg %p310
        %p566 = pneg %p307
        %p567 = pneg %p331
        %p568 = pneg %p328
        %p569 = pneg %p352
        %p570 = pneg %p349
        %p571 = pneg %p373
        %p572 = pneg %p370
        %p573 = pneg %p394
        %p574 = pneg %p391
        %p575 = pneg %p415
        %p576 = pneg %p412
        %p577 = pneg %p441
        %p578 = pneg %p438
        %s579 = sand.u32 %s428, 1
        %s580 = scalar_lea.sflag [#allocation3], %s579
        %s581 = sand.u32 %s428, 1
        %s582 = smul.addr %s581, 16
        %s583 = scalar_lea.vmem [#allocation2], %s582
        %p584 = scmp.lt.s32.totalorder %s32, 1
        %s585 = scalar_select %p584, %s32, 1
        %s586 = smul.addr %s585, 2
        %s587 = smul.addr %s586, 8
        %s588 = scalar_lea.vmem %s0, %s587
        %p589 = scmp.lt.s32.totalorder %s32, 1
        %s590 = scalar_select %p589, %s32, 1
        %s591 = smul.addr %s590, 2
        %s592 = smul.addr %s591, 8
        %s593 = scalar_lea.vmem %s1, %s592
        %v595 = vld [vmem:[%s588] sm:$0xff]
        %v596 = vld [vmem:[%s588 + $0x8] sm:$0xff]
        %v597 = vld [vmem:[%s593] sm:$0xff]
        %v598 = vld [vmem:[%s593 + $0x8] sm:$0xff]
        %v599 = vadd.f32 %v595, %v597
        %v600 = vadd.f32 %v596, %v598
        %v601 = vpack.c.bf16 %v600, %v599
        %v602 = vpack.c.bf16 %v596, %v595
        %v603 = vld [vmem:[%s2] sm:$0xf]
        %v604 = vld [vmem:[%s2 + $0x4] sm:$0xf]
        %v605 = vld [vmem:[%s2 + $0x8] sm:$0xf]
        %v606 = vld [vmem:[%s2 + $0xc] sm:$0xf]
        %v607 = vld [vmem:[%s5] sm:$0x1]
        %v609 = vperm.slane %v607, 0
        %v615 = vunpack.c.l.b16 %v603
        %v616 = vunpack.c.l.b16 %v604
        %v617 = vunpack.c.l.b16 %v605
        %v618 = vunpack.c.l.b16 %v606
        %v619 = vpack.c.b16 %v616, %v615
        %v620 = vpack.c.b16 %v618, %v617
        %vm623 = vcmask 261120
        %v625 = vsel %vm623, %v601, 0
        %627 = vmatpush.bf16.msra.mxu0 0
        %628 = vmatpush.bf16.msra.mxu0 0
        %629 = vmatpush.bf16.msra.mxu0 0
        %630 = vmatpush.bf16.msra.mxu0 0
        %631 = vmatpush.bf16.msra.mxu0 0
        %632 = vmatpush.bf16.msra.mxu0 0
        %633 = vmatpush.bf16.msra.mxu0 %v620
        %634 = vmatpush.bf16.msra.mxu0 %v619
        %635 = vmatmul.bf16.gmra.mxu0 %v625
        %v636 = vpop.f32.mrf.mxu0
        %v637 = vadd.f32 %v609, %v636
        %v638 = vpop.f32.mrf.mxu0
        %v639 = vadd.f32 %v609, %v638
        %640 = vdwg.mxu0
        %v641 = vld [vmem:[%s3] sm:$0xf]
        %v642 = vld [vmem:[%s3 + $0x4] sm:$0xf]
        %v643 = vld [vmem:[%s3 + $0x8] sm:$0xf]
        %v644 = vld [vmem:[%s3 + $0xc] sm:$0xf]
        %v645 = vld [vmem:[%s6] sm:$0x1]
        %v647 = vperm.slane %v645, 0
        %v653 = vunpack.c.l.b16 %v641
        %v654 = vunpack.c.l.b16 %v642
        %v655 = vunpack.c.l.b16 %v643
        %v656 = vunpack.c.l.b16 %v644
        %v657 = vpack.c.b16 %v654, %v653
        %v658 = vpack.c.b16 %v656, %v655
        %661 = vmatpush.bf16.msra.mxu0 0
        %662 = vmatpush.bf16.msra.mxu0 0
        %663 = vmatpush.bf16.msra.mxu0 0
        %664 = vmatpush.bf16.msra.mxu0 0
        %665 = vmatpush.bf16.msra.mxu0 0
        %666 = vmatpush.bf16.msra.mxu0 0
        %667 = vmatpush.bf16.msra.mxu0 %v658
        %668 = vmatpush.bf16.msra.mxu0 %v657
        %669 = vmatmul.bf16.gmra.mxu0 %v625
        %v670 = vpop.f32.mrf.mxu0
        %v671 = vadd.f32 %v647, %v670
        %v672 = vpop.f32.mrf.mxu0
        %v673 = vadd.f32 %v647, %v672
        %674 = vdwg.mxu0
        %v675 = vld [vmem:[%s4] sm:$0xf]
        %v676 = vld [vmem:[%s4 + $0x4] sm:$0xf]
        %v677 = vld [vmem:[%s4 + $0x8] sm:$0xf]
        %v678 = vld [vmem:[%s4 + $0xc] sm:$0xf]
        %v679 = vld [vmem:[%s7] sm:$0x1]
        %v681 = vperm.slane %v679, 0
        %v687 = vunpack.c.l.b16 %v675
        %v688 = vunpack.c.l.b16 %v676
        %v689 = vunpack.c.l.b16 %v677
        %v690 = vunpack.c.l.b16 %v678
        %v691 = vpack.c.b16 %v688, %v687
        %v692 = vpack.c.b16 %v690, %v689
        %v696 = vsel %vm623, %v602, 0
        %698 = vmatpush.bf16.msra.mxu0 0
        %699 = vmatpush.bf16.msra.mxu0 0
        %700 = vmatpush.bf16.msra.mxu0 0
        %701 = vmatpush.bf16.msra.mxu0 0
        %702 = vmatpush.bf16.msra.mxu0 0
        %703 = vmatpush.bf16.msra.mxu0 0
        %704 = vmatpush.bf16.msra.mxu0 %v692
        %705 = vmatpush.bf16.msra.mxu0 %v691
        %706 = vmatmul.bf16.gmra.mxu0 %v696
        %v707 = vpop.f32.mrf.mxu0
        %v708 = vadd.f32 %v681, %v707
        %v709 = vpop.f32.mrf.mxu0
        %v710 = vadd.f32 %v681, %v709
        %711 = vdwg.mxu0
        %v712 = vpack.c.bf16 %v637, %v637
        %v713 = vpack.c.bf16 %v639, %v639
        %716 = vrot.lane.b32.xlu0 %v712, 120
        %v717 = vpop.permute.xlu0 %716
        %718 = vrot.lane.b32.xlu0 %v713, 120
        %v719 = vpop.permute.xlu0 %718
        %720 = vrot.lane.b32.xlu0 %v712, 112
        %v721 = vpop.permute.xlu0 %720
        %722 = vrot.lane.b32.xlu0 %v713, 112
        %v723 = vpop.permute.xlu0 %722
        %724 = vrot.lane.b32.xlu0 %v712, 104
        %v725 = vpop.permute.xlu0 %724
        %726 = vrot.lane.b32.xlu0 %v713, 104
        %v727 = vpop.permute.xlu0 %726
        %v730 = vpack.i.b16 %v717, %v712
        %v731 = vshrl.u32 %v712, 16
        %v732 = vshrl.u32 %v717, 16
        %v733 = vpack.i.b16 %v732, %v731
        %v736 = vpack.i.b16 %v725, %v721
        %v737 = vshrl.u32 %v721, 16
        %v738 = vshrl.u32 %v725, 16
        %v739 = vpack.i.b16 %v738, %v737
        %v742 = vpack.i.b16 %v719, %v713
        %v743 = vshrl.u32 %v713, 16
        %v744 = vshrl.u32 %v719, 16
        %v745 = vpack.i.b16 %v744, %v743
        %v748 = vpack.i.b16 %v727, %v723
        %v749 = vshrl.u32 %v723, 16
        %v750 = vshrl.u32 %v727, 16
        %v751 = vpack.i.b16 %v750, %v749
        %v754 = vunpack.c.l.s4 1983009808
        %v755 = vunpack.c.0.s8 %v754
        %v756 = vperm.slane %v730, %v755
        %v759 = vunpack.c.l.s4 1983009808
        %v760 = vunpack.c.0.s8 %v759
        %v761 = vperm.slane %v736, %v760
        %v762 = vrot.slane %v761, 4
        %vm763 = vcmask 1047556
        %v764 = vsel %vm763, %v762, %v756
        %v765 = vrot.slane %v756, 4
        %v766 = vsel %vm763, %v761, %v765
        %v768 = vunpack.c.l.s4 1934713408
        %v769 = vunpack.c.0.s8 %v768
        %v770 = vperm.slane %v764, %v769
        %v772 = vunpack.c.l.s4 1934713408
        %v773 = vunpack.c.0.s8 %v772
        %v774 = vperm.slane %v766, %v773
        %v775 = vrot.slane %v770, 4
        %v776 = vsel %vm763, 0, %v775
        %v777 = vrot.slane %v774, 4
        %v778 = vsel %vm763, 0, %v777
        %v781 = vunpack.c.l.s4 1983009808
        %v782 = vunpack.c.0.s8 %v781
        %v783 = vperm.slane %v733, %v782
        %v786 = vunpack.c.l.s4 1983009808
        %v787 = vunpack.c.0.s8 %v786
        %v788 = vperm.slane %v739, %v787
        %v789 = vrot.slane %v788, 4
        %v790 = vsel %vm763, %v789, %v783
        %v791 = vrot.slane %v783, 4
        %v792 = vsel %vm763, %v788, %v791
        %v794 = vunpack.c.l.s4 1934713408
        %v795 = vunpack.c.0.s8 %v794
        %v796 = vperm.slane %v790, %v795
        %v798 = vunpack.c.l.s4 1934713408
        %v799 = vunpack.c.0.s8 %v798
        %v800 = vperm.slane %v792, %v799
        %v801 = vrot.slane %v796, 4
        %v802 = vsel %vm763, 0, %v801
        %v803 = vrot.slane %v800, 4
        %v804 = vsel %vm763, 0, %v803
        %v807 = vunpack.c.l.s4 1983009808
        %v808 = vunpack.c.0.s8 %v807
        %v809 = vperm.slane %v742, %v808
        %v812 = vunpack.c.l.s4 1983009808
        %v813 = vunpack.c.0.s8 %v812
        %v814 = vperm.slane %v748, %v813
        %v815 = vrot.slane %v814, 4
        %v816 = vsel %vm763, %v815, %v809
        %v817 = vrot.slane %v809, 4
        %v818 = vsel %vm763, %v814, %v817
        %v820 = vunpack.c.l.s4 1934713408
        %v821 = vunpack.c.0.s8 %v820
        %v822 = vperm.slane %v816, %v821
        %v824 = vunpack.c.l.s4 1934713408
        %v825 = vunpack.c.0.s8 %v824
        %v826 = vperm.slane %v818, %v825
        %v827 = vrot.slane %v822, 4
        %v828 = vsel %vm763, 0, %v827
        %v829 = vrot.slane %v826, 4
        %v830 = vsel %vm763, 0, %v829
        %v833 = vunpack.c.l.s4 1983009808
        %v834 = vunpack.c.0.s8 %v833
        %v835 = vperm.slane %v745, %v834
        %v838 = vunpack.c.l.s4 1983009808
        %v839 = vunpack.c.0.s8 %v838
        %v840 = vperm.slane %v751, %v839
        %v841 = vrot.slane %v840, 4
        %v842 = vsel %vm763, %v841, %v835
        %v843 = vrot.slane %v835, 4
        %v844 = vsel %vm763, %v840, %v843
        %v846 = vunpack.c.l.s4 1934713408
        %v847 = vunpack.c.0.s8 %v846
        %v848 = vperm.slane %v842, %v847
        %v850 = vunpack.c.l.s4 1934713408
        %v851 = vunpack.c.0.s8 %v850
        %v852 = vperm.slane %v844, %v851
        %v853 = vrot.slane %v848, 4
        %v854 = vsel %vm763, 0, %v853
        %v855 = vrot.slane %v852, 4
        %v856 = vsel %vm763, 0, %v855
        %v857 = vsel %vm763, %v777, %v770
        %v859 = vunpack.c.l.s4 1983009808
        %v860 = vunpack.c.0.s8 %v859
        %v861 = vperm.slane %v857, %v860
        %v862 = vrot.slane %v778, 4
        %v863 = vsel %vm763, %v862, %v776
        %v865 = vunpack.c.l.s4 1983009808
        %v866 = vunpack.c.0.s8 %v865
        %v867 = vperm.slane %v863, %v866
        %v868 = vrot.slane %v867, 4
        %v869 = vsel %vm763, %v868, %v861
        %v871 = vunpack.c.l.s4 1934713408
        %v872 = vunpack.c.0.s8 %v871
        %v873 = vperm.slane %v869, %v872
        %v874 = vrot.slane %v873, 4
        %v875 = vsel %vm763, 0, %v874
        %v876 = vsel %vm763, %v803, %v796
        %v878 = vunpack.c.l.s4 1983009808
        %v879 = vunpack.c.0.s8 %v878
        %v880 = vperm.slane %v876, %v879
        %v881 = vrot.slane %v804, 4
        %v882 = vsel %vm763, %v881, %v802
        %v884 = vunpack.c.l.s4 1983009808
        %v885 = vunpack.c.0.s8 %v884
        %v886 = vperm.slane %v882, %v885
        %v887 = vrot.slane %v886, 4
        %v888 = vsel %vm763, %v887, %v880
        %v890 = vunpack.c.l.s4 1934713408
        %v891 = vunpack.c.0.s8 %v890
        %v892 = vperm.slane %v888, %v891
        %v893 = vrot.slane %v892, 4
        %v894 = vsel %vm763, 0, %v893
        %v895 = vsel %vm763, %v829, %v822
        %v897 = vunpack.c.l.s4 1983009808
        %v898 = vunpack.c.0.s8 %v897
        %v899 = vperm.slane %v895, %v898
        %v900 = vrot.slane %v830, 4
        %v901 = vsel %vm763, %v900, %v828
        %v903 = vunpack.c.l.s4 1983009808
        %v904 = vunpack.c.0.s8 %v903
        %v905 = vperm.slane %v901, %v904
        %v906 = vrot.slane %v905, 4
        %v907 = vsel %vm763, %v906, %v899
        %v909 = vunpack.c.l.s4 1934713408
        %v910 = vunpack.c.0.s8 %v909
        %v911 = vperm.slane %v907, %v910
        %v912 = vrot.slane %v911, 4
        %v913 = vsel %vm763, 0, %v912
        %v914 = vsel %vm763, %v855, %v848
        %v916 = vunpack.c.l.s4 1983009808
        %v917 = vunpack.c.0.s8 %v916
        %v918 = vperm.slane %v914, %v917
        %v919 = vrot.slane %v856, 4
        %v920 = vsel %vm763, %v919, %v854
        %v922 = vunpack.c.l.s4 1983009808
        %v923 = vunpack.c.0.s8 %v922
        %v924 = vperm.slane %v920, %v923
        %v925 = vrot.slane %v924, 4
        %v926 = vsel %vm763, %v925, %v918
        %v928 = vunpack.c.l.s4 1934713408
        %v929 = vunpack.c.0.s8 %v928
        %v930 = vperm.slane %v926, %v929
        %v931 = vrot.slane %v930, 4
        %v932 = vsel %vm763, 0, %v931
        %v935 = vpack.i.b16 %v892, %v873
        %v936 = vshrl.u32 %v873, 16
        %v937 = vshrl.u32 %v892, 16
        %v938 = vpack.i.b16 %v937, %v936
        %v941 = vpack.i.b16 %v894, %v875
        %v942 = vshrl.u32 %v875, 16
        %v943 = vshrl.u32 %v894, 16
        %v944 = vpack.i.b16 %v943, %v942
        %v947 = vpack.i.b16 %v930, %v911
        %v948 = vshrl.u32 %v911, 16
        %v949 = vshrl.u32 %v930, 16
        %v950 = vpack.i.b16 %v949, %v948
        %v953 = vpack.i.b16 %v932, %v913
        %v954 = vshrl.u32 %v913, 16
        %v955 = vshrl.u32 %v932, 16
        %v956 = vpack.i.b16 %v955, %v954
        %v957 = vpack.c.bf16 %v671, %v671
        %v958 = vpack.c.bf16 %v673, %v673
        %961 = vrot.lane.b32.xlu0 %v957, 120
        %v962 = vpop.permute.xlu0 %961
        %963 = vrot.lane.b32.xlu0 %v958, 120
        %v964 = vpop.permute.xlu0 %963
        %965 = vrot.lane.b32.xlu0 %v957, 112
        %v966 = vpop.permute.xlu0 %965
        %967 = vrot.lane.b32.xlu0 %v958, 112
        %v968 = vpop.permute.xlu0 %967
        %969 = vrot.lane.b32.xlu0 %v957, 104
        %v970 = vpop.permute.xlu0 %969
        %971 = vrot.lane.b32.xlu0 %v958, 104
        %v972 = vpop.permute.xlu0 %971
        %v975 = vpack.i.b16 %v962, %v957
        %v976 = vshrl.u32 %v957, 16
        %v977 = vshrl.u32 %v962, 16
        %v978 = vpack.i.b16 %v977, %v976
        %v981 = vpack.i.b16 %v970, %v966
        %v982 = vshrl.u32 %v966, 16
        %v983 = vshrl.u32 %v970, 16
        %v984 = vpack.i.b16 %v983, %v982
        %v987 = vpack.i.b16 %v964, %v958
        %v988 = vshrl.u32 %v958, 16
        %v989 = vshrl.u32 %v964, 16
        %v990 = vpack.i.b16 %v989, %v988
        %v993 = vpack.i.b16 %v972, %v968
        %v994 = vshrl.u32 %v968, 16
        %v995 = vshrl.u32 %v972, 16
        %v996 = vpack.i.b16 %v995, %v994
        %v999 = vunpack.c.l.s4 1983009808
        %v1000 = vunpack.c.0.s8 %v999
        %v1001 = vperm.slane %v975, %v1000
        %v1004 = vunpack.c.l.s4 1983009808
        %v1005 = vunpack.c.0.s8 %v1004
        %v1006 = vperm.slane %v981, %v1005
        %v1007 = vrot.slane %v1006, 4
        %v1008 = vsel %vm763, %v1007, %v1001
        %v1009 = vrot.slane %v1001, 4
        %v1010 = vsel %vm763, %v1006, %v1009
        %v1012 = vunpack.c.l.s4 1934713408
        %v1013 = vunpack.c.0.s8 %v1012
        %v1014 = vperm.slane %v1008, %v1013
        %v1016 = vunpack.c.l.s4 1934713408
        %v1017 = vunpack.c.0.s8 %v1016
        %v1018 = vperm.slane %v1010, %v1017
        %v1019 = vrot.slane %v1014, 4
        %v1020 = vsel %vm763, 0, %v1019
        %v1021 = vrot.slane %v1018, 4
        %v1022 = vsel %vm763, 0, %v1021
        %v1025 = vunpack.c.l.s4 1983009808
        %v1026 = vunpack.c.0.s8 %v1025
        %v1027 = vperm.slane %v978, %v1026
        %v1030 = vunpack.c.l.s4 1983009808
        %v1031 = vunpack.c.0.s8 %v1030
        %v1032 = vperm.slane %v984, %v1031
        %v1033 = vrot.slane %v1032, 4
        %v1034 = vsel %vm763, %v1033, %v1027
        %v1035 = vrot.slane %v1027, 4
        %v1036 = vsel %vm763, %v1032, %v1035
        %v1038 = vunpack.c.l.s4 1934713408
        %v1039 = vunpack.c.0.s8 %v1038
        %v1040 = vperm.slane %v1034, %v1039
        %v1042 = vunpack.c.l.s4 1934713408
        %v1043 = vunpack.c.0.s8 %v1042
        %v1044 = vperm.slane %v1036, %v1043
        %v1045 = vrot.slane %v1040, 4
        %v1046 = vsel %vm763, 0, %v1045
        %v1047 = vrot.slane %v1044, 4
        %v1048 = vsel %vm763, 0, %v1047
        %v1051 = vunpack.c.l.s4 1983009808
        %v1052 = vunpack.c.0.s8 %v1051
        %v1053 = vperm.slane %v987, %v1052
        %v1056 = vunpack.c.l.s4 1983009808
        %v1057 = vunpack.c.0.s8 %v1056
        %v1058 = vperm.slane %v993, %v1057
        %v1059 = vrot.slane %v1058, 4
        %v1060 = vsel %vm763, %v1059, %v1053
        %v1061 = vrot.slane %v1053, 4
        %v1062 = vsel %vm763, %v1058, %v1061
        %v1064 = vunpack.c.l.s4 1934713408
        %v1065 = vunpack.c.0.s8 %v1064
        %v1066 = vperm.slane %v1060, %v1065
        %v1068 = vunpack.c.l.s4 1934713408
        %v1069 = vunpack.c.0.s8 %v1068
        %v1070 = vperm.slane %v1062, %v1069
        %v1071 = vrot.slane %v1066, 4
        %v1072 = vsel %vm763, 0, %v1071
        %v1073 = vrot.slane %v1070, 4
        %v1074 = vsel %vm763, 0, %v1073
        %v1077 = vunpack.c.l.s4 1983009808
        %v1078 = vunpack.c.0.s8 %v1077
        %v1079 = vperm.slane %v990, %v1078
        %v1082 = vunpack.c.l.s4 1983009808
        %v1083 = vunpack.c.0.s8 %v1082
        %v1084 = vperm.slane %v996, %v1083
        %v1085 = vrot.slane %v1084, 4
        %v1086 = vsel %vm763, %v1085, %v1079
        %v1087 = vrot.slane %v1079, 4
        %v1088 = vsel %vm763, %v1084, %v1087
        %v1090 = vunpack.c.l.s4 1934713408
        %v1091 = vunpack.c.0.s8 %v1090
        %v1092 = vperm.slane %v1086, %v1091
        %v1094 = vunpack.c.l.s4 1934713408
        %v1095 = vunpack.c.0.s8 %v1094
        %v1096 = vperm.slane %v1088, %v1095
        %v1097 = vrot.slane %v1092, 4
        %v1098 = vsel %vm763, 0, %v1097
        %v1099 = vrot.slane %v1096, 4
        %v1100 = vsel %vm763, 0, %v1099
        %v1101 = vsel %vm763, %v1021, %v1014
        %v1103 = vunpack.c.l.s4 1983009808
        %v1104 = vunpack.c.0.s8 %v1103
        %v1105 = vperm.slane %v1101, %v1104
        %v1106 = vrot.slane %v1022, 4
        %v1107 = vsel %vm763, %v1106, %v1020
        %v1109 = vunpack.c.l.s4 1983009808
        %v1110 = vunpack.c.0.s8 %v1109
        %v1111 = vperm.slane %v1107, %v1110
        %v1112 = vrot.slane %v1111, 4
        %v1113 = vsel %vm763, %v1112, %v1105
        %v1115 = vunpack.c.l.s4 1934713408
        %v1116 = vunpack.c.0.s8 %v1115
        %v1117 = vperm.slane %v1113, %v1116
        %v1118 = vrot.slane %v1117, 4
        %v1119 = vsel %vm763, 0, %v1118
        %v1120 = vsel %vm763, %v1047, %v1040
        %v1122 = vunpack.c.l.s4 1983009808
        %v1123 = vunpack.c.0.s8 %v1122
        %v1124 = vperm.slane %v1120, %v1123
        %v1125 = vrot.slane %v1048, 4
        %v1126 = vsel %vm763, %v1125, %v1046
        %v1128 = vunpack.c.l.s4 1983009808
        %v1129 = vunpack.c.0.s8 %v1128
        %v1130 = vperm.slane %v1126, %v1129
        %v1131 = vrot.slane %v1130, 4
        %v1132 = vsel %vm763, %v1131, %v1124
        %v1134 = vunpack.c.l.s4 1934713408
        %v1135 = vunpack.c.0.s8 %v1134
        %v1136 = vperm.slane %v1132, %v1135
        %v1137 = vrot.slane %v1136, 4
        %v1138 = vsel %vm763, 0, %v1137
        %v1139 = vsel %vm763, %v1073, %v1066
        %v1141 = vunpack.c.l.s4 1983009808
        %v1142 = vunpack.c.0.s8 %v1141
        %v1143 = vperm.slane %v1139, %v1142
        %v1144 = vrot.slane %v1074, 4
        %v1145 = vsel %vm763, %v1144, %v1072
        %v1147 = vunpack.c.l.s4 1983009808
        %v1148 = vunpack.c.0.s8 %v1147
        %v1149 = vperm.slane %v1145, %v1148
        %v1150 = vrot.slane %v1149, 4
        %v1151 = vsel %vm763, %v1150, %v1143
        %v1153 = vunpack.c.l.s4 1934713408
        %v1154 = vunpack.c.0.s8 %v1153
        %v1155 = vperm.slane %v1151, %v1154
        %v1156 = vrot.slane %v1155, 4
        %v1157 = vsel %vm763, 0, %v1156
        %v1158 = vsel %vm763, %v1099, %v1092
        %v1160 = vunpack.c.l.s4 1983009808
        %v1161 = vunpack.c.0.s8 %v1160
        %v1162 = vperm.slane %v1158, %v1161
        %v1163 = vrot.slane %v1100, 4
        %v1164 = vsel %vm763, %v1163, %v1098
        %v1166 = vunpack.c.l.s4 1983009808
        %v1167 = vunpack.c.0.s8 %v1166
        %v1168 = vperm.slane %v1164, %v1167
        %v1169 = vrot.slane %v1168, 4
        %v1170 = vsel %vm763, %v1169, %v1162
        %v1172 = vunpack.c.l.s4 1934713408
        %v1173 = vunpack.c.0.s8 %v1172
        %v1174 = vperm.slane %v1170, %v1173
        %v1175 = vrot.slane %v1174, 4
        %v1176 = vsel %vm763, 0, %v1175
        %v1179 = vpack.i.b16 %v1136, %v1117
        %v1180 = vshrl.u32 %v1117, 16
        %v1181 = vshrl.u32 %v1136, 16
        %v1182 = vpack.i.b16 %v1181, %v1180
        %v1185 = vpack.i.b16 %v1138, %v1119
        %v1186 = vshrl.u32 %v1119, 16
        %v1187 = vshrl.u32 %v1138, 16
        %v1188 = vpack.i.b16 %v1187, %v1186
        %v1191 = vpack.i.b16 %v1174, %v1155
        %v1192 = vshrl.u32 %v1155, 16
        %v1193 = vshrl.u32 %v1174, 16
        %v1194 = vpack.i.b16 %v1193, %v1192
        %v1197 = vpack.i.b16 %v1176, %v1157
        %v1198 = vshrl.u32 %v1157, 16
        %v1199 = vshrl.u32 %v1176, 16
        %v1200 = vpack.i.b16 %v1199, %v1198
        %v1201 = vpack.c.bf16 %v708, %v708
        %v1202 = vpack.c.bf16 %v710, %v710
        %1205 = vrot.lane.b32.xlu0 %v1201, 120
        %v1206 = vpop.permute.xlu0 %1205
        %1207 = vrot.lane.b32.xlu0 %v1202, 120
        %v1208 = vpop.permute.xlu0 %1207
        %1209 = vrot.lane.b32.xlu0 %v1201, 112
        %v1210 = vpop.permute.xlu0 %1209
        %1211 = vrot.lane.b32.xlu0 %v1202, 112
        %v1212 = vpop.permute.xlu0 %1211
        %1213 = vrot.lane.b32.xlu0 %v1201, 104
        %v1214 = vpop.permute.xlu0 %1213
        %1215 = vrot.lane.b32.xlu0 %v1202, 104
        %v1216 = vpop.permute.xlu0 %1215
        %v1219 = vpack.i.b16 %v1206, %v1201
        %v1220 = vshrl.u32 %v1201, 16
        %v1221 = vshrl.u32 %v1206, 16
        %v1222 = vpack.i.b16 %v1221, %v1220
        %v1225 = vpack.i.b16 %v1214, %v1210
        %v1226 = vshrl.u32 %v1210, 16
        %v1227 = vshrl.u32 %v1214, 16
        %v1228 = vpack.i.b16 %v1227, %v1226
        %v1231 = vpack.i.b16 %v1208, %v1202
        %v1232 = vshrl.u32 %v1202, 16
        %v1233 = vshrl.u32 %v1208, 16
        %v1234 = vpack.i.b16 %v1233, %v1232
        %v1237 = vpack.i.b16 %v1216, %v1212
        %v1238 = vshrl.u32 %v1212, 16
        %v1239 = vshrl.u32 %v1216, 16
        %v1240 = vpack.i.b16 %v1239, %v1238
        %v1243 = vunpack.c.l.s4 1983009808
        %v1244 = vunpack.c.0.s8 %v1243
        %v1245 = vperm.slane %v1219, %v1244
        %v1248 = vunpack.c.l.s4 1983009808
        %v1249 = vunpack.c.0.s8 %v1248
        %v1250 = vperm.slane %v1225, %v1249
        %v1251 = vrot.slane %v1250, 4
        %v1252 = vsel %vm763, %v1251, %v1245
        %v1253 = vrot.slane %v1245, 4
        %v1254 = vsel %vm763, %v1250, %v1253
        %v1256 = vunpack.c.l.s4 1934713408
        %v1257 = vunpack.c.0.s8 %v1256
        %v1258 = vperm.slane %v1252, %v1257
        %v1260 = vunpack.c.l.s4 1934713408
        %v1261 = vunpack.c.0.s8 %v1260
        %v1262 = vperm.slane %v1254, %v1261
        %v1263 = vrot.slane %v1258, 4
        %v1264 = vsel %vm763, 0, %v1263
        %v1265 = vrot.slane %v1262, 4
        %v1266 = vsel %vm763, 0, %v1265
        %v1269 = vunpack.c.l.s4 1983009808
        %v1270 = vunpack.c.0.s8 %v1269
        %v1271 = vperm.slane %v1222, %v1270
        %v1274 = vunpack.c.l.s4 1983009808
        %v1275 = vunpack.c.0.s8 %v1274
        %v1276 = vperm.slane %v1228, %v1275
        %v1277 = vrot.slane %v1276, 4
        %v1278 = vsel %vm763, %v1277, %v1271
        %v1279 = vrot.slane %v1271, 4
        %v1280 = vsel %vm763, %v1276, %v1279
        %v1282 = vunpack.c.l.s4 1934713408
        %v1283 = vunpack.c.0.s8 %v1282
        %v1284 = vperm.slane %v1278, %v1283
        %v1286 = vunpack.c.l.s4 1934713408
        %v1287 = vunpack.c.0.s8 %v1286
        %v1288 = vperm.slane %v1280, %v1287
        %v1289 = vrot.slane %v1284, 4
        %v1290 = vsel %vm763, 0, %v1289
        %v1291 = vrot.slane %v1288, 4
        %v1292 = vsel %vm763, 0, %v1291
        %v1295 = vunpack.c.l.s4 1983009808
        %v1296 = vunpack.c.0.s8 %v1295
        %v1297 = vperm.slane %v1231, %v1296
        %v1300 = vunpack.c.l.s4 1983009808
        %v1301 = vunpack.c.0.s8 %v1300
        %v1302 = vperm.slane %v1237, %v1301
        %v1303 = vrot.slane %v1302, 4
        %v1304 = vsel %vm763, %v1303, %v1297
        %v1305 = vrot.slane %v1297, 4
        %v1306 = vsel %vm763, %v1302, %v1305
        %v1308 = vunpack.c.l.s4 1934713408
        %v1309 = vunpack.c.0.s8 %v1308
        %v1310 = vperm.slane %v1304, %v1309
        %v1312 = vunpack.c.l.s4 1934713408
        %v1313 = vunpack.c.0.s8 %v1312
        %v1314 = vperm.slane %v1306, %v1313
        %v1315 = vrot.slane %v1310, 4
        %v1316 = vsel %vm763, 0, %v1315
        %v1317 = vrot.slane %v1314, 4
        %v1318 = vsel %vm763, 0, %v1317
        %v1321 = vunpack.c.l.s4 1983009808
        %v1322 = vunpack.c.0.s8 %v1321
        %v1323 = vperm.slane %v1234, %v1322
        %v1326 = vunpack.c.l.s4 1983009808
        %v1327 = vunpack.c.0.s8 %v1326
        %v1328 = vperm.slane %v1240, %v1327
        %v1329 = vrot.slane %v1328, 4
        %v1330 = vsel %vm763, %v1329, %v1323
        %v1331 = vrot.slane %v1323, 4
        %v1332 = vsel %vm763, %v1328, %v1331
        %v1334 = vunpack.c.l.s4 1934713408
        %v1335 = vunpack.c.0.s8 %v1334
        %v1336 = vperm.slane %v1330, %v1335
        %v1338 = vunpack.c.l.s4 1934713408
        %v1339 = vunpack.c.0.s8 %v1338
        %v1340 = vperm.slane %v1332, %v1339
        %v1341 = vrot.slane %v1336, 4
        %v1342 = vsel %vm763, 0, %v1341
        %v1343 = vrot.slane %v1340, 4
        %v1344 = vsel %vm763, 0, %v1343
        %v1345 = vsel %vm763, %v1265, %v1258
        %v1347 = vunpack.c.l.s4 1983009808
        %v1348 = vunpack.c.0.s8 %v1347
        %v1349 = vperm.slane %v1345, %v1348
        %v1350 = vrot.slane %v1266, 4
        %v1351 = vsel %vm763, %v1350, %v1264
        %v1353 = vunpack.c.l.s4 1983009808
        %v1354 = vunpack.c.0.s8 %v1353
        %v1355 = vperm.slane %v1351, %v1354
        %v1356 = vrot.slane %v1355, 4
        %v1357 = vsel %vm763, %v1356, %v1349
        %v1359 = vunpack.c.l.s4 1934713408
        %v1360 = vunpack.c.0.s8 %v1359
        %v1361 = vperm.slane %v1357, %v1360
        %v1362 = vrot.slane %v1361, 4
        %v1363 = vsel %vm763, 0, %v1362
        %v1364 = vsel %vm763, %v1291, %v1284
        %v1366 = vunpack.c.l.s4 1983009808
        %v1367 = vunpack.c.0.s8 %v1366
        %v1368 = vperm.slane %v1364, %v1367
        %v1369 = vrot.slane %v1292, 4
        %v1370 = vsel %vm763, %v1369, %v1290
        %v1372 = vunpack.c.l.s4 1983009808
        %v1373 = vunpack.c.0.s8 %v1372
        %v1374 = vperm.slane %v1370, %v1373
        %v1375 = vrot.slane %v1374, 4
        %v1376 = vsel %vm763, %v1375, %v1368
        %v1378 = vunpack.c.l.s4 1934713408
        %v1379 = vunpack.c.0.s8 %v1378
        %v1380 = vperm.slane %v1376, %v1379
        %v1381 = vrot.slane %v1380, 4
        %v1382 = vsel %vm763, 0, %v1381
        %v1383 = vsel %vm763, %v1317, %v1310
        %v1385 = vunpack.c.l.s4 1983009808
        %v1386 = vunpack.c.0.s8 %v1385
        %v1387 = vperm.slane %v1383, %v1386
        %v1388 = vrot.slane %v1318, 4
        %v1389 = vsel %vm763, %v1388, %v1316
        %v1391 = vunpack.c.l.s4 1983009808
        %v1392 = vunpack.c.0.s8 %v1391
        %v1393 = vperm.slane %v1389, %v1392
        %v1394 = vrot.slane %v1393, 4
        %v1395 = vsel %vm763, %v1394, %v1387
        %v1397 = vunpack.c.l.s4 1934713408
        %v1398 = vunpack.c.0.s8 %v1397
        %v1399 = vperm.slane %v1395, %v1398
        %v1400 = vrot.slane %v1399, 4
        %v1401 = vsel %vm763, 0, %v1400
        %v1402 = vsel %vm763, %v1343, %v1336
        %v1404 = vunpack.c.l.s4 1983009808
        %v1405 = vunpack.c.0.s8 %v1404
        %v1406 = vperm.slane %v1402, %v1405
        %v1407 = vrot.slane %v1344, 4
        %v1408 = vsel %vm763, %v1407, %v1342
        %v1410 = vunpack.c.l.s4 1983009808
        %v1411 = vunpack.c.0.s8 %v1410
        %v1412 = vperm.slane %v1408, %v1411
        %v1413 = vrot.slane %v1412, 4
        %v1414 = vsel %vm763, %v1413, %v1406
        %v1416 = vunpack.c.l.s4 1934713408
        %v1417 = vunpack.c.0.s8 %v1416
        %v1418 = vperm.slane %v1414, %v1417
        %v1419 = vrot.slane %v1418, 4
        %v1420 = vsel %vm763, 0, %v1419
        %v1423 = vpack.i.b16 %v1380, %v1361
        %v1424 = vshrl.u32 %v1361, 16
        %v1425 = vshrl.u32 %v1380, 16
        %v1426 = vpack.i.b16 %v1425, %v1424
        %v1429 = vpack.i.b16 %v1382, %v1363
        %v1430 = vshrl.u32 %v1363, 16
        %v1431 = vshrl.u32 %v1382, 16
        %v1432 = vpack.i.b16 %v1431, %v1430
        %v1435 = vpack.i.b16 %v1418, %v1399
        %v1436 = vshrl.u32 %v1399, 16
        %v1437 = vshrl.u32 %v1418, 16
        %v1438 = vpack.i.b16 %v1437, %v1436
        %v1441 = vpack.i.b16 %v1420, %v1401
        %v1442 = vshrl.u32 %v1401, 16
        %v1443 = vshrl.u32 %v1420, 16
        %v1444 = vpack.i.b16 %v1443, %v1442
        %v1445 = vunpack.c.l.b16 %v935
        %v1446 = vunpack.c.l.b16 %v947
        %v1447 = vpack.c.b16 %v1446, %v1445
        %v1448 = vunpack.c.l.b16 %v1179
        %v1449 = vunpack.c.l.b16 %v1191
        %v1450 = vpack.c.b16 %v1449, %v1448
        %vm1451 = vcmask 64512
        %v1453 = vsel %vm1451, %v1447, 0
        %v1456 = vsel %vm1451, %v1450, 0
        %1458 = vmatpush.bf16.xpose.msra.mxu0 0
        %1459 = vmatpush.bf16.xpose.msra.mxu0 0
        %1460 = vmatpush.bf16.xpose.msra.mxu0 0
        %1461 = vmatpush.bf16.xpose.msra.mxu0 0
        %1462 = vmatpush.bf16.xpose.msra.mxu0 0
        %1463 = vmatpush.bf16.xpose.msra.mxu0 0
        %1464 = vmatpush.bf16.xpose.msra.mxu0 0
        %1465 = vmatpush.bf16.xpose.msra.mxu0 %v1456
        %1466 = vmatmul.bf16.gmra.mxu0 %v1453
        %v1467 = vpop.f32.mrf.mxu0
        %v1468 = vadd.f32 0.0, %v1467
        %v1469 = vpop.f32.mrf.mxu0
        %v1470 = vadd.f32 0.0, %v1469
        %1471 = vdwg.mxu0
        %v1472 = vunpack.c.l.b16 %v938
        %v1473 = vunpack.c.l.b16 %v950
        %v1474 = vpack.c.b16 %v1473, %v1472
        %v1475 = vunpack.c.l.b16 %v1182
        %v1476 = vunpack.c.l.b16 %v1194
        %v1477 = vpack.c.b16 %v1476, %v1475
        %v1479 = vsel %vm1451, %v1474, 0
        %v1482 = vsel %vm1451, %v1477, 0
        %1484 = vmatpush.bf16.xpose.msra.mxu0 0
        %1485 = vmatpush.bf16.xpose.msra.mxu0 0
        %1486 = vmatpush.bf16.xpose.msra.mxu0 0
        %1487 = vmatpush.bf16.xpose.msra.mxu0 0
        %1488 = vmatpush.bf16.xpose.msra.mxu0 0
        %1489 = vmatpush.bf16.xpose.msra.mxu0 0
        %1490 = vmatpush.bf16.xpose.msra.mxu0 0
        %1491 = vmatpush.bf16.xpose.msra.mxu0 %v1482
        %1492 = vmatmul.bf16.gmra.mxu0 %v1479
        %v1493 = vpop.f32.mrf.mxu0
        %v1494 = vadd.f32 0.0, %v1493
        %v1495 = vpop.f32.mrf.mxu0
        %v1496 = vadd.f32 0.0, %v1495
        %1497 = vdwg.mxu0
        %v1498 = vunpack.c.l.b16 %v941
        %v1499 = vunpack.c.l.b16 %v953
        %v1500 = vpack.c.b16 %v1499, %v1498
        %v1501 = vunpack.c.l.b16 %v1185
        %v1502 = vunpack.c.l.b16 %v1197
        %v1503 = vpack.c.b16 %v1502, %v1501
        %v1505 = vsel %vm1451, %v1500, 0
        %v1508 = vsel %vm1451, %v1503, 0
        %1510 = vmatpush.bf16.xpose.msra.mxu0 0
        %1511 = vmatpush.bf16.xpose.msra.mxu0 0
        %1512 = vmatpush.bf16.xpose.msra.mxu0 0
        %1513 = vmatpush.bf16.xpose.msra.mxu0 0
        %1514 = vmatpush.bf16.xpose.msra.mxu0 0
        %1515 = vmatpush.bf16.xpose.msra.mxu0 0
        %1516 = vmatpush.bf16.xpose.msra.mxu0 0
        %1517 = vmatpush.bf16.xpose.msra.mxu0 %v1508
        %1518 = vmatmul.bf16.gmra.mxu0 %v1505
        %v1519 = vpop.f32.mrf.mxu0
        %v1520 = vadd.f32 0.0, %v1519
        %v1521 = vpop.f32.mrf.mxu0
        %v1522 = vadd.f32 0.0, %v1521
        %1523 = vdwg.mxu0
        %v1524 = vunpack.c.l.b16 %v944
        %v1525 = vunpack.c.l.b16 %v956
        %v1526 = vpack.c.b16 %v1525, %v1524
        %v1527 = vunpack.c.l.b16 %v1188
        %v1528 = vunpack.c.l.b16 %v1200
        %v1529 = vpack.c.b16 %v1528, %v1527
        %v1531 = vsel %vm1451, %v1526, 0
        %v1534 = vsel %vm1451, %v1529, 0
        %1536 = vmatpush.bf16.xpose.msra.mxu0 0
        %1537 = vmatpush.bf16.xpose.msra.mxu0 0
        %1538 = vmatpush.bf16.xpose.msra.mxu0 0
        %1539 = vmatpush.bf16.xpose.msra.mxu0 0
        %1540 = vmatpush.bf16.xpose.msra.mxu0 0
        %1541 = vmatpush.bf16.xpose.msra.mxu0 0
        %1542 = vmatpush.bf16.xpose.msra.mxu0 0
        %1543 = vmatpush.bf16.xpose.msra.mxu0 %v1534
        %1544 = vmatmul.bf16.gmra.mxu0 %v1531
        %v1545 = vpop.f32.mrf.mxu0
        %v1546 = vadd.f32 0.0, %v1545
        %v1547 = vpop.f32.mrf.mxu0
        %v1548 = vadd.f32 0.0, %v1547
        %1549 = vdwg.mxu0
        %v1550 = vmul.f32 %v1468, 0.35355338
        %v1551 = vmul.f32 %v1470, 0.35355338
        %v1552 = vmul.f32 %v1494, 0.35355338
        %v1553 = vmul.f32 %v1496, 0.35355338
        %v1554 = vmul.f32 %v1520, 0.35355338
        %v1555 = vmul.f32 %v1522, 0.35355338
        %v1556 = vmul.f32 %v1546, 0.35355338
        %v1557 = vmul.f32 %v1548, 0.35355338
        %vm1558 = vcmask 130048
        %v1559 = vsel %vm1558, %v1550, -inf
        %1560 = vmax.xlane.f32.xlu0 %v1559
        %v1561 = vpop.xlane.xlu0 %1560
        %v1562 = vsel %vm1558, %v1551, -inf
        %1563 = vmax.xlane.f32.xlu0 %v1562
        %v1564 = vpop.xlane.xlu0 %1563
        %v1565 = vsel %vm1558, %v1552, -inf
        %1566 = vmax.xlane.f32.xlu0 %v1565
        %v1567 = vpop.xlane.xlu0 %1566
        %v1568 = vsel %vm1558, %v1553, -inf
        %1569 = vmax.xlane.f32.xlu0 %v1568
        %v1570 = vpop.xlane.xlu0 %1569
        %v1571 = vsel %vm1558, %v1554, -inf
        %1572 = vmax.xlane.f32.xlu0 %v1571
        %v1573 = vpop.xlane.xlu0 %1572
        %v1574 = vsel %vm1558, %v1555, -inf
        %1575 = vmax.xlane.f32.xlu0 %v1574
        %v1576 = vpop.xlane.xlu0 %1575
        %v1577 = vsel %vm1558, %v1556, -inf
        %1578 = vmax.xlane.f32.xlu0 %v1577
        %v1579 = vpop.xlane.xlu0 %1578
        %v1580 = vsel %vm1558, %v1557, -inf
        %1581 = vmax.xlane.f32.xlu0 %v1580
        %v1582 = vpop.xlane.xlu0 %1581
        %v1583 = vsub.f32 %v1550, %v1561
        %v1584 = vsub.f32 %v1551, %v1564
        %v1585 = vsub.f32 %v1552, %v1567
        %v1586 = vsub.f32 %v1553, %v1570
        %v1587 = vsub.f32 %v1554, %v1573
        %v1588 = vsub.f32 %v1555, %v1576
        %v1589 = vsub.f32 %v1556, %v1579
        %v1590 = vsub.f32 %v1557, %v1582
        %v1591 = vmul.f32 %v1583, 1.442695
        %v1592 = vpow.pop %v1591
        %v1593 = vmul.f32 %v1584, 1.442695
        %v1594 = vpow.pop %v1593
        %v1595 = vmul.f32 %v1585, 1.442695
        %v1596 = vpow.pop %v1595
        %v1597 = vmul.f32 %v1586, 1.442695
        %v1598 = vpow.pop %v1597
        %v1599 = vmul.f32 %v1587, 1.442695
        %v1600 = vpow.pop %v1599
        %v1601 = vmul.f32 %v1588, 1.442695
        %v1602 = vpow.pop %v1601
        %v1603 = vmul.f32 %v1589, 1.442695
        %v1604 = vpow.pop %v1603
        %v1605 = vmul.f32 %v1590, 1.442695
        %v1606 = vpow.pop %v1605
        %v1607 = vsel %vm1558, %v1592, 0.0
        %1608 = vadd.xlane.f32.xlu0 %v1607
        %v1609 = vpop.xlane.xlu0 %1608
        %v1610 = vsel %vm1558, %v1594, 0.0
        %1611 = vadd.xlane.f32.xlu0 %v1610
        %v1612 = vpop.xlane.xlu0 %1611
        %v1613 = vsel %vm1558, %v1596, 0.0
        %1614 = vadd.xlane.f32.xlu0 %v1613
        %v1615 = vpop.xlane.xlu0 %1614
        %v1616 = vsel %vm1558, %v1598, 0.0
        %1617 = vadd.xlane.f32.xlu0 %v1616
        %v1618 = vpop.xlane.xlu0 %1617
        %v1619 = vsel %vm1558, %v1600, 0.0
        %1620 = vadd.xlane.f32.xlu0 %v1619
        %v1621 = vpop.xlane.xlu0 %1620
        %v1622 = vsel %vm1558, %v1602, 0.0
        %1623 = vadd.xlane.f32.xlu0 %v1622
        %v1624 = vpop.xlane.xlu0 %1623
        %v1625 = vsel %vm1558, %v1604, 0.0
        %1626 = vadd.xlane.f32.xlu0 %v1625
        %v1627 = vpop.xlane.xlu0 %1626
        %v1628 = vsel %vm1558, %v1606, 0.0
        %1629 = vadd.xlane.f32.xlu0 %v1628
        %v1630 = vpop.xlane.xlu0 %1629
        %v1631 = vrcp.pop %v1609
        %v1632 = vrcp.pop %v1612
        %v1633 = vrcp.pop %v1615
        %v1634 = vrcp.pop %v1618
        %v1635 = vrcp.pop %v1621
        %v1636 = vrcp.pop %v1624
        %v1637 = vrcp.pop %v1627
        %v1638 = vrcp.pop %v1630
        %v1639 = vmul.f32 %v1592, %v1631
        %v1640 = vmul.f32 %v1594, %v1632
        %v1641 = vmul.f32 %v1596, %v1633
        %v1642 = vmul.f32 %v1598, %v1634
        %v1643 = vmul.f32 %v1600, %v1635
        %v1644 = vmul.f32 %v1602, %v1636
        %v1645 = vmul.f32 %v1604, %v1637
        %v1646 = vmul.f32 %v1606, %v1638
        %v1647 = vpack.c.bf16 %v1639, %v1639
        %v1648 = vpack.c.bf16 %v1640, %v1640
        %v1649 = vpack.c.bf16 %v1641, %v1641
        %v1650 = vpack.c.bf16 %v1642, %v1642
        %v1651 = vpack.c.bf16 %v1643, %v1643
        %v1652 = vpack.c.bf16 %v1644, %v1644
        %v1653 = vpack.c.bf16 %v1645, %v1645
        %v1654 = vpack.c.bf16 %v1646, %v1646
        %v1657 = vunpack.c.l.b16 %v1647
        %v1658 = vunpack.c.l.b16 %v1648
        %v1659 = vpack.c.b16 %v1658, %v1657
        %v1660 = vunpack.c.l.b16 %v1423
        %v1661 = vunpack.c.l.b16 %v1435
        %v1662 = vpack.c.b16 %v1661, %v1660
        %v1665 = vsel %vm1558, %v1659, 0
        %1667 = vmatpush.bf16.msra.mxu0 0
        %1668 = vmatpush.bf16.msra.mxu0 0
        %1669 = vmatpush.bf16.msra.mxu0 0
        %1670 = vmatpush.bf16.msra.mxu0 0
        %1671 = vmatpush.bf16.msra.mxu0 0
        %1672 = vmatpush.bf16.msra.mxu0 0
        %1673 = vmatpush.bf16.msra.mxu0 0
        %1674 = vmatpush.bf16.msra.mxu0 %v1662
        %1675 = vmatmul.bf16.gmra.mxu0 %v1665
        %v1676 = vpop.f32.mrf.mxu0
        %v1677 = vadd.f32 0.0, %v1676
        %v1678 = vpop.f32.mrf.mxu0
        %v1679 = vadd.f32 0.0, %v1678
        %1680 = vdwg.mxu0
        %v1683 = vunpack.c.l.b16 %v1649
        %v1684 = vunpack.c.l.b16 %v1650
        %v1685 = vpack.c.b16 %v1684, %v1683
        %v1686 = vunpack.c.l.b16 %v1426
        %v1687 = vunpack.c.l.b16 %v1438
        %v1688 = vpack.c.b16 %v1687, %v1686
        %v1691 = vsel %vm1558, %v1685, 0
        %1693 = vmatpush.bf16.msra.mxu0 0
        %1694 = vmatpush.bf16.msra.mxu0 0
        %1695 = vmatpush.bf16.msra.mxu0 0
        %1696 = vmatpush.bf16.msra.mxu0 0
        %1697 = vmatpush.bf16.msra.mxu0 0
        %1698 = vmatpush.bf16.msra.mxu0 0
        %1699 = vmatpush.bf16.msra.mxu0 0
        %1700 = vmatpush.bf16.msra.mxu0 %v1688
        %1701 = vmatmul.bf16.gmra.mxu0 %v1691
        %v1702 = vpop.f32.mrf.mxu0
        %v1703 = vadd.f32 0.0, %v1702
        %v1704 = vpop.f32.mrf.mxu0
        %v1705 = vadd.f32 0.0, %v1704
        %1706 = vdwg.mxu0
        %v1709 = vunpack.c.l.b16 %v1651
        %v1710 = vunpack.c.l.b16 %v1652
        %v1711 = vpack.c.b16 %v1710, %v1709
        %v1712 = vunpack.c.l.b16 %v1429
        %v1713 = vunpack.c.l.b16 %v1441
        %v1714 = vpack.c.b16 %v1713, %v1712
        %v1717 = vsel %vm1558, %v1711, 0
        %1719 = vmatpush.bf16.msra.mxu0 0
        %1720 = vmatpush.bf16.msra.mxu0 0
        %1721 = vmatpush.bf16.msra.mxu0 0
        %1722 = vmatpush.bf16.msra.mxu0 0
        %1723 = vmatpush.bf16.msra.mxu0 0
        %1724 = vmatpush.bf16.msra.mxu0 0
        %1725 = vmatpush.bf16.msra.mxu0 0
        %1726 = vmatpush.bf16.msra.mxu0 %v1714
        %1727 = vmatmul.bf16.gmra.mxu0 %v1717
        %v1728 = vpop.f32.mrf.mxu0
        %v1729 = vadd.f32 0.0, %v1728
        %v1730 = vpop.f32.mrf.mxu0
        %v1731 = vadd.f32 0.0, %v1730
        %1732 = vdwg.mxu0
        %v1735 = vunpack.c.l.b16 %v1653
        %v1736 = vunpack.c.l.b16 %v1654
        %v1737 = vpack.c.b16 %v1736, %v1735
        %v1738 = vunpack.c.l.b16 %v1432
        %v1739 = vunpack.c.l.b16 %v1444
        %v1740 = vpack.c.b16 %v1739, %v1738
        %v1743 = vsel %vm1558, %v1737, 0
        %1745 = vmatpush.bf16.msra.mxu0 0
        %1746 = vmatpush.bf16.msra.mxu0 0
        %1747 = vmatpush.bf16.msra.mxu0 0
        %1748 = vmatpush.bf16.msra.mxu0 0
        %1749 = vmatpush.bf16.msra.mxu0 0
        %1750 = vmatpush.bf16.msra.mxu0 0
        %1751 = vmatpush.bf16.msra.mxu0 0
        %1752 = vmatpush.bf16.msra.mxu0 %v1740
        %1753 = vmatmul.bf16.gmra.mxu0 %v1743
        %v1754 = vpop.f32.mrf.mxu0
        %v1755 = vadd.f32 0.0, %v1754
        %v1756 = vpop.f32.mrf.mxu0
        %v1757 = vadd.f32 0.0, %v1756
        %1758 = vdwg.mxu0
        %v1759 = vrot.slane %v1729, 4
        %vm1760 = vcmask 1047556
        %v1761 = vsel %vm1760, %v1759, %v1677
        %v1762 = vrot.slane %v1677, 4
        %v1763 = vsel %vm1760, %v1729, %v1762
        %v1765 = vunpack.c.l.s4 1983009808
        %v1766 = vunpack.c.0.s8 %v1765
        %v1767 = vperm.slane %v1761, %v1766
        %v1769 = vunpack.c.l.s4 1983009808
        %v1770 = vunpack.c.0.s8 %v1769
        %v1771 = vperm.slane %v1763, %v1770
        %v1772 = vrot.slane %v1755, 4
        %v1773 = vsel %vm1760, %v1772, %v1703
        %v1774 = vrot.slane %v1703, 4
        %v1775 = vsel %vm1760, %v1755, %v1774
        %v1777 = vunpack.c.l.s4 1983009808
        %v1778 = vunpack.c.0.s8 %v1777
        %v1779 = vperm.slane %v1773, %v1778
        %v1781 = vunpack.c.l.s4 1983009808
        %v1782 = vunpack.c.0.s8 %v1781
        %v1783 = vperm.slane %v1775, %v1782
        %v1784 = vrot.slane %v1779, 4
        %v1785 = vsel %vm1760, %v1784, %v1767
        %v1786 = vrot.slane %v1767, 4
        %v1787 = vsel %vm1760, %v1779, %v1786
        %v1789 = vunpack.c.l.s4 1934713408
        %v1790 = vunpack.c.0.s8 %v1789
        %v1791 = vperm.slane %v1785, %v1790
        %v1793 = vunpack.c.l.s4 1934713408
        %v1794 = vunpack.c.0.s8 %v1793
        %v1795 = vperm.slane %v1787, %v1794
        %v1796 = vrot.slane %v1783, 4
        %v1797 = vsel %vm1760, %v1796, %v1771
        %v1798 = vrot.slane %v1771, 4
        %v1799 = vsel %vm1760, %v1783, %v1798
        %v1801 = vunpack.c.l.s4 1934713408
        %v1802 = vunpack.c.0.s8 %v1801
        %v1803 = vperm.slane %v1797, %v1802
        %v1805 = vunpack.c.l.s4 1934713408
        %v1806 = vunpack.c.0.s8 %v1805
        %v1807 = vperm.slane %v1799, %v1806
        %v1808 = vrot.slane %v1791, 4
        %v1809 = vsel %vm1760, 0.0, %v1808
        %v1810 = vrot.slane %v1795, 4
        %v1811 = vsel %vm1760, 0.0, %v1810
        %v1812 = vrot.slane %v1803, 4
        %v1813 = vsel %vm1760, 0.0, %v1812
        %v1814 = vrot.slane %v1807, 4
        %v1815 = vsel %vm1760, 0.0, %v1814
        %v1816 = vrot.slane %v1731, 4
        %v1817 = vsel %vm1760, %v1816, %v1679
        %v1818 = vrot.slane %v1679, 4
        %v1819 = vsel %vm1760, %v1731, %v1818
        %v1821 = vunpack.c.l.s4 1983009808
        %v1822 = vunpack.c.0.s8 %v1821
        %v1823 = vperm.slane %v1817, %v1822
        %v1825 = vunpack.c.l.s4 1983009808
        %v1826 = vunpack.c.0.s8 %v1825
        %v1827 = vperm.slane %v1819, %v1826
        %v1828 = vrot.slane %v1757, 4
        %v1829 = vsel %vm1760, %v1828, %v1705
        %v1830 = vrot.slane %v1705, 4
        %v1831 = vsel %vm1760, %v1757, %v1830
        %v1833 = vunpack.c.l.s4 1983009808
        %v1834 = vunpack.c.0.s8 %v1833
        %v1835 = vperm.slane %v1829, %v1834
        %v1837 = vunpack.c.l.s4 1983009808
        %v1838 = vunpack.c.0.s8 %v1837
        %v1839 = vperm.slane %v1831, %v1838
        %v1840 = vrot.slane %v1835, 4
        %v1841 = vsel %vm1760, %v1840, %v1823
        %v1842 = vrot.slane %v1823, 4
        %v1843 = vsel %vm1760, %v1835, %v1842
        %v1845 = vunpack.c.l.s4 1934713408
        %v1846 = vunpack.c.0.s8 %v1845
        %v1847 = vperm.slane %v1841, %v1846
        %v1849 = vunpack.c.l.s4 1934713408
        %v1850 = vunpack.c.0.s8 %v1849
        %v1851 = vperm.slane %v1843, %v1850
        %v1852 = vrot.slane %v1839, 4
        %v1853 = vsel %vm1760, %v1852, %v1827
        %v1854 = vrot.slane %v1827, 4
        %v1855 = vsel %vm1760, %v1839, %v1854
        %v1857 = vunpack.c.l.s4 1934713408
        %v1858 = vunpack.c.0.s8 %v1857
        %v1859 = vperm.slane %v1853, %v1858
        %v1861 = vunpack.c.l.s4 1934713408
        %v1862 = vunpack.c.0.s8 %v1861
        %v1863 = vperm.slane %v1855, %v1862
        %v1864 = vrot.slane %v1847, 4
        %v1865 = vsel %vm1760, 0.0, %v1864
        %v1866 = vrot.slane %v1851, 4
        %v1867 = vsel %vm1760, 0.0, %v1866
        %v1868 = vrot.slane %v1859, 4
        %v1869 = vsel %vm1760, 0.0, %v1868
        %v1870 = vrot.slane %v1863, 4
        %v1871 = vsel %vm1760, 0.0, %v1870
        %v1872 = vsel %vm1760, %v1810, %v1791
        %v1874 = vunpack.c.l.s4 1983009808
        %v1875 = vunpack.c.0.s8 %v1874
        %v1876 = vperm.slane %v1872, %v1875
        %v1877 = vrot.slane %v1811, 4
        %v1878 = vsel %vm1760, %v1877, %v1809
        %v1880 = vunpack.c.l.s4 1983009808
        %v1881 = vunpack.c.0.s8 %v1880
        %v1882 = vperm.slane %v1878, %v1881
        %v1883 = vsel %vm1760, %v1814, %v1803
        %v1885 = vunpack.c.l.s4 1983009808
        %v1886 = vunpack.c.0.s8 %v1885
        %v1887 = vperm.slane %v1883, %v1886
        %v1888 = vrot.slane %v1815, 4
        %v1889 = vsel %vm1760, %v1888, %v1813
        %v1891 = vunpack.c.l.s4 1983009808
        %v1892 = vunpack.c.0.s8 %v1891
        %v1893 = vperm.slane %v1889, %v1892
        %v1894 = vrot.slane %v1882, 4
        %v1895 = vsel %vm1760, %v1894, %v1876
        %v1896 = vrot.slane %v1876, 4
        %v1897 = vsel %vm1760, %v1882, %v1896
        %v1899 = vunpack.c.l.s4 1934713408
        %v1900 = vunpack.c.0.s8 %v1899
        %v1901 = vperm.slane %v1895, %v1900
        %v1903 = vunpack.c.l.s4 1934713408
        %v1904 = vunpack.c.0.s8 %v1903
        %v1905 = vperm.slane %v1897, %v1904
        %v1906 = vrot.slane %v1893, 4
        %v1907 = vsel %vm1760, %v1906, %v1887
        %v1908 = vrot.slane %v1887, 4
        %v1909 = vsel %vm1760, %v1893, %v1908
        %v1911 = vunpack.c.l.s4 1934713408
        %v1912 = vunpack.c.0.s8 %v1911
        %v1913 = vperm.slane %v1907, %v1912
        %v1915 = vunpack.c.l.s4 1934713408
        %v1916 = vunpack.c.0.s8 %v1915
        %v1917 = vperm.slane %v1909, %v1916
        %v1918 = vrot.slane %v1913, 4
        %v1919 = vsel %vm1760, %v1918, %v1901
        %v1920 = vrot.slane %v1901, 4
        %v1921 = vsel %vm1760, %v1913, %v1920
        %v1922 = vrot.slane %v1917, 4
        %v1923 = vsel %vm1760, %v1922, %v1905
        %v1924 = vrot.slane %v1905, 4
        %v1925 = vsel %vm1760, %v1917, %v1924
        %v1926 = vsel %vm1760, %v1866, %v1847
        %v1928 = vunpack.c.l.s4 1983009808
        %v1929 = vunpack.c.0.s8 %v1928
        %v1930 = vperm.slane %v1926, %v1929
        %v1931 = vrot.slane %v1867, 4
        %v1932 = vsel %vm1760, %v1931, %v1865
        %v1934 = vunpack.c.l.s4 1983009808
        %v1935 = vunpack.c.0.s8 %v1934
        %v1936 = vperm.slane %v1932, %v1935
        %v1937 = vsel %vm1760, %v1870, %v1859
        %v1939 = vunpack.c.l.s4 1983009808
        %v1940 = vunpack.c.0.s8 %v1939
        %v1941 = vperm.slane %v1937, %v1940
        %v1942 = vrot.slane %v1871, 4
        %v1943 = vsel %vm1760, %v1942, %v1869
        %v1945 = vunpack.c.l.s4 1983009808
        %v1946 = vunpack.c.0.s8 %v1945
        %v1947 = vperm.slane %v1943, %v1946
        %v1948 = vrot.slane %v1936, 4
        %v1949 = vsel %vm1760, %v1948, %v1930
        %v1950 = vrot.slane %v1930, 4
        %v1951 = vsel %vm1760, %v1936, %v1950
        %v1953 = vunpack.c.l.s4 1934713408
        %v1954 = vunpack.c.0.s8 %v1953
        %v1955 = vperm.slane %v1949, %v1954
        %v1957 = vunpack.c.l.s4 1934713408
        %v1958 = vunpack.c.0.s8 %v1957
        %v1959 = vperm.slane %v1951, %v1958
        %v1960 = vrot.slane %v1947, 4
        %v1961 = vsel %vm1760, %v1960, %v1941
        %v1962 = vrot.slane %v1941, 4
        %v1963 = vsel %vm1760, %v1947, %v1962
        %v1965 = vunpack.c.l.s4 1934713408
        %v1966 = vunpack.c.0.s8 %v1965
        %v1967 = vperm.slane %v1961, %v1966
        %v1969 = vunpack.c.l.s4 1934713408
        %v1970 = vunpack.c.0.s8 %v1969
        %v1971 = vperm.slane %v1963, %v1970
        %v1972 = vrot.slane %v1967, 4
        %v1973 = vsel %vm1760, %v1972, %v1955
        %v1974 = vrot.slane %v1955, 4
        %v1975 = vsel %vm1760, %v1967, %v1974
        %v1976 = vrot.slane %v1971, 4
        %v1977 = vsel %vm1760, %v1976, %v1959
        %v1978 = vrot.slane %v1959, 4
        %v1979 = vsel %vm1760, %v1971, %v1978
        %1982 = vrot.lane.b32.xlu0 %v1921, 8
        %v1983 = vpop.permute.xlu0 %1982
        %1984 = vrot.lane.b32.xlu0 %v1975, 8
        %v1985 = vpop.permute.xlu0 %1984
        %1990 = vrot.lane.b32.xlu0 %v1923, 16
        %v1991 = vpop.permute.xlu0 %1990
        %1992 = vrot.lane.b32.xlu0 %v1977, 16
        %v1993 = vpop.permute.xlu0 %1992
        %1998 = vrot.lane.b32.xlu0 %v1925, 24
        %v1999 = vpop.permute.xlu0 %1998
        %2000 = vrot.lane.b32.xlu0 %v1979, 24
        %v2001 = vpop.permute.xlu0 %2000
        %v2004 = vsel %vm1451, %v1919, %v1983
        %v2005 = vsel %vm1451, %v1973, %v1985
        %v2006 = vsel %vm1558, %v2004, %v1991
        %v2007 = vsel %vm1558, %v2005, %v1993
        %vm2008 = vcmask 195584
        %v2009 = vsel %vm2008, %v2006, %v1999
        %v2010 = vsel %vm2008, %v2007, %v2001
        %v2011 = vpack.c.bf16 %v2010, %v2009
        %v2012 = vld [vmem:[%s8] sm:$0xf]
        %v2013 = vld [vmem:[%s8 + $0x4] sm:$0xf]
        %v2014 = vld [vmem:[%s8 + $0x8] sm:$0xf]
        %v2015 = vld [vmem:[%s8 + $0xc] sm:$0xf]
        %v2016 = vld [vmem:[%s9] sm:$0x1]
        %v2018 = vperm.slane %v2016, 0
        %v2024 = vunpack.c.l.b16 %v2012
        %v2025 = vunpack.c.l.b16 %v2013
        %v2026 = vunpack.c.l.b16 %v2014
        %v2027 = vunpack.c.l.b16 %v2015
        %v2028 = vpack.c.b16 %v2025, %v2024
        %v2029 = vpack.c.b16 %v2027, %v2026
        %v2033 = vsel %vm623, %v2011, 0
        %2035 = vmatpush.bf16.msra.mxu0 0
        %2036 = vmatpush.bf16.msra.mxu0 0
        %2037 = vmatpush.bf16.msra.mxu0 0
        %2038 = vmatpush.bf16.msra.mxu0 0
        %2039 = vmatpush.bf16.msra.mxu0 0
        %2040 = vmatpush.bf16.msra.mxu0 0
        %2041 = vmatpush.bf16.msra.mxu0 %v2029
        %2042 = vmatpush.bf16.msra.mxu0 %v2028
        %2043 = vmatmul.bf16.gmra.mxu0 %v2033
        %v2044 = vpop.f32.mrf.mxu0
        %v2045 = vadd.f32 %v2018, %v2044
        %v2046 = vpop.f32.mrf.mxu0
        %v2047 = vadd.f32 %v2018, %v2046
        %2048 = vdwg.mxu0
        %v2049 = vadd.f32 %v2045, %v595
        %v2050 = vadd.f32 %v2047, %v596
        %v2051 = vsel %vm623, %v2049, 0.0
        %2052 = vadd.xlane.f32.xlu0 %v2051
        %v2053 = vpop.xlane.xlu0 %2052
        %v2054 = vsel %vm623, %v2050, 0.0
        %2055 = vadd.xlane.f32.xlu0 %v2054
        %v2056 = vpop.xlane.xlu0 %2055
        %v2057 = vrcp.pop 32.0
        %v2058 = vmul.f32 32.0, %v2057
        %v2059 = vsub.f32 1.0, %v2058
        %v2060 = vmul.f32 %v2057, %v2059
        %v2061 = vadd.f32 %v2057, %v2060
        %vm2062 = vweird.f32 %v2057
        %v2063 = vsel %vm2062, %v2057, %v2061
        %v2064 = vmul.f32 %v2053, %v2063
        %v2065 = vmul.f32 %v2056, %v2063
        %v2066 = vsub.f32 %v2049, %v2064
        %v2067 = vsub.f32 %v2050, %v2065
        %v2068 = vmul.f32 %v2066, %v2066
        %v2069 = vmul.f32 %v2067, %v2067
        %v2070 = vsel %vm623, %v2068, 0.0
        %2071 = vadd.xlane.f32.xlu0 %v2070
        %v2072 = vpop.xlane.xlu0 %2071
        %v2073 = vsel %vm623, %v2069, 0.0
        %2074 = vadd.xlane.f32.xlu0 %v2073
        %v2075 = vpop.xlane.xlu0 %2074
        %v2076 = vmul.f32 %v2072, %v2063
        %v2077 = vmul.f32 %v2075, %v2063
        %v2078 = vadd.f32 %v2076, 1e-05
        %v2079 = vadd.f32 %v2077, 1e-05
        %v2080 = vrsqrt.pop %v2078
        %v2081 = vmul.f32 %v2080, %v2078
        %v2082 = vmul.f32 %v2081, %v2080
        %v2083 = vmul.f32 0.5, %v2082
        %v2084 = vsub.f32 1.5, %v2083
        %v2085 = vmul.f32 %v2080, %v2084
        %vm2086 = vweird.f32 %v2078
        %vm2087 = vweird.f32 %v2080
        %vm2088 = vmor %vm2086, %vm2087
        %v2089 = vsel %vm2088, %v2080, %v2085
        %v2090 = vrsqrt.pop %v2079
        %v2091 = vmul.f32 %v2090, %v2079
        %v2092 = vmul.f32 %v2091, %v2090
        %v2093 = vmul.f32 0.5, %v2092
        %v2094 = vsub.f32 1.5, %v2093
        %v2095 = vmul.f32 %v2090, %v2094
        %vm2096 = vweird.f32 %v2079
        %vm2097 = vweird.f32 %v2090
        %vm2098 = vmor %vm2096, %vm2097
        %v2099 = vsel %vm2098, %v2090, %v2095
        %v2100 = vmul.f32 %v2066, %v2089
        %v2101 = vmul.f32 %v2067, %v2099
        %v2102 = vld [vmem:[%s10] sm:$0x1]
        %v2104 = vperm.slane %v2102, 0
        %v2106 = vmul.f32 %v2100, %v2104
        %v2107 = vmul.f32 %v2101, %v2104
        %v2108 = vld [vmem:[%s11] sm:$0x1]
        %v2110 = vperm.slane %v2108, 0
        %v2112 = vadd.f32 %v2106, %v2110
        %v2113 = vadd.f32 %v2107, %v2110
        %v2114 = vpack.c.bf16 %v2113, %v2112
        %v2115 = vld [vmem:[%s12] sm:$0xff]
        %v2116 = vld [vmem:[%s12 + $0x8] sm:$0xff]
        %v2117 = vld [vmem:[%s12 + $0x10] sm:$0xff]
        %v2118 = vld [vmem:[%s12 + $0x18] sm:$0xff]
        %v2119 = vld [vmem:[%s13] sm:$0x3]
        %v2121 = vperm.slane %v2119, 0
        %v2122 = vperm.slane %v2119, 1
        %v2129 = vunpack.c.l.b16 %v2115
        %v2130 = vunpack.c.h.b16 %v2115
        %v2131 = vunpack.c.l.b16 %v2116
        %v2132 = vunpack.c.h.b16 %v2116
        %v2133 = vunpack.c.l.b16 %v2117
        %v2134 = vunpack.c.h.b16 %v2117
        %v2135 = vunpack.c.l.b16 %v2118
        %v2136 = vunpack.c.h.b16 %v2118
        %v2137 = vpack.c.b16 %v2131, %v2129
        %v2138 = vpack.c.b16 %v2132, %v2130
        %v2139 = vpack.c.b16 %v2135, %v2133
        %v2140 = vpack.c.b16 %v2136, %v2134
        %v2146 = vsel %vm623, %v2114, 0
        %2148 = vmatpush.bf16.msra.mxu0 0
        %2149 = vmatpush.bf16.msra.mxu0 0
        %2150 = vmatpush.bf16.msra.mxu0 0
        %2151 = vmatpush.bf16.msra.mxu0 0
        %2152 = vmatpush.bf16.msra.mxu0 0
        %2153 = vmatpush.bf16.msra.mxu0 0
        %2154 = vmatpush.bf16.msra.mxu0 %v2139
        %2155 = vmatpush.bf16.msra.mxu0 %v2137
        %2156 = vmatmul.bf16.gmra.mxu0 %v2146
        %v2157 = vpop.f32.mrf.mxu0
        %v2158 = vadd.f32 %v2121, %v2157
        %v2159 = vpop.f32.mrf.mxu0
        %v2160 = vadd.f32 %v2121, %v2159
        %2161 = vdwg.mxu0
        %2162 = vmatpush.bf16.msra.mxu0 0
        %2163 = vmatpush.bf16.msra.mxu0 0
        %2164 = vmatpush.bf16.msra.mxu0 0
        %2165 = vmatpush.bf16.msra.mxu0 0
        %2166 = vmatpush.bf16.msra.mxu0 0
        %2167 = vmatpush.bf16.msra.mxu0 0
        %2168 = vmatpush.bf16.msra.mxu0 %v2140
        %2169 = vmatpush.bf16.msra.mxu0 %v2138
        %2170 = vmatmul.bf16.gmra.mxu0 %v2146
        %v2171 = vpop.f32.mrf.mxu0
        %v2172 = vadd.f32 %v2122, %v2171
        %v2173 = vpop.f32.mrf.mxu0
        %v2174 = vadd.f32 %v2122, %v2173
        %2175 = vdwg.mxu0
        %v2176 = vmax.f32 %v2158, 0.0
        %v2177 = vmax.f32 %v2172, 0.0
        %v2178 = vmax.f32 %v2160, 0.0
        %v2179 = vmax.f32 %v2174, 0.0
        %v2180 = vpack.c.bf16 %v2178, %v2176
        %v2181 = vpack.c.bf16 %v2179, %v2177
        %v2182 = vld [vmem:[%s14] sm:$0xf]
        %v2183 = vld [vmem:[%s14 + $0x4] sm:$0xf]
        %v2184 = vld [vmem:[%s14 + $0x8] sm:$0xf]
        %v2185 = vld [vmem:[%s14 + $0xc] sm:$0xf]
        %v2186 = vld [vmem:[%s14 + $0x10] sm:$0xf]
        %v2187 = vld [vmem:[%s14 + $0x14] sm:$0xf]
        %v2188 = vld [vmem:[%s14 + $0x18] sm:$0xf]
        %v2189 = vld [vmem:[%s14 + $0x1c] sm:$0xf]
        %v2190 = vld [vmem:[%s14 + $0x20] sm:$0xf]
        %v2191 = vld [vmem:[%s14 + $0x24] sm:$0xf]
        %v2192 = vld [vmem:[%s14 + $0x28] sm:$0xf]
        %v2193 = vld [vmem:[%s14 + $0x2c] sm:$0xf]
        %v2194 = vld [vmem:[%s14 + $0x30] sm:$0xf]
        %v2195 = vld [vmem:[%s14 + $0x34] sm:$0xf]
        %v2196 = vld [vmem:[%s14 + $0x38] sm:$0xf]
        %v2197 = vld [vmem:[%s14 + $0x3c] sm:$0xf]
        %v2198 = vld [vmem:[%s14 + $0x40] sm:$0xf]
        %v2199 = vld [vmem:[%s14 + $0x44] sm:$0xf]
        %v2200 = vld [vmem:[%s14 + $0x48] sm:$0xf]
        %v2201 = vld [vmem:[%s14 + $0x4c] sm:$0xf]
        %v2202 = vld [vmem:[%s14 + $0x50] sm:$0xf]
        %v2203 = vld [vmem:[%s14 + $0x54] sm:$0xf]
        %v2204 = vld [vmem:[%s14 + $0x58] sm:$0xf]
        %v2205 = vld [vmem:[%s14 + $0x5c] sm:$0xf]
        %v2206 = vld [vmem:[%s14 + $0x60] sm:$0xf]
        %v2207 = vld [vmem:[%s14 + $0x64] sm:$0xf]
        %v2208 = vld [vmem:[%s14 + $0x68] sm:$0xf]
        %v2209 = vld [vmem:[%s14 + $0x6c] sm:$0xf]
        %v2210 = vld [vmem:[%s14 + $0x70] sm:$0xf]
        %v2211 = vld [vmem:[%s14 + $0x74] sm:$0xf]
        %v2212 = vld [vmem:[%s14 + $0x78] sm:$0xf]
        %v2213 = vld [vmem:[%s14 + $0x7c] sm:$0xf]
        %v2214 = vld [vmem:[%s15] sm:$0x1]
        %v2216 = vperm.slane %v2214, 0
        %v2250 = vunpack.c.l.b16 %v2182
        %v2251 = vunpack.c.l.b16 %v2183
        %v2252 = vunpack.c.l.b16 %v2184
        %v2253 = vunpack.c.l.b16 %v2185
        %v2254 = vunpack.c.l.b16 %v2186
        %v2255 = vunpack.c.l.b16 %v2187
        %v2256 = vunpack.c.l.b16 %v2188
        %v2257 = vunpack.c.l.b16 %v2189
        %v2258 = vunpack.c.l.b16 %v2190
        %v2259 = vunpack.c.l.b16 %v2191
        %v2260 = vunpack.c.l.b16 %v2192
        %v2261 = vunpack.c.l.b16 %v2193
        %v2262 = vunpack.c.l.b16 %v2194
        %v2263 = vunpack.c.l.b16 %v2195
        %v2264 = vunpack.c.l.b16 %v2196
        %v2265 = vunpack.c.l.b16 %v2197
        %v2266 = vunpack.c.l.b16 %v2198
        %v2267 = vunpack.c.l.b16 %v2199
        %v2268 = vunpack.c.l.b16 %v2200
        %v2269 = vunpack.c.l.b16 %v2201
        %v2270 = vunpack.c.l.b16 %v2202
        %v2271 = vunpack.c.l.b16 %v2203
        %v2272 = vunpack.c.l.b16 %v2204
        %v2273 = vunpack.c.l.b16 %v2205
        %v2274 = vunpack.c.l.b16 %v2206
        %v2275 = vunpack.c.l.b16 %v2207
        %v2276 = vunpack.c.l.b16 %v2208
        %v2277 = vunpack.c.l.b16 %v2209
        %v2278 = vunpack.c.l.b16 %v2210
        %v2279 = vunpack.c.l.b16 %v2211
        %v2280 = vunpack.c.l.b16 %v2212
        %v2281 = vunpack.c.l.b16 %v2213
        %v2282 = vpack.c.b16 %v2251, %v2250
        %v2283 = vpack.c.b16 %v2253, %v2252
        %v2284 = vpack.c.b16 %v2255, %v2254
        %v2285 = vpack.c.b16 %v2257, %v2256
        %v2286 = vpack.c.b16 %v2259, %v2258
        %v2287 = vpack.c.b16 %v2261, %v2260
        %v2288 = vpack.c.b16 %v2263, %v2262
        %v2289 = vpack.c.b16 %v2265, %v2264
        %v2290 = vpack.c.b16 %v2267, %v2266
        %v2291 = vpack.c.b16 %v2269, %v2268
        %v2292 = vpack.c.b16 %v2271, %v2270
        %v2293 = vpack.c.b16 %v2273, %v2272
        %v2294 = vpack.c.b16 %v2275, %v2274
        %v2295 = vpack.c.b16 %v2277, %v2276
        %v2296 = vpack.c.b16 %v2279, %v2278
        %v2297 = vpack.c.b16 %v2281, %v2280
        %2314 = vmatpush.bf16.msra.mxu0 %v2289
        %2315 = vmatpush.bf16.msra.mxu0 %v2288
        %2316 = vmatpush.bf16.msra.mxu0 %v2287
        %2317 = vmatpush.bf16.msra.mxu0 %v2286
        %2318 = vmatpush.bf16.msra.mxu0 %v2285
        %2319 = vmatpush.bf16.msra.mxu0 %v2284
        %2320 = vmatpush.bf16.msra.mxu0 %v2283
        %2321 = vmatpush.bf16.msra.mxu0 %v2282
        %2322 = vmatmul.bf16.gmra.mxu0 %v2180
        %v2323 = vpop.f32.mrf.mxu0
        %v2324 = vadd.f32 %v2216, %v2323
        %v2325 = vpop.f32.mrf.mxu0
        %v2326 = vadd.f32 %v2216, %v2325
        %2327 = vdwg.mxu0
        %2328 = vmatpush.bf16.msra.mxu0 %v2297
        %2329 = vmatpush.bf16.msra.mxu0 %v2296
        %2330 = vmatpush.bf16.msra.mxu0 %v2295
        %2331 = vmatpush.bf16.msra.mxu0 %v2294
        %2332 = vmatpush.bf16.msra.mxu0 %v2293
        %2333 = vmatpush.bf16.msra.mxu0 %v2292
        %2334 = vmatpush.bf16.msra.mxu0 %v2291
        %2335 = vmatpush.bf16.msra.mxu0 %v2290
        %2336 = vmatmul.bf16.gmra.mxu0 %v2181
        %v2337 = vpop.f32.mrf.mxu0
        %v2338 = vadd.f32 %v2324, %v2337
        %v2339 = vpop.f32.mrf.mxu0
        %v2340 = vadd.f32 %v2326, %v2339
        %2341 = vdwg.mxu0
        %v2342 = vadd.f32 %v2112, %v2338
        %v2343 = vadd.f32 %v2113, %v2340
        %v2344 = vsel %vm623, %v2342, 0.0
        %2345 = vadd.xlane.f32.xlu0 %v2344
        %v2346 = vpop.xlane.xlu0 %2345
        %v2347 = vsel %vm623, %v2343, 0.0
        %2348 = vadd.xlane.f32.xlu0 %v2347
        %v2349 = vpop.xlane.xlu0 %2348
        %v2350 = vmul.f32 %v2346, %v2063
        %v2351 = vmul.f32 %v2349, %v2063
        %v2352 = vsub.f32 %v2342, %v2350
        %v2353 = vsub.f32 %v2343, %v2351
        %v2354 = vmul.f32 %v2352, %v2352
        %v2355 = vmul.f32 %v2353, %v2353
        %v2356 = vsel %vm623, %v2354, 0.0
        %2357 = vadd.xlane.f32.xlu0 %v2356
        %v2358 = vpop.xlane.xlu0 %2357
        %v2359 = vsel %vm623, %v2355, 0.0
        %2360 = vadd.xlane.f32.xlu0 %v2359
        %v2361 = vpop.xlane.xlu0 %2360
        %v2362 = vmul.f32 %v2358, %v2063
        %v2363 = vmul.f32 %v2361, %v2063
        %v2364 = vadd.f32 %v2362, 1e-05
        %v2365 = vadd.f32 %v2363, 1e-05
        %v2366 = vrsqrt.pop %v2364
        %v2367 = vmul.f32 %v2366, %v2364
        %v2368 = vmul.f32 %v2367, %v2366
        %v2369 = vmul.f32 0.5, %v2368
        %v2370 = vsub.f32 1.5, %v2369
        %v2371 = vmul.f32 %v2366, %v2370
        %vm2372 = vweird.f32 %v2364
        %vm2373 = vweird.f32 %v2366
        %vm2374 = vmor %vm2372, %vm2373
        %v2375 = vsel %vm2374, %v2366, %v2371
        %v2376 = vrsqrt.pop %v2365
        %v2377 = vmul.f32 %v2376, %v2365
        %v2378 = vmul.f32 %v2377, %v2376
        %v2379 = vmul.f32 0.5, %v2378
        %v2380 = vsub.f32 1.5, %v2379
        %v2381 = vmul.f32 %v2376, %v2380
        %vm2382 = vweird.f32 %v2365
        %vm2383 = vweird.f32 %v2376
        %vm2384 = vmor %vm2382, %vm2383
        %v2385 = vsel %vm2384, %v2376, %v2381
        %v2386 = vmul.f32 %v2352, %v2375
        %v2387 = vmul.f32 %v2353, %v2385
        %v2388 = vld [vmem:[%s16] sm:$0x1]
        %v2390 = vperm.slane %v2388, 0
        %v2392 = vmul.f32 %v2386, %v2390
        %v2393 = vmul.f32 %v2387, %v2390
        %v2394 = vld [vmem:[%s17] sm:$0x1]
        %v2396 = vperm.slane %v2394, 0
        %v2398 = vadd.f32 %v2392, %v2396
        %v2399 = vadd.f32 %v2393, %v2396
        %2400 = vst.msk [vmem:[%s583] sm:$0xff] %vm623, %v2398
        %2401 = vst.msk [vmem:[%s583 + $0x8] sm:$0xff] %vm623, %v2399
        %s2402 = sand.u32 %s428, 1
        %s2403 = scalar_lea.sflag [#allocation3], %s2402
        %s2404 = sand.u32 %s428, 1
        %s2405 = smul.addr %s2404, 16
        %s2406 = scalar_lea.vmem [#allocation2], %s2405
        // Predicated region
        $region93: #{transformer_encoder.3} parent=91 // pred_check
          %p2407 = pneg %p438
        $region94: #{transformer_encoder.3} parent=91 // pred_check_branch
          %2409 = sbr.rel (%p2407) target = $region96
        $region95: #{transformer_encoder.3} parent=91 // pred_region
          %2411 = vsyncadd %s2403, 0
          %s2412 = smul.addr %s32, 2
          %s2413 = smul.addr %s2412, 8
          %s2414 = scalar_lea.hbm %s18, %s2413
          %s2415 = sshll.u32 %s2406, 4
          %s2416 = int_to_ptr.vmem [resolvable:$true] %s2415
          %s2417 = sshll.u32 %s2414, 4
          %s2418 = int_to_ptr.hbm [resolvable:$true] %s2417
          %2423 = dma.vmem_to_hbm [thread:$0]  %s2416, 256, %s2418, %s2403, 128, 128, 8
        $region96: #{transformer_encoder.3} parent=91 // pred_fallthru
          _
      $region92: #{transformer_encoder.3} parent=5 // pred_fallthru
        _
      %p2424 = scmp.le.s32.totalorder 2, %s27
      // Predicated region
      $region97: #{transformer_encoder.3} parent=5 // pred_check
        %p2425 = pneg %p2424
      $region98: #{transformer_encoder.3} parent=5 // pred_check_branch
        %2427 = sbr.rel (%p2425) target = $region100
      $region99: #{transformer_encoder.3} parent=5 // pred_region
        %s2428 = ssub.s32 %s27, 2
        // Predicated region
        $region101: #{transformer_encoder.3} parent=99 // pred_check
          %p2429 = pneg %p444
        $region102: #{transformer_encoder.3} parent=99 // pred_check_branch
          %2431 = sbr.rel (%p2429) target = $region104
        $region103: #{transformer_encoder.3} parent=99 // pred_region
          %s2432 = sand.u32 %s429, 1
          %s2433 = scalar_lea.sflag [#allocation3], %s2432
          %s2434 = sand.u32 %s429, 1
          %s2435 = smul.addr %s2434, 16
          %s2436 = scalar_lea.vmem [#allocation2], %s2435
          %2438 = dma.done %s2433, 256
        $region104: #{transformer_encoder.3} parent=99 // pred_fallthru
          _
      $region100: #{transformer_encoder.3} parent=5 // pred_fallthru
        _
    $region6: #{transformer_encoder.3} parent=1 // loop_footer
      %s31 = sadd.s32 1, %s27
    $region7: #{transformer_encoder.3} parent=1 // loop_footer_branch
      %26 = sbr.rel target = $region3
    $region8: #{transformer_encoder.3} parent=1 // loop_exit
      _
    %2439 = vsyncpa [#allocation3], 1
    %s2440 = scalar_lea.sflag [#allocation3], 1
    %2441 = vsyncpa %s2440, 1

// kernel: transformer_encoder.2
$region0: #{transformer_encoder.2}
  #allocation0 [shape = 'u32[]', space=smem, size = 0x4, offset = 0x4, fixed_abs, tag = 'smem constant byte address 0x4 - core index']
  #allocation1 [shape = 'u32[72,128]{1,0:T(1,128)}', space=vmem, size = 0x9000, scoped, tag = 'internal scratch']
  %s0 = inlined_call_operand.vmem [shape: f32[2,16,32], index: 0, kind: input, shape index: {}]
  %s1 = inlined_call_operand.vmem [shape: f32[2,16,32], index: 1, kind: input, shape index: {}]
  %s2 = inlined_call_operand.vmem [shape: bf16[32,32], index: 2, kind: input, shape index: {}]
  %s3 = inlined_call_operand.vmem [shape: bf16[32,32], index: 3, kind: input, shape index: {}]
  %s4 = inlined_call_operand.hbm [shape: bf16[32,32], index: 4, kind: input, shape index: {}]
  %s5 = inlined_call_operand.vmem [shape: f32[1,32], index: 5, kind: input, shape index: {}]
  %s6 = inlined_call_operand.hbm [shape: f32[1,32], index: 6, kind: input, shape index: {}]
  %s7 = inlined_call_operand.vmem [shape: f32[1,32], index: 7, kind: input, shape index: {}]
  %s8 = inlined_call_operand.hbm [shape: bf16[32,32], index: 8, kind: input, shape index: {}]
  %s9 = inlined_call_operand.vmem [shape: f32[1,32], index: 9, kind: input, shape index: {}]
  %s10 = inlined_call_operand.vmem [shape: f32[1,32], index: 10, kind: input, shape index: {}]
  %s11 = inlined_call_operand.vmem [shape: f32[1,32], index: 11, kind: input, shape index: {}]
  %s12 = inlined_call_operand.vmem [shape: bf16[32,256], index: 12, kind: input, shape index: {}]
  %s13 = inlined_call_operand.hbm [shape: f32[1,256], index: 13, kind: input, shape index: {}]
  %s14 = inlined_call_operand.vmem [shape: bf16[256,32], index: 14, kind: input, shape index: {}]
  %s15 = inlined_call_operand.hbm [shape: f32[1,32], index: 15, kind: input, shape index: {}]
  %s16 = inlined_call_operand.vmem [shape: f32[1,32], index: 16, kind: input, shape index: {}]
  %s17 = inlined_call_operand.vmem [shape: f32[1,32], index: 17, kind: input, shape index: {}]
  %s18 = inlined_call_operand.vmem [shape: f32[2,16,32], index: 18, kind: output, shape index: {}]
  %s19 = sld [smem:[#allocation0]]
  $region125: #{transformer_encoder.2} parent=0
    _
  %s21 = ssub.s32 1, %s19
  %s22 = scalar_select 0, %s21, %s19
  $region1: #{transformer_encoder.2} parent=0
    #allocation2 [shape = 'u8[8192]{0}', space=vmem, size = 0x2000, scoped, tag = 'input window, operand 4, single buffered']
    #allocation3 [shape = 's32[2]{0}', space=sflag, size = 0x8, scoped, tag = 'scoped memory for transformer_encoder.2']
    #allocation4 [shape = 'u8[512]{0}', space=vmem, size = 0x400, scoped, tag = 'input window, operand 6, single buffered']
    #allocation5 [shape = 's32[1]{0}', space=sflag, size = 0x4, scoped, tag = 'scoped memory for transformer_encoder.2']
    #allocation6 [shape = 'u8[8192]{0}', space=vmem, size = 0x2000, scoped, tag = 'input window, operand 8, single buffered']
    #allocation7 [shape = 'u8[1024]{0}', space=vmem, size = 0x400, scoped, tag = 'input window, operand 13, single buffered']
    #allocation8 [shape = 's32[1]{0}', space=sflag, size = 0x4, scoped, tag = 'scoped memory for transformer_encoder.2']
    #allocation9 [shape = 'u8[512]{0}', space=vmem, size = 0x400, scoped, tag = 'input window, operand 15, single buffered']
    %23 = vsyncpa [#allocation3], 0
    %24 = vsyncpa [#allocation5], 0
    %25 = vsyncpa [#allocation8], 0
    loop: start=0, step=1, limit=4
    $region2: #{transformer_encoder.2} parent=1 // loop_pre_header
      _
    $region3: #{transformer_encoder.2} parent=1 // loop_header
      %s27 = sphi 0, %s31
      %p28 = scmp.ge.s32.totalorder %s27, 4
      %s37 = sphi 0, %s39
      %s40 = sphi 0, %s37
      %s41 = sphi 0, %s40
      %s57 = sphi 0, %s41
      %s63 = sphi 0, %s65
      %s66 = sphi 0, %s63
      %s67 = sphi 0, %s66
      %s83 = sphi 0, %s67
      %s87 = sphi 0, %s87
      %s89 = sphi 0, %s87
      %s90 = sphi 0, %s89
      %s104 = sphi 0, %s90
      %s108 = sphi 0, %s108
      %s110 = sphi 0, %s108
      %s111 = sphi 0, %s110
      %s125 = sphi 0, %s111
      %s129 = sphi 0, %s129
      %s131 = sphi 0, %s129
      %s132 = sphi 0, %s131
      %s146 = sphi 0, %s132
      %s150 = sphi 0, %s150
      %s152 = sphi 0, %s150
      %s153 = sphi 0, %s152
      %s167 = sphi 0, %s153
      %s171 = sphi 0, %s171
      %s173 = sphi 0, %s171
      %s174 = sphi 0, %s173
      %s188 = sphi 0, %s174
      %s192 = sphi 0, %s192
      %s194 = sphi 0, %s192
      %s195 = sphi 0, %s194
      %s209 = sphi 0, %s195
      %s213 = sphi 0, %s213
      %s215 = sphi 0, %s213
      %s216 = sphi 0, %s215
      %s230 = sphi 0, %s216
      %s234 = sphi 0, %s234
      %s236 = sphi 0, %s234
      %s237 = sphi 0, %s236
      %s251 = sphi 0, %s237
      %s255 = sphi 0, %s255
      %s257 = sphi 0, %s255
      %s258 = sphi 0, %s257
      %s272 = sphi 0, %s258
      %s276 = sphi 0, %s276
      %s278 = sphi 0, %s276
      %s279 = sphi 0, %s278
      %s293 = sphi 0, %s279
      %s297 = sphi 0, %s297
      %s299 = sphi 0, %s297
      %s300 = sphi 0, %s299
      %s314 = sphi 0, %s300
      %s318 = sphi 0, %s318
      %s320 = sphi 0, %s318
      %s321 = sphi 0, %s320
      %s335 = sphi 0, %s321
      %s339 = sphi 0, %s339
      %s341 = sphi 0, %s339
      %s342 = sphi 0, %s341
      %s356 = sphi 0, %s342
      %s360 = sphi 0, %s360
      %s362 = sphi 0, %s360
      %s363 = sphi 0, %s362
      %s377 = sphi 0, %s363
      %s381 = sphi 0, %s381
      %s383 = sphi 0, %s381
      %s384 = sphi 0, %s383
      %s398 = sphi 0, %s384
      %s402 = sphi 0, %s402
      %s404 = sphi 0, %s402
      %s405 = sphi 0, %s404
      %s419 = sphi 0, %s405
      %s425 = sphi 0, %s427
      %s428 = sphi 0, %s425
      %s429 = sphi 0, %s428
      %s445 = sphi 0, %s429
    $region4: #{transformer_encoder.2} parent=1 // loop_header_branch
      %30 = sbr.rel (%p28) target = $region8
    $region5: #{transformer_encoder.2} parent=1 // loop_body
      %s32 = ssub.s32 %s27, 1
      %s33 = ssub.s32 %s27, 2
      %s34 = sadd.s32 %s27, 1
      %s35 = ssub.s32 %s27, %s34
      %p36 = scmp.eq.s32.totalorder %s35, 0
      %s38 = sadd.s32 %s37, 1
      %s39 = scalar_select %p36, %s37, %s38
      %p42 = pneg %p36
      %p43 = scmp.eq.s32.totalorder %s27, 1
      %p44 = por %p42, %p43
      %p45 = scmp.ne.s32.totalorder %s37, %s40
      %p46 = scmp.eq.s32.totalorder %s27, 0
      %p47 = por %p45, %p46
      %p48 = scmp.ne.s32.totalorder %s37, %s40
      %p49 = scmp.eq.s32.totalorder %s32, 1
      %p50 = por %p48, %p49
      %p51 = scmp.ne.s32.totalorder %s40, %s41
      %p52 = scmp.eq.s32.totalorder %s32, 0
      %p53 = por %p51, %p52
      %p54 = scmp.ne.s32.totalorder %s40, %s41
      %p55 = scmp.eq.s32.totalorder %s33, 1
      %p56 = por %p54, %p55
      %p58 = scmp.ne.s32.totalorder %s41, %s57
      %p59 = scmp.eq.s32.totalorder %s33, 0
      %p60 = por %p58, %p59
      %s61 = ssub.s32 %s27, %s34
      %p62 = scmp.eq.s32.totalorder %s61, 0
      %s64 = sadd.s32 %s63, 1
      %s65 = scalar_select %p62, %s63, %s64
      %p68 = pneg %p62
      %p69 = scmp.eq.s32.totalorder %s27, 1
      %p70 = por %p68, %p69
      %p71 = scmp.ne.s32.totalorder %s63, %s66
      %p72 = scmp.eq.s32.totalorder %s27, 0
      %p73 = por %p71, %p72
      %p74 = scmp.ne.s32.totalorder %s63, %s66
      %p75 = scmp.eq.s32.totalorder %s32, 1
      %p76 = por %p74, %p75
      %p77 = scmp.ne.s32.totalorder %s66, %s67
      %p78 = scmp.eq.s32.totalorder %s32, 0
      %p79 = por %p77, %p78
      %p80 = scmp.ne.s32.totalorder %s66, %s67
      %p81 = scmp.eq.s32.totalorder %s33, 1
      %p82 = por %p80, %p81
      %p84 = scmp.ne.s32.totalorder %s67, %s83
      %p85 = scmp.eq.s32.totalorder %s33, 0
      %p86 = por %p84, %p85
      %s88 = sadd.s32 %s87, 1
      %p91 = scmp.eq.s32.totalorder %s27, 1
      %p92 = scmp.ne.s32.totalorder %s87, %s89
      %p93 = scmp.eq.s32.totalorder %s27, 0
      %p94 = por %p92, %p93
      %p95 = scmp.ne.s32.totalorder %s87, %s89
      %p96 = scmp.eq.s32.totalorder %s32, 1
      %p97 = por %p95, %p96
      %p98 = scmp.ne.s32.totalorder %s89, %s90
      %p99 = scmp.eq.s32.totalorder %s32, 0
      %p100 = por %p98, %p99
      %p101 = scmp.ne.s32.totalorder %s89, %s90
      %p102 = scmp.eq.s32.totalorder %s33, 1
      %p103 = por %p101, %p102
      %p105 = scmp.ne.s32.totalorder %s90, %s104
      %p106 = scmp.eq.s32.totalorder %s33, 0
      %p107 = por %p105, %p106
      %s109 = sadd.s32 %s108, 1
      %p112 = scmp.eq.s32.totalorder %s27, 1
      %p113 = scmp.ne.s32.totalorder %s108, %s110
      %p114 = scmp.eq.s32.totalorder %s27, 0
      %p115 = por %p113, %p114
      %p116 = scmp.ne.s32.totalorder %s108, %s110
      %p117 = scmp.eq.s32.totalorder %s32, 1
      %p118 = por %p116, %p117
      %p119 = scmp.ne.s32.totalorder %s110, %s111
      %p120 = scmp.eq.s32.totalorder %s32, 0
      %p121 = por %p119, %p120
      %p122 = scmp.ne.s32.totalorder %s110, %s111
      %p123 = scmp.eq.s32.totalorder %s33, 1
      %p124 = por %p122, %p123
      %p126 = scmp.ne.s32.totalorder %s111, %s125
      %p127 = scmp.eq.s32.totalorder %s33, 0
      %p128 = por %p126, %p127
      %s130 = sadd.s32 %s129, 1
      %p133 = scmp.eq.s32.totalorder %s27, 1
      %p134 = scmp.ne.s32.totalorder %s129, %s131
      %p135 = scmp.eq.s32.totalorder %s27, 0
      %p136 = por %p134, %p135
      %p137 = scmp.ne.s32.totalorder %s129, %s131
      %p138 = scmp.eq.s32.totalorder %s32, 1
      %p139 = por %p137, %p138
      %p140 = scmp.ne.s32.totalorder %s131, %s132
      %p141 = scmp.eq.s32.totalorder %s32, 0
      %p142 = por %p140, %p141
      %p143 = scmp.ne.s32.totalorder %s131, %s132
      %p144 = scmp.eq.s32.totalorder %s33, 1
      %p145 = por %p143, %p144
      %p147 = scmp.ne.s32.totalorder %s132, %s146
      %p148 = scmp.eq.s32.totalorder %s33, 0
      %p149 = por %p147, %p148
      %s151 = sadd.s32 %s150, 1
      %p154 = scmp.eq.s32.totalorder %s27, 1
      %p155 = scmp.ne.s32.totalorder %s150, %s152
      %p156 = scmp.eq.s32.totalorder %s27, 0
      %p157 = por %p155, %p156
      %p158 = scmp.ne.s32.totalorder %s150, %s152
      %p159 = scmp.eq.s32.totalorder %s32, 1
      %p160 = por %p158, %p159
      %p161 = scmp.ne.s32.totalorder %s152, %s153
      %p162 = scmp.eq.s32.totalorder %s32, 0
      %p163 = por %p161, %p162
      %p164 = scmp.ne.s32.totalorder %s152, %s153
      %p165 = scmp.eq.s32.totalorder %s33, 1
      %p166 = por %p164, %p165
      %p168 = scmp.ne.s32.totalorder %s153, %s167
      %p169 = scmp.eq.s32.totalorder %s33, 0
      %p170 = por %p168, %p169
      %s172 = sadd.s32 %s171, 1
      %p175 = scmp.eq.s32.totalorder %s27, 1
      %p176 = scmp.ne.s32.totalorder %s171, %s173
      %p177 = scmp.eq.s32.totalorder %s27, 0
      %p178 = por %p176, %p177
      %p179 = scmp.ne.s32.totalorder %s171, %s173
      %p180 = scmp.eq.s32.totalorder %s32, 1
      %p181 = por %p179, %p180
      %p182 = scmp.ne.s32.totalorder %s173, %s174
      %p183 = scmp.eq.s32.totalorder %s32, 0
      %p184 = por %p182, %p183
      %p185 = scmp.ne.s32.totalorder %s173, %s174
      %p186 = scmp.eq.s32.totalorder %s33, 1
      %p187 = por %p185, %p186
      %p189 = scmp.ne.s32.totalorder %s174, %s188
      %p190 = scmp.eq.s32.totalorder %s33, 0
      %p191 = por %p189, %p190
      %s193 = sadd.s32 %s192, 1
      %p196 = scmp.eq.s32.totalorder %s27, 1
      %p197 = scmp.ne.s32.totalorder %s192, %s194
      %p198 = scmp.eq.s32.totalorder %s27, 0
      %p199 = por %p197, %p198
      %p200 = scmp.ne.s32.totalorder %s192, %s194
      %p201 = scmp.eq.s32.totalorder %s32, 1
      %p202 = por %p200, %p201
      %p203 = scmp.ne.s32.totalorder %s194, %s195
      %p204 = scmp.eq.s32.totalorder %s32, 0
      %p205 = por %p203, %p204
      %p206 = scmp.ne.s32.totalorder %s194, %s195
      %p207 = scmp.eq.s32.totalorder %s33, 1
      %p208 = por %p206, %p207
      %p210 = scmp.ne.s32.totalorder %s195, %s209
      %p211 = scmp.eq.s32.totalorder %s33, 0
      %p212 = por %p210, %p211
      %s214 = sadd.s32 %s213, 1
      %p217 = scmp.eq.s32.totalorder %s27, 1
      %p218 = scmp.ne.s32.totalorder %s213, %s215
      %p219 = scmp.eq.s32.totalorder %s27, 0
      %p220 = por %p218, %p219
      %p221 = scmp.ne.s32.totalorder %s213, %s215
      %p222 = scmp.eq.s32.totalorder %s32, 1
      %p223 = por %p221, %p222
      %p224 = scmp.ne.s32.totalorder %s215, %s216
      %p225 = scmp.eq.s32.totalorder %s32, 0
      %p226 = por %p224, %p225
      %p227 = scmp.ne.s32.totalorder %s215, %s216
      %p228 = scmp.eq.s32.totalorder %s33, 1
      %p229 = por %p227, %p228
      %p231 = scmp.ne.s32.totalorder %s216, %s230
      %p232 = scmp.eq.s32.totalorder %s33, 0
      %p233 = por %p231, %p232
      %s235 = sadd.s32 %s234, 1
      %p238 = scmp.eq.s32.totalorder %s27, 1
      %p239 = scmp.ne.s32.totalorder %s234, %s236
      %p240 = scmp.eq.s32.totalorder %s27, 0
      %p241 = por %p239, %p240
      %p242 = scmp.ne.s32.totalorder %s234, %s236
      %p243 = scmp.eq.s32.totalorder %s32, 1
      %p244 = por %p242, %p243
      %p245 = scmp.ne.s32.totalorder %s236, %s237
      %p246 = scmp.eq.s32.totalorder %s32, 0
      %p247 = por %p245, %p246
      %p248 = scmp.ne.s32.totalorder %s236, %s237
      %p249 = scmp.eq.s32.totalorder %s33, 1
      %p250 = por %p248, %p249
      %p252 = scmp.ne.s32.totalorder %s237, %s251
      %p253 = scmp.eq.s32.totalorder %s33, 0
      %p254 = por %p252, %p253
      %s256 = sadd.s32 %s255, 1
      %p259 = scmp.eq.s32.totalorder %s27, 1
      %p260 = scmp.ne.s32.totalorder %s255, %s257
      %p261 = scmp.eq.s32.totalorder %s27, 0
      %p262 = por %p260, %p261
      %p263 = scmp.ne.s32.totalorder %s255, %s257
      %p264 = scmp.eq.s32.totalorder %s32, 1
      %p265 = por %p263, %p264
      %p266 = scmp.ne.s32.totalorder %s257, %s258
      %p267 = scmp.eq.s32.totalorder %s32, 0
      %p268 = por %p266, %p267
      %p269 = scmp.ne.s32.totalorder %s257, %s258
      %p270 = scmp.eq.s32.totalorder %s33, 1
      %p271 = por %p269, %p270
      %p273 = scmp.ne.s32.totalorder %s258, %s272
      %p274 = scmp.eq.s32.totalorder %s33, 0
      %p275 = por %p273, %p274
      %s277 = sadd.s32 %s276, 1
      %p280 = scmp.eq.s32.totalorder %s27, 1
      %p281 = scmp.ne.s32.totalorder %s276, %s278
      %p282 = scmp.eq.s32.totalorder %s27, 0
      %p283 = por %p281, %p282
      %p284 = scmp.ne.s32.totalorder %s276, %s278
      %p285 = scmp.eq.s32.totalorder %s32, 1
      %p286 = por %p284, %p285
      %p287 = scmp.ne.s32.totalorder %s278, %s279
      %p288 = scmp.eq.s32.totalorder %s32, 0
      %p289 = por %p287, %p288
      %p290 = scmp.ne.s32.totalorder %s278, %s279
      %p291 = scmp.eq.s32.totalorder %s33, 1
      %p292 = por %p290, %p291
      %p294 = scmp.ne.s32.totalorder %s279, %s293
      %p295 = scmp.eq.s32.totalorder %s33, 0
      %p296 = por %p294, %p295
      %s298 = sadd.s32 %s297, 1
      %p301 = scmp.eq.s32.totalorder %s27, 1
      %p302 = scmp.ne.s32.totalorder %s297, %s299
      %p303 = scmp.eq.s32.totalorder %s27, 0
      %p304 = por %p302, %p303
      %p305 = scmp.ne.s32.totalorder %s297, %s299
      %p306 = scmp.eq.s32.totalorder %s32, 1
      %p307 = por %p305, %p306
      %p308 = scmp.ne.s32.totalorder %s299, %s300
      %p309 = scmp.eq.s32.totalorder %s32, 0
      %p310 = por %p308, %p309
      %p311 = scmp.ne.s32.totalorder %s299, %s300
      %p312 = scmp.eq.s32.totalorder %s33, 1
      %p313 = por %p311, %p312
      %p315 = scmp.ne.s32.totalorder %s300, %s314
      %p316 = scmp.eq.s32.totalorder %s33, 0
      %p317 = por %p315, %p316
      %s319 = sadd.s32 %s318, 1
      %p322 = scmp.eq.s32.totalorder %s27, 1
      %p323 = scmp.ne.s32.totalorder %s318, %s320
      %p324 = scmp.eq.s32.totalorder %s27, 0
      %p325 = por %p323, %p324
      %p326 = scmp.ne.s32.totalorder %s318, %s320
      %p327 = scmp.eq.s32.totalorder %s32, 1
      %p328 = por %p326, %p327
      %p329 = scmp.ne.s32.totalorder %s320, %s321
      %p330 = scmp.eq.s32.totalorder %s32, 0
      %p331 = por %p329, %p330
      %p332 = scmp.ne.s32.totalorder %s320, %s321
      %p333 = scmp.eq.s32.totalorder %s33, 1
      %p334 = por %p332, %p333
      %p336 = scmp.ne.s32.totalorder %s321, %s335
      %p337 = scmp.eq.s32.totalorder %s33, 0
      %p338 = por %p336, %p337
      %s340 = sadd.s32 %s339, 1
      %p343 = scmp.eq.s32.totalorder %s27, 1
      %p344 = scmp.ne.s32.totalorder %s339, %s341
      %p345 = scmp.eq.s32.totalorder %s27, 0
      %p346 = por %p344, %p345
      %p347 = scmp.ne.s32.totalorder %s339, %s341
      %p348 = scmp.eq.s32.totalorder %s32, 1
      %p349 = por %p347, %p348
      %p350 = scmp.ne.s32.totalorder %s341, %s342
      %p351 = scmp.eq.s32.totalorder %s32, 0
      %p352 = por %p350, %p351
      %p353 = scmp.ne.s32.totalorder %s341, %s342
      %p354 = scmp.eq.s32.totalorder %s33, 1
      %p355 = por %p353, %p354
      %p357 = scmp.ne.s32.totalorder %s342, %s356
      %p358 = scmp.eq.s32.totalorder %s33, 0
      %p359 = por %p357, %p358
      %s361 = sadd.s32 %s360, 1
      %p364 = scmp.eq.s32.totalorder %s27, 1
      %p365 = scmp.ne.s32.totalorder %s360, %s362
      %p366 = scmp.eq.s32.totalorder %s27, 0
      %p367 = por %p365, %p366
      %p368 = scmp.ne.s32.totalorder %s360, %s362
      %p369 = scmp.eq.s32.totalorder %s32, 1
      %p370 = por %p368, %p369
      %p371 = scmp.ne.s32.totalorder %s362, %s363
      %p372 = scmp.eq.s32.totalorder %s32, 0
      %p373 = por %p371, %p372
      %p374 = scmp.ne.s32.totalorder %s362, %s363
      %p375 = scmp.eq.s32.totalorder %s33, 1
      %p376 = por %p374, %p375
      %p378 = scmp.ne.s32.totalorder %s363, %s377
      %p379 = scmp.eq.s32.totalorder %s33, 0
      %p380 = por %p378, %p379
      %s382 = sadd.s32 %s381, 1
      %p385 = scmp.eq.s32.totalorder %s27, 1
      %p386 = scmp.ne.s32.totalorder %s381, %s383
      %p387 = scmp.eq.s32.totalorder %s27, 0
      %p388 = por %p386, %p387
      %p389 = scmp.ne.s32.totalorder %s381, %s383
      %p390 = scmp.eq.s32.totalorder %s32, 1
      %p391 = por %p389, %p390
      %p392 = scmp.ne.s32.totalorder %s383, %s384
      %p393 = scmp.eq.s32.totalorder %s32, 0
      %p394 = por %p392, %p393
      %p395 = scmp.ne.s32.totalorder %s383, %s384
      %p396 = scmp.eq.s32.totalorder %s33, 1
      %p397 = por %p395, %p396
      %p399 = scmp.ne.s32.totalorder %s384, %s398
      %p400 = scmp.eq.s32.totalorder %s33, 0
      %p401 = por %p399, %p400
      %s403 = sadd.s32 %s402, 1
      %p406 = scmp.eq.s32.totalorder %s27, 1
      %p407 = scmp.ne.s32.totalorder %s402, %s404
      %p408 = scmp.eq.s32.totalorder %s27, 0
      %p409 = por %p407, %p408
      %p410 = scmp.ne.s32.totalorder %s402, %s404
      %p411 = scmp.eq.s32.totalorder %s32, 1
      %p412 = por %p410, %p411
      %p413 = scmp.ne.s32.totalorder %s404, %s405
      %p414 = scmp.eq.s32.totalorder %s32, 0
      %p415 = por %p413, %p414
      %p416 = scmp.ne.s32.totalorder %s404, %s405
      %p417 = scmp.eq.s32.totalorder %s33, 1
      %p418 = por %p416, %p417
      %p420 = scmp.ne.s32.totalorder %s405, %s419
      %p421 = scmp.eq.s32.totalorder %s33, 0
      %p422 = por %p420, %p421
      %s423 = ssub.s32 %s27, %s34
      %p424 = scmp.eq.s32.totalorder %s423, 0
      %s426 = sadd.s32 %s425, 1
      %s427 = scalar_select %p424, %s425, %s426
      %p430 = pneg %p424
      %p431 = scmp.eq.s32.totalorder %s27, 1
      %p432 = por %p430, %p431
      %p433 = scmp.ne.s32.totalorder %s425, %s428
      %p434 = scmp.eq.s32.totalorder %s27, 0
      %p435 = por %p433, %p434
      %p436 = scmp.ne.s32.totalorder %s425, %s428
      %p437 = scmp.eq.s32.totalorder %s32, 1
      %p438 = por %p436, %p437
      %p439 = scmp.ne.s32.totalorder %s428, %s429
      %p440 = scmp.eq.s32.totalorder %s32, 0
      %p441 = por %p439, %p440
      %p442 = scmp.ne.s32.totalorder %s428, %s429
      %p443 = scmp.eq.s32.totalorder %s33, 1
      %p444 = por %p442, %p443
      %p446 = scmp.ne.s32.totalorder %s429, %s445
      %p447 = scmp.eq.s32.totalorder %s33, 0
      %p448 = por %p446, %p447
      %p449 = scmp.le.s32.totalorder 1, %s27
      %p450 = scmp.lt.s32.totalorder %s27, 3
      %p451 = pnand %p449, %p450
      %p452 = pneg %p451
      // Predicated region
      $region9: #{transformer_encoder.2} parent=5 // pred_check
        _
      $region10: #{transformer_encoder.2} parent=5 // pred_check_branch
        %454 = sbr.rel (%p451) target = $region12
      $region11: #{transformer_encoder.2} parent=5 // pred_region
        %s455 = ssub.s32 %s27, 1
        // Predicated region
        $region13: #{transformer_encoder.2} parent=11 // pred_check
          %p456 = pneg %p100
        $region14: #{transformer_encoder.2} parent=11 // pred_check_branch
          %458 = sbr.rel (%p456) target = $region16
        $region15: #{transformer_encoder.2} parent=11 // pred_region
          _
        $region16: #{transformer_encoder.2} parent=11 // pred_fallthru
          _
        // Predicated region
        $region17: #{transformer_encoder.2} parent=11 // pred_check
          %p459 = pneg %p121
        $region18: #{transformer_encoder.2} parent=11 // pred_check_branch
          %461 = sbr.rel (%p459) target = $region20
        $region19: #{transformer_encoder.2} parent=11 // pred_region
          _
        $region20: #{transformer_encoder.2} parent=11 // pred_fallthru
          _
        // Predicated region
        $region21: #{transformer_encoder.2} parent=11 // pred_check
          %p462 = pneg %p142
        $region22: #{transformer_encoder.2} parent=11 // pred_check_branch
          %464 = sbr.rel (%p462) target = $region24
        $region23: #{transformer_encoder.2} parent=11 // pred_region
          %466 = vsyncadd [#allocation3], 0
          %s467 = sshll.u32 %s4, 4
          %s468 = int_to_ptr.hbm [resolvable:$true] %s467
          %s469 = sshll.u32 [#allocation2], 4
          %s470 = int_to_ptr.vmem [resolvable:$true] %s469
          %475 = dma.hbm_to_vmem [thread:$0]  %s468, 256, %s470, [#allocation3], 64, 64, 4
        $region24: #{transformer_encoder.2} parent=11 // pred_fallthru
          _
        // Predicated region
        $region25: #{transformer_encoder.2} parent=11 // pred_check
          %p476 = pneg %p163
        $region26: #{transformer_encoder.2} parent=11 // pred_check_branch
          %478 = sbr.rel (%p476) target = $region28
        $region27: #{transformer_encoder.2} parent=11 // pred_region
          _
        $region28: #{transformer_encoder.2} parent=11 // pred_fallthru
          _
        // Predicated region
        $region29: #{transformer_encoder.2} parent=11 // pred_check
          %p479 = pneg %p184
        $region30: #{transformer_encoder.2} parent=11 // pred_check_branch
          %481 = sbr.rel (%p479) target = $region32
        $region31: #{transformer_encoder.2} parent=11 // pred_region
          %483 = vsyncadd [#allocation5], 0
          %s485 = sshll.u32 %s6, 4
          %s486 = int_to_ptr.hbm [resolvable:$true] %s485
          %s487 = sshll.u32 [#allocation4], 4
          %s488 = int_to_ptr.vmem [resolvable:$true] %s487
          %490 = dma.hbm_to_vmem [thread:$0]  %s486, 16, %s488, [#allocation5]
        $region32: #{transformer_encoder.2} parent=11 // pred_fallthru
          _
        // Predicated region
        $region33: #{transformer_encoder.2} parent=11 // pred_check
          %p491 = pneg %p205
        $region34: #{transformer_encoder.2} parent=11 // pred_check_branch
          %493 = sbr.rel (%p491) target = $region36
        $region35: #{transformer_encoder.2} parent=11 // pred_region
          _
        $region36: #{transformer_encoder.2} parent=11 // pred_fallthru
          _
        // Predicated region
        $region37: #{transformer_encoder.2} parent=11 // pred_check
          %p494 = pneg %p226
        $region38: #{transformer_encoder.2} parent=11 // pred_check_branch
          %496 = sbr.rel (%p494) target = $region40
        $region39: #{transformer_encoder.2} parent=11 // pred_region
          %498 = vsyncadd [#allocation5], 0
          %s499 = sshll.u32 %s8, 4
          %s500 = int_to_ptr.hbm [resolvable:$true] %s499
          %s501 = sshll.u32 [#allocation6], 4
          %s502 = int_to_ptr.vmem [resolvable:$true] %s501
          %507 = dma.hbm_to_vmem [thread:$0]  %s500, 256, %s502, [#allocation5], 64, 64, 4
        $region40: #{transformer_encoder.2} parent=11 // pred_fallthru
          _
        // Predicated region
        $region41: #{transformer_encoder.2} parent=11 // pred_check
          %p508 = pneg %p247
        $region42: #{transformer_encoder.2} parent=11 // pred_check_branch
          %510 = sbr.rel (%p508) target = $region44
        $region43: #{transformer_encoder.2} parent=11 // pred_region
          _
        $region44: #{transformer_encoder.2} parent=11 // pred_fallthru
          _
        // Predicated region
        $region45: #{transformer_encoder.2} parent=11 // pred_check
          %p511 = pneg %p268
        $region46: #{transformer_encoder.2} parent=11 // pred_check_branch
          %513 = sbr.rel (%p511) target = $region48
        $region47: #{transformer_encoder.2} parent=11 // pred_region
          _
        $region48: #{transformer_encoder.2} parent=11 // pred_fallthru
          _
        // Predicated region
        $region49: #{transformer_encoder.2} parent=11 // pred_check
          %p514 = pneg %p289
        $region50: #{transformer_encoder.2} parent=11 // pred_check_branch
          %516 = sbr.rel (%p514) target = $region52
        $region51: #{transformer_encoder.2} parent=11 // pred_region
          _
        $region52: #{transformer_encoder.2} parent=11 // pred_fallthru
          _
        // Predicated region
        $region53: #{transformer_encoder.2} parent=11 // pred_check
          %p517 = pneg %p310
        $region54: #{transformer_encoder.2} parent=11 // pred_check_branch
          %519 = sbr.rel (%p517) target = $region56
        $region55: #{transformer_encoder.2} parent=11 // pred_region
          _
        $region56: #{transformer_encoder.2} parent=11 // pred_fallthru
          _
        // Predicated region
        $region57: #{transformer_encoder.2} parent=11 // pred_check
          %p520 = pneg %p331
        $region58: #{transformer_encoder.2} parent=11 // pred_check_branch
          %522 = sbr.rel (%p520) target = $region60
        $region59: #{transformer_encoder.2} parent=11 // pred_region
          %524 = vsyncadd [#allocation8], 0
          %s526 = sshll.u32 %s13, 4
          %s527 = int_to_ptr.hbm [resolvable:$true] %s526
          %s528 = sshll.u32 [#allocation7], 4
          %s529 = int_to_ptr.vmem [resolvable:$true] %s528
          %531 = dma.hbm_to_vmem [thread:$0]  %s527, 32, %s529, [#allocation8]
        $region60: #{transformer_encoder.2} parent=11 // pred_fallthru
          _
        // Predicated region
        $region61: #{transformer_encoder.2} parent=11 // pred_check
          %p532 = pneg %p352
        $region62: #{transformer_encoder.2} parent=11 // pred_check_branch
          %534 = sbr.rel (%p532) target = $region64
        $region63: #{transformer_encoder.2} parent=11 // pred_region
          _
        $region64: #{transformer_encoder.2} parent=11 // pred_fallthru
          _
        // Predicated region
        $region65: #{transformer_encoder.2} parent=11 // pred_check
          %p535 = pneg %p373
        $region66: #{transformer_encoder.2} parent=11 // pred_check_branch
          %537 = sbr.rel (%p535) target = $region68
        $region67: #{transformer_encoder.2} parent=11 // pred_region
          %539 = vsyncadd [#allocation8], 0
          %s541 = sshll.u32 %s15, 4
          %s542 = int_to_ptr.hbm [resolvable:$true] %s541
          %s543 = sshll.u32 [#allocation9], 4
          %s544 = int_to_ptr.vmem [resolvable:$true] %s543
          %546 = dma.hbm_to_vmem [thread:$0]  %s542, 16, %s544, [#allocation8]
        $region68: #{transformer_encoder.2} parent=11 // pred_fallthru
          _
        // Predicated region
        $region69: #{transformer_encoder.2} parent=11 // pred_check
          %p547 = pneg %p394
        $region70: #{transformer_encoder.2} parent=11 // pred_check_branch
          %549 = sbr.rel (%p547) target = $region72
        $region71: #{transformer_encoder.2} parent=11 // pred_region
          _
        $region72: #{transformer_encoder.2} parent=11 // pred_fallthru
          _
        // Predicated region
        $region73: #{transformer_encoder.2} parent=11 // pred_check
          %p550 = pneg %p415
        $region74: #{transformer_encoder.2} parent=11 // pred_check_branch
          %552 = sbr.rel (%p550) target = $region76
        $region75: #{transformer_encoder.2} parent=11 // pred_region
          _
        $region76: #{transformer_encoder.2} parent=11 // pred_fallthru
          _
      $region12: #{transformer_encoder.2} parent=5 // pred_fallthru
        _
      %p553 = scmp.lt.s32.totalorder %s27, 2
      // Predicated region
      $region77: #{transformer_encoder.2} parent=5 // pred_check
        %p554 = pneg %p553
      $region78: #{transformer_encoder.2} parent=5 // pred_check_branch
        %556 = sbr.rel (%p554) target = $region80
      $region79: #{transformer_encoder.2} parent=5 // pred_region
        // Predicated region
        $region81: #{transformer_encoder.2} parent=79 // pred_check
          %p557 = pneg %p47
        $region82: #{transformer_encoder.2} parent=79 // pred_check_branch
          %559 = sbr.rel (%p557) target = $region84
        $region83: #{transformer_encoder.2} parent=79 // pred_region
          %p560 = scmp.lt.s32.totalorder %s27, 1
          %s561 = scalar_select %p560, %s27, 1
          %s562 = smul.addr %s561, 2
          %s563 = smul.addr %s562, 8
          %s564 = scalar_lea.vmem %s0, %s563
        $region84: #{transformer_encoder.2} parent=79 // pred_fallthru
          _
        // Predicated region
        $region85: #{transformer_encoder.2} parent=79 // pred_check
          %p565 = pneg %p73
        $region86: #{transformer_encoder.2} parent=79 // pred_check_branch
          %567 = sbr.rel (%p565) target = $region88
        $region87: #{transformer_encoder.2} parent=79 // pred_region
          %p568 = scmp.lt.s32.totalorder %s27, 1
          %s569 = scalar_select %p568, %s27, 1
          %s570 = smul.addr %s569, 2
          %s571 = smul.addr %s570, 8
          %s572 = scalar_lea.vmem %s1, %s571
        $region88: #{transformer_encoder.2} parent=79 // pred_fallthru
          _
      $region80: #{transformer_encoder.2} parent=5 // pred_fallthru
        _
      %p573 = scmp.le.s32.totalorder 1, %s27
      %p574 = scmp.lt.s32.totalorder %s27, 3
      %p575 = pnand %p573, %p574
      %p576 = pneg %p575
      // Predicated region
      $region89: #{transformer_encoder.2} parent=5 // pred_check
        _
      $region90: #{transformer_encoder.2} parent=5 // pred_check_branch
        %578 = sbr.rel (%p575) target = $region92
      $region91: #{transformer_encoder.2} parent=5 // pred_region
        %s579 = ssub.s32 %s27, 1
        // Predicated region
        $region93: #{transformer_encoder.2} parent=91 // pred_check
          %p580 = pneg %p142
        $region94: #{transformer_encoder.2} parent=91 // pred_check_branch
          %582 = sbr.rel (%p580) target = $region96
        $region95: #{transformer_encoder.2} parent=91 // pred_region
          %584 = dma.done [#allocation3], 256
        $region96: #{transformer_encoder.2} parent=91 // pred_fallthru
          _
        // Predicated region
        $region97: #{transformer_encoder.2} parent=91 // pred_check
          %p585 = pneg %p184
        $region98: #{transformer_encoder.2} parent=91 // pred_check_branch
          %587 = sbr.rel (%p585) target = $region100
        $region99: #{transformer_encoder.2} parent=91 // pred_region
          %589 = dma.done [#allocation5], 16
        $region100: #{transformer_encoder.2} parent=91 // pred_fallthru
          _
        // Predicated region
        $region101: #{transformer_encoder.2} parent=91 // pred_check
          %p590 = pneg %p226
        $region102: #{transformer_encoder.2} parent=91 // pred_check_branch
          %592 = sbr.rel (%p590) target = $region104
        $region103: #{transformer_encoder.2} parent=91 // pred_region
          %594 = dma.done [#allocation5], 256
        $region104: #{transformer_encoder.2} parent=91 // pred_fallthru
          _
        // Predicated region
        $region105: #{transformer_encoder.2} parent=91 // pred_check
          %p595 = pneg %p331
        $region106: #{transformer_encoder.2} parent=91 // pred_check_branch
          %597 = sbr.rel (%p595) target = $region108
        $region107: #{transformer_encoder.2} parent=91 // pred_region
          %599 = dma.done [#allocation8], 32
        $region108: #{transformer_encoder.2} parent=91 // pred_fallthru
          _
        // Predicated region
        $region109: #{transformer_encoder.2} parent=91 // pred_check
          %p600 = pneg %p373
        $region110: #{transformer_encoder.2} parent=91 // pred_check_branch
          %602 = sbr.rel (%p600) target = $region112
        $region111: #{transformer_encoder.2} parent=91 // pred_region
          %604 = dma.done [#allocation8], 16
        $region112: #{transformer_encoder.2} parent=91 // pred_fallthru
          _
        %p605 = scmp.lt.s32.totalorder %s32, 1
        %s606 = scalar_select %p605, %s32, 1
        %s607 = smul.addr %s606, 2
        %s608 = smul.addr %s607, 8
        %s609 = scalar_lea.vmem %s0, %s608
        %p610 = pneg %p53
        %p611 = pneg %p50
        %p612 = scmp.lt.s32.totalorder %s32, 1
        %s613 = scalar_select %p612, %s32, 1
        %s614 = smul.addr %s613, 2
        %s615 = smul.addr %s614, 8
        %s616 = scalar_lea.vmem %s1, %s615
        %p617 = pneg %p79
        %p618 = pneg %p76
        %p619 = pneg %p100
        %p620 = pneg %p97
        %p621 = pneg %p121
        %p622 = pneg %p118
        %p623 = pneg %p142
        %p624 = pneg %p139
        %p625 = pneg %p163
        %p626 = pneg %p160
        %p627 = pneg %p184
        %p628 = pneg %p181
        %p629 = pneg %p205
        %p630 = pneg %p202
        %p631 = pneg %p226
        %p632 = pneg %p223
        %p633 = pneg %p247
        %p634 = pneg %p244
        %p635 = pneg %p268
        %p636 = pneg %p265
        %p637 = pneg %p289
        %p638 = pneg %p286
        %p639 = pneg %p310
        %p640 = pneg %p307
        %p641 = pneg %p331
        %p642 = pneg %p328
        %p643 = pneg %p352
        %p644 = pneg %p349
        %p645 = pneg %p373
        %p646 = pneg %p370
        %p647 = pneg %p394
        %p648 = pneg %p391
        %p649 = pneg %p415
        %p650 = pneg %p412
        %p651 = pneg %p441
        %p652 = pneg %p438
        %p653 = scmp.lt.s32.totalorder %s32, 1
        %s654 = scalar_select %p653, %s32, 1
        %s655 = smul.addr %s654, 2
        %s656 = smul.addr %s655, 8
        %s657 = scalar_lea.vmem %s18, %s656
        %p658 = scmp.lt.s32.totalorder %s32, 1
        %s659 = scalar_select %p658, %s32, 1
        %s660 = smul.addr %s659, 2
        %s661 = smul.addr %s660, 8
        %s662 = scalar_lea.vmem %s0, %s661
        %p663 = scmp.lt.s32.totalorder %s32, 1
        %s664 = scalar_select %p663, %s32, 1
        %s665 = smul.addr %s664, 2
        %s666 = smul.addr %s665, 8
        %s667 = scalar_lea.vmem %s1, %s666
        %p668 = scmp.lt.s32.totalorder %s32, 1
        %s669 = scalar_select %p668, %s32, 1
        %s670 = smul.addr %s669, 2
        %s671 = smul.addr %s670, 8
        %s672 = scalar_lea.vmem %s18, %s671
        %v674 = vld [vmem:[%s662] sm:$0xff]
        %v675 = vld [vmem:[%s662 + $0x8] sm:$0xff]
        %v676 = vld [vmem:[%s667] sm:$0xff]
        %v677 = vld [vmem:[%s667 + $0x8] sm:$0xff]
        %v678 = vadd.f32 %v674, %v676
        %v679 = vadd.f32 %v675, %v677
        %v680 = vpack.c.bf16 %v679, %v678
        %v681 = vpack.c.bf16 %v675, %v674
        %v682 = vld [vmem:[%s2] sm:$0xf]
        %v683 = vld [vmem:[%s2 + $0x4] sm:$0xf]
        %v684 = vld [vmem:[%s2 + $0x8] sm:$0xf]
        %v685 = vld [vmem:[%s2 + $0xc] sm:$0xf]
        %v686 = vld [vmem:[%s5] sm:$0x1]
        %v688 = vperm.slane %v686, 0
        %v694 = vunpack.c.l.b16 %v682
        %v695 = vunpack.c.l.b16 %v683
        %v696 = vunpack.c.l.b16 %v684
        %v697 = vunpack.c.l.b16 %v685
        %v698 = vpack.c.b16 %v695, %v694
        %v699 = vpack.c.b16 %v697, %v696
        %vm702 = vcmask 261120
        %v704 = vsel %vm702, %v680, 0
        %706 = vmatpush.bf16.msra.mxu0 0
        %707 = vmatpush.bf16.msra.mxu0 0
        %708 = vmatpush.bf16.msra.mxu0 0
        %709 = vmatpush.bf16.msra.mxu0 0
        %710 = vmatpush.bf16.msra.mxu0 0
        %711 = vmatpush.bf16.msra.mxu0 0
        %712 = vmatpush.bf16.msra.mxu0 %v699
        %713 = vmatpush.bf16.msra.mxu0 %v698
        %714 = vmatmul.bf16.gmra.mxu0 %v704
        %v715 = vpop.f32.mrf.mxu0
        %v716 = vadd.f32 %v688, %v715
        %v717 = vpop.f32.mrf.mxu0
        %v718 = vadd.f32 %v688, %v717
        %719 = vdwg.mxu0
        %v720 = vld [vmem:[%s3] sm:$0xf]
        %v721 = vld [vmem:[%s3 + $0x4] sm:$0xf]
        %v722 = vld [vmem:[%s3 + $0x8] sm:$0xf]
        %v723 = vld [vmem:[%s3 + $0xc] sm:$0xf]
        %v724 = vld [vmem:[#allocation4] sm:$0x1]
        %v726 = vperm.slane %v724, 0
        %v732 = vunpack.c.l.b16 %v720
        %v733 = vunpack.c.l.b16 %v721
        %v734 = vunpack.c.l.b16 %v722
        %v735 = vunpack.c.l.b16 %v723
        %v736 = vpack.c.b16 %v733, %v732
        %v737 = vpack.c.b16 %v735, %v734
        %740 = vmatpush.bf16.msra.mxu0 0
        %741 = vmatpush.bf16.msra.mxu0 0
        %742 = vmatpush.bf16.msra.mxu0 0
        %743 = vmatpush.bf16.msra.mxu0 0
        %744 = vmatpush.bf16.msra.mxu0 0
        %745 = vmatpush.bf16.msra.mxu0 0
        %746 = vmatpush.bf16.msra.mxu0 %v737
        %747 = vmatpush.bf16.msra.mxu0 %v736
        %748 = vmatmul.bf16.gmra.mxu0 %v704
        %v749 = vpop.f32.mrf.mxu0
        %v750 = vadd.f32 %v726, %v749
        %v751 = vpop.f32.mrf.mxu0
        %v752 = vadd.f32 %v726, %v751
        %753 = vdwg.mxu0
        %v754 = vld [vmem:[#allocation2] sm:$0xf]
        %v755 = vld [vmem:[#allocation2 + $0x4] sm:$0xf]
        %v756 = vld [vmem:[#allocation2 + $0x8] sm:$0xf]
        %v757 = vld [vmem:[#allocation2 + $0xc] sm:$0xf]
        %v758 = vld [vmem:[%s7] sm:$0x1]
        %v760 = vperm.slane %v758, 0
        %v766 = vunpack.c.l.b16 %v754
        %v767 = vunpack.c.l.b16 %v755
        %v768 = vunpack.c.l.b16 %v756
        %v769 = vunpack.c.l.b16 %v757
        %v770 = vpack.c.b16 %v767, %v766
        %v771 = vpack.c.b16 %v769, %v768
        %v775 = vsel %vm702, %v681, 0
        %777 = vmatpush.bf16.msra.mxu0 0
        %778 = vmatpush.bf16.msra.mxu0 0
        %779 = vmatpush.bf16.msra.mxu0 0
        %780 = vmatpush.bf16.msra.mxu0 0
        %781 = vmatpush.bf16.msra.mxu0 0
        %782 = vmatpush.bf16.msra.mxu0 0
        %783 = vmatpush.bf16.msra.mxu0 %v771
        %784 = vmatpush.bf16.msra.mxu0 %v770
        %785 = vmatmul.bf16.gmra.mxu0 %v775
        %v786 = vpop.f32.mrf.mxu0
        %v787 = vadd.f32 %v760, %v786
        %v788 = vpop.f32.mrf.mxu0
        %v789 = vadd.f32 %v760, %v788
        %790 = vdwg.mxu0
        %v791 = vpack.c.bf16 %v716, %v716
        %v792 = vpack.c.bf16 %v718, %v718
        %795 = vrot.lane.b32.xlu0 %v791, 120
        %v796 = vpop.permute.xlu0 %795
        %797 = vrot.lane.b32.xlu0 %v792, 120
        %v798 = vpop.permute.xlu0 %797
        %799 = vrot.lane.b32.xlu0 %v791, 112
        %v800 = vpop.permute.xlu0 %799
        %801 = vrot.lane.b32.xlu0 %v792, 112
        %v802 = vpop.permute.xlu0 %801
        %803 = vrot.lane.b32.xlu0 %v791, 104
        %v804 = vpop.permute.xlu0 %803
        %805 = vrot.lane.b32.xlu0 %v792, 104
        %v806 = vpop.permute.xlu0 %805
        %v809 = vpack.i.b16 %v796, %v791
        %v810 = vshrl.u32 %v791, 16
        %v811 = vshrl.u32 %v796, 16
        %v812 = vpack.i.b16 %v811, %v810
        %v815 = vpack.i.b16 %v804, %v800
        %v816 = vshrl.u32 %v800, 16
        %v817 = vshrl.u32 %v804, 16
        %v818 = vpack.i.b16 %v817, %v816
        %v821 = vpack.i.b16 %v798, %v792
        %v822 = vshrl.u32 %v792, 16
        %v823 = vshrl.u32 %v798, 16
        %v824 = vpack.i.b16 %v823, %v822
        %v827 = vpack.i.b16 %v806, %v802
        %v828 = vshrl.u32 %v802, 16
        %v829 = vshrl.u32 %v806, 16
        %v830 = vpack.i.b16 %v829, %v828
        %v833 = vunpack.c.l.s4 1983009808
        %v834 = vunpack.c.0.s8 %v833
        %v835 = vperm.slane %v809, %v834
        %v838 = vunpack.c.l.s4 1983009808
        %v839 = vunpack.c.0.s8 %v838
        %v840 = vperm.slane %v815, %v839
        %v841 = vrot.slane %v840, 4
        %vm842 = vcmask 1047556
        %v843 = vsel %vm842, %v841, %v835
        %v844 = vrot.slane %v835, 4
        %v845 = vsel %vm842, %v840, %v844
        %v847 = vunpack.c.l.s4 1934713408
        %v848 = vunpack.c.0.s8 %v847
        %v849 = vperm.slane %v843, %v848
        %v851 = vunpack.c.l.s4 1934713408
        %v852 = vunpack.c.0.s8 %v851
        %v853 = vperm.slane %v845, %v852
        %v854 = vrot.slane %v849, 4
        %v855 = vsel %vm842, 0, %v854
        %v856 = vrot.slane %v853, 4
        %v857 = vsel %vm842, 0, %v856
        %v860 = vunpack.c.l.s4 1983009808
        %v861 = vunpack.c.0.s8 %v860
        %v862 = vperm.slane %v812, %v861
        %v865 = vunpack.c.l.s4 1983009808
        %v866 = vunpack.c.0.s8 %v865
        %v867 = vperm.slane %v818, %v866
        %v868 = vrot.slane %v867, 4
        %v869 = vsel %vm842, %v868, %v862
        %v870 = vrot.slane %v862, 4
        %v871 = vsel %vm842, %v867, %v870
        %v873 = vunpack.c.l.s4 1934713408
        %v874 = vunpack.c.0.s8 %v873
        %v875 = vperm.slane %v869, %v874
        %v877 = vunpack.c.l.s4 1934713408
        %v878 = vunpack.c.0.s8 %v877
        %v879 = vperm.slane %v871, %v878
        %v880 = vrot.slane %v875, 4
        %v881 = vsel %vm842, 0, %v880
        %v882 = vrot.slane %v879, 4
        %v883 = vsel %vm842, 0, %v882
        %v886 = vunpack.c.l.s4 1983009808
        %v887 = vunpack.c.0.s8 %v886
        %v888 = vperm.slane %v821, %v887
        %v891 = vunpack.c.l.s4 1983009808
        %v892 = vunpack.c.0.s8 %v891
        %v893 = vperm.slane %v827, %v892
        %v894 = vrot.slane %v893, 4
        %v895 = vsel %vm842, %v894, %v888
        %v896 = vrot.slane %v888, 4
        %v897 = vsel %vm842, %v893, %v896
        %v899 = vunpack.c.l.s4 1934713408
        %v900 = vunpack.c.0.s8 %v899
        %v901 = vperm.slane %v895, %v900
        %v903 = vunpack.c.l.s4 1934713408
        %v904 = vunpack.c.0.s8 %v903
        %v905 = vperm.slane %v897, %v904
        %v906 = vrot.slane %v901, 4
        %v907 = vsel %vm842, 0, %v906
        %v908 = vrot.slane %v905, 4
        %v909 = vsel %vm842, 0, %v908
        %v912 = vunpack.c.l.s4 1983009808
        %v913 = vunpack.c.0.s8 %v912
        %v914 = vperm.slane %v824, %v913
        %v917 = vunpack.c.l.s4 1983009808
        %v918 = vunpack.c.0.s8 %v917
        %v919 = vperm.slane %v830, %v918
        %v920 = vrot.slane %v919, 4
        %v921 = vsel %vm842, %v920, %v914
        %v922 = vrot.slane %v914, 4
        %v923 = vsel %vm842, %v919, %v922
        %v925 = vunpack.c.l.s4 1934713408
        %v926 = vunpack.c.0.s8 %v925
        %v927 = vperm.slane %v921, %v926
        %v929 = vunpack.c.l.s4 1934713408
        %v930 = vunpack.c.0.s8 %v929
        %v931 = vperm.slane %v923, %v930
        %v932 = vrot.slane %v927, 4
        %v933 = vsel %vm842, 0, %v932
        %v934 = vrot.slane %v931, 4
        %v935 = vsel %vm842, 0, %v934
        %v936 = vsel %vm842, %v856, %v849
        %v938 = vunpack.c.l.s4 1983009808
        %v939 = vunpack.c.0.s8 %v938
        %v940 = vperm.slane %v936, %v939
        %v941 = vrot.slane %v857, 4
        %v942 = vsel %vm842, %v941, %v855
        %v944 = vunpack.c.l.s4 1983009808
        %v945 = vunpack.c.0.s8 %v944
        %v946 = vperm.slane %v942, %v945
        %v947 = vrot.slane %v946, 4
        %v948 = vsel %vm842, %v947, %v940
        %v950 = vunpack.c.l.s4 1934713408
        %v951 = vunpack.c.0.s8 %v950
        %v952 = vperm.slane %v948, %v951
        %v953 = vrot.slane %v952, 4
        %v954 = vsel %vm842, 0, %v953
        %v955 = vsel %vm842, %v882, %v875
        %v957 = vunpack.c.l.s4 1983009808
        %v958 = vunpack.c.0.s8 %v957
        %v959 = vperm.slane %v955, %v958
        %v960 = vrot.slane %v883, 4
        %v961 = vsel %vm842, %v960, %v881
        %v963 = vunpack.c.l.s4 1983009808
        %v964 = vunpack.c.0.s8 %v963
        %v965 = vperm.slane %v961, %v964
        %v966 = vrot.slane %v965, 4
        %v967 = vsel %vm842, %v966, %v959
        %v969 = vunpack.c.l.s4 1934713408
        %v970 = vunpack.c.0.s8 %v969
        %v971 = vperm.slane %v967, %v970
        %v972 = vrot.slane %v971, 4
        %v973 = vsel %vm842, 0, %v972
        %v974 = vsel %vm842, %v908, %v901
        %v976 = vunpack.c.l.s4 1983009808
        %v977 = vunpack.c.0.s8 %v976
        %v978 = vperm.slane %v974, %v977
        %v979 = vrot.slane %v909, 4
        %v980 = vsel %vm842, %v979, %v907
        %v982 = vunpack.c.l.s4 1983009808
        %v983 = vunpack.c.0.s8 %v982
        %v984 = vperm.slane %v980, %v983
        %v985 = vrot.slane %v984, 4
        %v986 = vsel %vm842, %v985, %v978
        %v988 = vunpack.c.l.s4 1934713408
        %v989 = vunpack.c.0.s8 %v988
        %v990 = vperm.slane %v986, %v989
        %v991 = vrot.slane %v990, 4
        %v992 = vsel %vm842, 0, %v991
        %v993 = vsel %vm842, %v934, %v927
        %v995 = vunpack.c.l.s4 1983009808
        %v996 = vunpack.c.0.s8 %v995
        %v997 = vperm.slane %v993, %v996
        %v998 = vrot.slane %v935, 4
        %v999 = vsel %vm842, %v998, %v933
        %v1001 = vunpack.c.l.s4 1983009808
        %v1002 = vunpack.c.0.s8 %v1001
        %v1003 = vperm.slane %v999, %v1002
        %v1004 = vrot.slane %v1003, 4
        %v1005 = vsel %vm842, %v1004, %v997
        %v1007 = vunpack.c.l.s4 1934713408
        %v1008 = vunpack.c.0.s8 %v1007
        %v1009 = vperm.slane %v1005, %v1008
        %v1010 = vrot.slane %v1009, 4
        %v1011 = vsel %vm842, 0, %v1010
        %v1014 = vpack.i.b16 %v971, %v952
        %v1015 = vshrl.u32 %v952, 16
        %v1016 = vshrl.u32 %v971, 16
        %v1017 = vpack.i.b16 %v1016, %v1015
        %v1020 = vpack.i.b16 %v973, %v954
        %v1021 = vshrl.u32 %v954, 16
        %v1022 = vshrl.u32 %v973, 16
        %v1023 = vpack.i.b16 %v1022, %v1021
        %v1026 = vpack.i.b16 %v1009, %v990
        %v1027 = vshrl.u32 %v990, 16
        %v1028 = vshrl.u32 %v1009, 16
        %v1029 = vpack.i.b16 %v1028, %v1027
        %v1032 = vpack.i.b16 %v1011, %v992
        %v1033 = vshrl.u32 %v992, 16
        %v1034 = vshrl.u32 %v1011, 16
        %v1035 = vpack.i.b16 %v1034, %v1033
        %v1036 = vpack.c.bf16 %v750, %v750
        %v1037 = vpack.c.bf16 %v752, %v752
        %1040 = vrot.lane.b32.xlu0 %v1036, 120
        %v1041 = vpop.permute.xlu0 %1040
        %1042 = vrot.lane.b32.xlu0 %v1037, 120
        %v1043 = vpop.permute.xlu0 %1042
        %1044 = vrot.lane.b32.xlu0 %v1036, 112
        %v1045 = vpop.permute.xlu0 %1044
        %1046 = vrot.lane.b32.xlu0 %v1037, 112
        %v1047 = vpop.permute.xlu0 %1046
        %1048 = vrot.lane.b32.xlu0 %v1036, 104
        %v1049 = vpop.permute.xlu0 %1048
        %1050 = vrot.lane.b32.xlu0 %v1037, 104
        %v1051 = vpop.permute.xlu0 %1050
        %v1054 = vpack.i.b16 %v1041, %v1036
        %v1055 = vshrl.u32 %v1036, 16
        %v1056 = vshrl.u32 %v1041, 16
        %v1057 = vpack.i.b16 %v1056, %v1055
        %v1060 = vpack.i.b16 %v1049, %v1045
        %v1061 = vshrl.u32 %v1045, 16
        %v1062 = vshrl.u32 %v1049, 16
        %v1063 = vpack.i.b16 %v1062, %v1061
        %v1066 = vpack.i.b16 %v1043, %v1037
        %v1067 = vshrl.u32 %v1037, 16
        %v1068 = vshrl.u32 %v1043, 16
        %v1069 = vpack.i.b16 %v1068, %v1067
        %v1072 = vpack.i.b16 %v1051, %v1047
        %v1073 = vshrl.u32 %v1047, 16
        %v1074 = vshrl.u32 %v1051, 16
        %v1075 = vpack.i.b16 %v1074, %v1073
        %v1078 = vunpack.c.l.s4 1983009808
        %v1079 = vunpack.c.0.s8 %v1078
        %v1080 = vperm.slane %v1054, %v1079
        %v1083 = vunpack.c.l.s4 1983009808
        %v1084 = vunpack.c.0.s8 %v1083
        %v1085 = vperm.slane %v1060, %v1084
        %v1086 = vrot.slane %v1085, 4
        %v1087 = vsel %vm842, %v1086, %v1080
        %v1088 = vrot.slane %v1080, 4
        %v1089 = vsel %vm842, %v1085, %v1088
        %v1091 = vunpack.c.l.s4 1934713408
        %v1092 = vunpack.c.0.s8 %v1091
        %v1093 = vperm.slane %v1087, %v1092
        %v1095 = vunpack.c.l.s4 1934713408
        %v1096 = vunpack.c.0.s8 %v1095
        %v1097 = vperm.slane %v1089, %v1096
        %v1098 = vrot.slane %v1093, 4
        %v1099 = vsel %vm842, 0, %v1098
        %v1100 = vrot.slane %v1097, 4
        %v1101 = vsel %vm842, 0, %v1100
        %v1104 = vunpack.c.l.s4 1983009808
        %v1105 = vunpack.c.0.s8 %v1104
        %v1106 = vperm.slane %v1057, %v1105
        %v1109 = vunpack.c.l.s4 1983009808
        %v1110 = vunpack.c.0.s8 %v1109
        %v1111 = vperm.slane %v1063, %v1110
        %v1112 = vrot.slane %v1111, 4
        %v1113 = vsel %vm842, %v1112, %v1106
        %v1114 = vrot.slane %v1106, 4
        %v1115 = vsel %vm842, %v1111, %v1114
        %v1117 = vunpack.c.l.s4 1934713408
        %v1118 = vunpack.c.0.s8 %v1117
        %v1119 = vperm.slane %v1113, %v1118
        %v1121 = vunpack.c.l.s4 1934713408
        %v1122 = vunpack.c.0.s8 %v1121
        %v1123 = vperm.slane %v1115, %v1122
        %v1124 = vrot.slane %v1119, 4
        %v1125 = vsel %vm842, 0, %v1124
        %v1126 = vrot.slane %v1123, 4
        %v1127 = vsel %vm842, 0, %v1126
        %v1130 = vunpack.c.l.s4 1983009808
        %v1131 = vunpack.c.0.s8 %v1130
        %v1132 = vperm.slane %v1066, %v1131
        %v1135 = vunpack.c.l.s4 1983009808
        %v1136 = vunpack.c.0.s8 %v1135
        %v1137 = vperm.slane %v1072, %v1136
        %v1138 = vrot.slane %v1137, 4
        %v1139 = vsel %vm842, %v1138, %v1132
        %v1140 = vrot.slane %v1132, 4
        %v1141 = vsel %vm842, %v1137, %v1140
        %v1143 = vunpack.c.l.s4 1934713408
        %v1144 = vunpack.c.0.s8 %v1143
        %v1145 = vperm.slane %v1139, %v1144
        %v1147 = vunpack.c.l.s4 1934713408
        %v1148 = vunpack.c.0.s8 %v1147
        %v1149 = vperm.slane %v1141, %v1148
        %v1150 = vrot.slane %v1145, 4
        %v1151 = vsel %vm842, 0, %v1150
        %v1152 = vrot.slane %v1149, 4
        %v1153 = vsel %vm842, 0, %v1152
        %v1156 = vunpack.c.l.s4 1983009808
        %v1157 = vunpack.c.0.s8 %v1156
        %v1158 = vperm.slane %v1069, %v1157
        %v1161 = vunpack.c.l.s4 1983009808
        %v1162 = vunpack.c.0.s8 %v1161
        %v1163 = vperm.slane %v1075, %v1162
        %v1164 = vrot.slane %v1163, 4
        %v1165 = vsel %vm842, %v1164, %v1158
        %v1166 = vrot.slane %v1158, 4
        %v1167 = vsel %vm842, %v1163, %v1166
        %v1169 = vunpack.c.l.s4 1934713408
        %v1170 = vunpack.c.0.s8 %v1169
        %v1171 = vperm.slane %v1165, %v1170
        %v1173 = vunpack.c.l.s4 1934713408
        %v1174 = vunpack.c.0.s8 %v1173
        %v1175 = vperm.slane %v1167, %v1174
        %v1176 = vrot.slane %v1171, 4
        %v1177 = vsel %vm842, 0, %v1176
        %v1178 = vrot.slane %v1175, 4
        %v1179 = vsel %vm842, 0, %v1178
        %v1180 = vsel %vm842, %v1100, %v1093
        %v1182 = vunpack.c.l.s4 1983009808
        %v1183 = vunpack.c.0.s8 %v1182
        %v1184 = vperm.slane %v1180, %v1183
        %v1185 = vrot.slane %v1101, 4
        %v1186 = vsel %vm842, %v1185, %v1099
        %v1188 = vunpack.c.l.s4 1983009808
        %v1189 = vunpack.c.0.s8 %v1188
        %v1190 = vperm.slane %v1186, %v1189
        %v1191 = vrot.slane %v1190, 4
        %v1192 = vsel %vm842, %v1191, %v1184
        %v1194 = vunpack.c.l.s4 1934713408
        %v1195 = vunpack.c.0.s8 %v1194
        %v1196 = vperm.slane %v1192, %v1195
        %v1197 = vrot.slane %v1196, 4
        %v1198 = vsel %vm842, 0, %v1197
        %v1199 = vsel %vm842, %v1126, %v1119
        %v1201 = vunpack.c.l.s4 1983009808
        %v1202 = vunpack.c.0.s8 %v1201
        %v1203 = vperm.slane %v1199, %v1202
        %v1204 = vrot.slane %v1127, 4
        %v1205 = vsel %vm842, %v1204, %v1125
        %v1207 = vunpack.c.l.s4 1983009808
        %v1208 = vunpack.c.0.s8 %v1207
        %v1209 = vperm.slane %v1205, %v1208
        %v1210 = vrot.slane %v1209, 4
        %v1211 = vsel %vm842, %v1210, %v1203
        %v1213 = vunpack.c.l.s4 1934713408
        %v1214 = vunpack.c.0.s8 %v1213
        %v1215 = vperm.slane %v1211, %v1214
        %v1216 = vrot.slane %v1215, 4
        %v1217 = vsel %vm842, 0, %v1216
        %v1218 = vsel %vm842, %v1152, %v1145
        %v1220 = vunpack.c.l.s4 1983009808
        %v1221 = vunpack.c.0.s8 %v1220
        %v1222 = vperm.slane %v1218, %v1221
        %v1223 = vrot.slane %v1153, 4
        %v1224 = vsel %vm842, %v1223, %v1151
        %v1226 = vunpack.c.l.s4 1983009808
        %v1227 = vunpack.c.0.s8 %v1226
        %v1228 = vperm.slane %v1224, %v1227
        %v1229 = vrot.slane %v1228, 4
        %v1230 = vsel %vm842, %v1229, %v1222
        %v1232 = vunpack.c.l.s4 1934713408
        %v1233 = vunpack.c.0.s8 %v1232
        %v1234 = vperm.slane %v1230, %v1233
        %v1235 = vrot.slane %v1234, 4
        %v1236 = vsel %vm842, 0, %v1235
        %v1237 = vsel %vm842, %v1178, %v1171
        %v1239 = vunpack.c.l.s4 1983009808
        %v1240 = vunpack.c.0.s8 %v1239
        %v1241 = vperm.slane %v1237, %v1240
        %v1242 = vrot.slane %v1179, 4
        %v1243 = vsel %vm842, %v1242, %v1177
        %v1245 = vunpack.c.l.s4 1983009808
        %v1246 = vunpack.c.0.s8 %v1245
        %v1247 = vperm.slane %v1243, %v1246
        %v1248 = vrot.slane %v1247, 4
        %v1249 = vsel %vm842, %v1248, %v1241
        %v1251 = vunpack.c.l.s4 1934713408
        %v1252 = vunpack.c.0.s8 %v1251
        %v1253 = vperm.slane %v1249, %v1252
        %v1254 = vrot.slane %v1253, 4
        %v1255 = vsel %vm842, 0, %v1254
        %v1258 = vpack.i.b16 %v1215, %v1196
        %v1259 = vshrl.u32 %v1196, 16
        %v1260 = vshrl.u32 %v1215, 16
        %v1261 = vpack.i.b16 %v1260, %v1259
        %v1264 = vpack.i.b16 %v1217, %v1198
        %v1265 = vshrl.u32 %v1198, 16
        %v1266 = vshrl.u32 %v1217, 16
        %v1267 = vpack.i.b16 %v1266, %v1265
        %v1270 = vpack.i.b16 %v1253, %v1234
        %v1271 = vshrl.u32 %v1234, 16
        %v1272 = vshrl.u32 %v1253, 16
        %v1273 = vpack.i.b16 %v1272, %v1271
        %v1276 = vpack.i.b16 %v1255, %v1236
        %v1277 = vshrl.u32 %v1236, 16
        %v1278 = vshrl.u32 %v1255, 16
        %v1279 = vpack.i.b16 %v1278, %v1277
        %v1280 = vpack.c.bf16 %v787, %v787
        %v1281 = vpack.c.bf16 %v789, %v789
        %1284 = vrot.lane.b32.xlu0 %v1280, 120
        %v1285 = vpop.permute.xlu0 %1284
        %1286 = vrot.lane.b32.xlu0 %v1281, 120
        %v1287 = vpop.permute.xlu0 %1286
        %1288 = vrot.lane.b32.xlu0 %v1280, 112
        %v1289 = vpop.permute.xlu0 %1288
        %1290 = vrot.lane.b32.xlu0 %v1281, 112
        %v1291 = vpop.permute.xlu0 %1290
        %1292 = vrot.lane.b32.xlu0 %v1280, 104
        %v1293 = vpop.permute.xlu0 %1292
        %1294 = vrot.lane.b32.xlu0 %v1281, 104
        %v1295 = vpop.permute.xlu0 %1294
        %v1298 = vpack.i.b16 %v1285, %v1280
        %v1299 = vshrl.u32 %v1280, 16
        %v1300 = vshrl.u32 %v1285, 16
        %v1301 = vpack.i.b16 %v1300, %v1299
        %v1304 = vpack.i.b16 %v1293, %v1289
        %v1305 = vshrl.u32 %v1289, 16
        %v1306 = vshrl.u32 %v1293, 16
        %v1307 = vpack.i.b16 %v1306, %v1305
        %v1310 = vpack.i.b16 %v1287, %v1281
        %v1311 = vshrl.u32 %v1281, 16
        %v1312 = vshrl.u32 %v1287, 16
        %v1313 = vpack.i.b16 %v1312, %v1311
        %v1316 = vpack.i.b16 %v1295, %v1291
        %v1317 = vshrl.u32 %v1291, 16
        %v1318 = vshrl.u32 %v1295, 16
        %v1319 = vpack.i.b16 %v1318, %v1317
        %v1322 = vunpack.c.l.s4 1983009808
        %v1323 = vunpack.c.0.s8 %v1322
        %v1324 = vperm.slane %v1298, %v1323
        %v1327 = vunpack.c.l.s4 1983009808
        %v1328 = vunpack.c.0.s8 %v1327
        %v1329 = vperm.slane %v1304, %v1328
        %v1330 = vrot.slane %v1329, 4
        %v1331 = vsel %vm842, %v1330, %v1324
        %v1332 = vrot.slane %v1324, 4
        %v1333 = vsel %vm842, %v1329, %v1332
        %v1335 = vunpack.c.l.s4 1934713408
        %v1336 = vunpack.c.0.s8 %v1335
        %v1337 = vperm.slane %v1331, %v1336
        %v1339 = vunpack.c.l.s4 1934713408
        %v1340 = vunpack.c.0.s8 %v1339
        %v1341 = vperm.slane %v1333, %v1340
        %v1342 = vrot.slane %v1337, 4
        %v1343 = vsel %vm842, 0, %v1342
        %v1344 = vrot.slane %v1341, 4
        %v1345 = vsel %vm842, 0, %v1344
        %v1348 = vunpack.c.l.s4 1983009808
        %v1349 = vunpack.c.0.s8 %v1348
        %v1350 = vperm.slane %v1301, %v1349
        %v1353 = vunpack.c.l.s4 1983009808
        %v1354 = vunpack.c.0.s8 %v1353
        %v1355 = vperm.slane %v1307, %v1354
        %v1356 = vrot.slane %v1355, 4
        %v1357 = vsel %vm842, %v1356, %v1350
        %v1358 = vrot.slane %v1350, 4
        %v1359 = vsel %vm842, %v1355, %v1358
        %v1361 = vunpack.c.l.s4 1934713408
        %v1362 = vunpack.c.0.s8 %v1361
        %v1363 = vperm.slane %v1357, %v1362
        %v1365 = vunpack.c.l.s4 1934713408
        %v1366 = vunpack.c.0.s8 %v1365
        %v1367 = vperm.slane %v1359, %v1366
        %v1368 = vrot.slane %v1363, 4
        %v1369 = vsel %vm842, 0, %v1368
        %v1370 = vrot.slane %v1367, 4
        %v1371 = vsel %vm842, 0, %v1370
        %v1374 = vunpack.c.l.s4 1983009808
        %v1375 = vunpack.c.0.s8 %v1374
        %v1376 = vperm.slane %v1310, %v1375
        %v1379 = vunpack.c.l.s4 1983009808
        %v1380 = vunpack.c.0.s8 %v1379
        %v1381 = vperm.slane %v1316, %v1380
        %v1382 = vrot.slane %v1381, 4
        %v1383 = vsel %vm842, %v1382, %v1376
        %v1384 = vrot.slane %v1376, 4
        %v1385 = vsel %vm842, %v1381, %v1384
        %v1387 = vunpack.c.l.s4 1934713408
        %v1388 = vunpack.c.0.s8 %v1387
        %v1389 = vperm.slane %v1383, %v1388
        %v1391 = vunpack.c.l.s4 1934713408
        %v1392 = vunpack.c.0.s8 %v1391
        %v1393 = vperm.slane %v1385, %v1392
        %v1394 = vrot.slane %v1389, 4
        %v1395 = vsel %vm842, 0, %v1394
        %v1396 = vrot.slane %v1393, 4
        %v1397 = vsel %vm842, 0, %v1396
        %v1400 = vunpack.c.l.s4 1983009808
        %v1401 = vunpack.c.0.s8 %v1400
        %v1402 = vperm.slane %v1313, %v1401
        %v1405 = vunpack.c.l.s4 1983009808
        %v1406 = vunpack.c.0.s8 %v1405
        %v1407 = vperm.slane %v1319, %v1406
        %v1408 = vrot.slane %v1407, 4
        %v1409 = vsel %vm842, %v1408, %v1402
        %v1410 = vrot.slane %v1402, 4
        %v1411 = vsel %vm842, %v1407, %v1410
        %v1413 = vunpack.c.l.s4 1934713408
        %v1414 = vunpack.c.0.s8 %v1413
        %v1415 = vperm.slane %v1409, %v1414
        %v1417 = vunpack.c.l.s4 1934713408
        %v1418 = vunpack.c.0.s8 %v1417
        %v1419 = vperm.slane %v1411, %v1418
        %v1420 = vrot.slane %v1415, 4
        %v1421 = vsel %vm842, 0, %v1420
        %v1422 = vrot.slane %v1419, 4
        %v1423 = vsel %vm842, 0, %v1422
        %v1424 = vsel %vm842, %v1344, %v1337
        %v1426 = vunpack.c.l.s4 1983009808
        %v1427 = vunpack.c.0.s8 %v1426
        %v1428 = vperm.slane %v1424, %v1427
        %v1429 = vrot.slane %v1345, 4
        %v1430 = vsel %vm842, %v1429, %v1343
        %v1432 = vunpack.c.l.s4 1983009808
        %v1433 = vunpack.c.0.s8 %v1432
        %v1434 = vperm.slane %v1430, %v1433
        %v1435 = vrot.slane %v1434, 4
        %v1436 = vsel %vm842, %v1435, %v1428
        %v1438 = vunpack.c.l.s4 1934713408
        %v1439 = vunpack.c.0.s8 %v1438
        %v1440 = vperm.slane %v1436, %v1439
        %v1441 = vrot.slane %v1440, 4
        %v1442 = vsel %vm842, 0, %v1441
        %v1443 = vsel %vm842, %v1370, %v1363
        %v1445 = vunpack.c.l.s4 1983009808
        %v1446 = vunpack.c.0.s8 %v1445
        %v1447 = vperm.slane %v1443, %v1446
        %v1448 = vrot.slane %v1371, 4
        %v1449 = vsel %vm842, %v1448, %v1369
        %v1451 = vunpack.c.l.s4 1983009808
        %v1452 = vunpack.c.0.s8 %v1451
        %v1453 = vperm.slane %v1449, %v1452
        %v1454 = vrot.slane %v1453, 4
        %v1455 = vsel %vm842, %v1454, %v1447
        %v1457 = vunpack.c.l.s4 1934713408
        %v1458 = vunpack.c.0.s8 %v1457
        %v1459 = vperm.slane %v1455, %v1458
        %v1460 = vrot.slane %v1459, 4
        %v1461 = vsel %vm842, 0, %v1460
        %v1462 = vsel %vm842, %v1396, %v1389
        %v1464 = vunpack.c.l.s4 1983009808
        %v1465 = vunpack.c.0.s8 %v1464
        %v1466 = vperm.slane %v1462, %v1465
        %v1467 = vrot.slane %v1397, 4
        %v1468 = vsel %vm842, %v1467, %v1395
        %v1470 = vunpack.c.l.s4 1983009808
        %v1471 = vunpack.c.0.s8 %v1470
        %v1472 = vperm.slane %v1468, %v1471
        %v1473 = vrot.slane %v1472, 4
        %v1474 = vsel %vm842, %v1473, %v1466
        %v1476 = vunpack.c.l.s4 1934713408
        %v1477 = vunpack.c.0.s8 %v1476
        %v1478 = vperm.slane %v1474, %v1477
        %v1479 = vrot.slane %v1478, 4
        %v1480 = vsel %vm842, 0, %v1479
        %v1481 = vsel %vm842, %v1422, %v1415
        %v1483 = vunpack.c.l.s4 1983009808
        %v1484 = vunpack.c.0.s8 %v1483
        %v1485 = vperm.slane %v1481, %v1484
        %v1486 = vrot.slane %v1423, 4
        %v1487 = vsel %vm842, %v1486, %v1421
        %v1489 = vunpack.c.l.s4 1983009808
        %v1490 = vunpack.c.0.s8 %v1489
        %v1491 = vperm.slane %v1487, %v1490
        %v1492 = vrot.slane %v1491, 4
        %v1493 = vsel %vm842, %v1492, %v1485
        %v1495 = vunpack.c.l.s4 1934713408
        %v1496 = vunpack.c.0.s8 %v1495
        %v1497 = vperm.slane %v1493, %v1496
        %v1498 = vrot.slane %v1497, 4
        %v1499 = vsel %vm842, 0, %v1498
        %v1502 = vpack.i.b16 %v1459, %v1440
        %v1503 = vshrl.u32 %v1440, 16
        %v1504 = vshrl.u32 %v1459, 16
        %v1505 = vpack.i.b16 %v1504, %v1503
        %v1508 = vpack.i.b16 %v1461, %v1442
        %v1509 = vshrl.u32 %v1442, 16
        %v1510 = vshrl.u32 %v1461, 16
        %v1511 = vpack.i.b16 %v1510, %v1509
        %v1514 = vpack.i.b16 %v1497, %v1478
        %v1515 = vshrl.u32 %v1478, 16
        %v1516 = vshrl.u32 %v1497, 16
        %v1517 = vpack.i.b16 %v1516, %v1515
        %v1520 = vpack.i.b16 %v1499, %v1480
        %v1521 = vshrl.u32 %v1480, 16
        %v1522 = vshrl.u32 %v1499, 16
        %v1523 = vpack.i.b16 %v1522, %v1521
        %v1524 = vunpack.c.l.b16 %v1014
        %v1525 = vunpack.c.l.b16 %v1026
        %v1526 = vpack.c.b16 %v1525, %v1524
        %v1527 = vunpack.c.l.b16 %v1258
        %v1528 = vunpack.c.l.b16 %v1270
        %v1529 = vpack.c.b16 %v1528, %v1527
        %vm1530 = vcmask 64512
        %v1532 = vsel %vm1530, %v1526, 0
        %v1535 = vsel %vm1530, %v1529, 0
        %1537 = vmatpush.bf16.xpose.msra.mxu0 0
        %1538 = vmatpush.bf16.xpose.msra.mxu0 0
        %1539 = vmatpush.bf16.xpose.msra.mxu0 0
        %1540 = vmatpush.bf16.xpose.msra.mxu0 0
        %1541 = vmatpush.bf16.xpose.msra.mxu0 0
        %1542 = vmatpush.bf16.xpose.msra.mxu0 0
        %1543 = vmatpush.bf16.xpose.msra.mxu0 0
        %1544 = vmatpush.bf16.xpose.msra.mxu0 %v1535
        %1545 = vmatmul.bf16.gmra.mxu0 %v1532
        %v1546 = vpop.f32.mrf.mxu0
        %v1547 = vadd.f32 0.0, %v1546
        %v1548 = vpop.f32.mrf.mxu0
        %v1549 = vadd.f32 0.0, %v1548
        %1550 = vdwg.mxu0
        %v1551 = vunpack.c.l.b16 %v1017
        %v1552 = vunpack.c.l.b16 %v1029
        %v1553 = vpack.c.b16 %v1552, %v1551
        %v1554 = vunpack.c.l.b16 %v1261
        %v1555 = vunpack.c.l.b16 %v1273
        %v1556 = vpack.c.b16 %v1555, %v1554
        %v1558 = vsel %vm1530, %v1553, 0
        %v1561 = vsel %vm1530, %v1556, 0
        %1563 = vmatpush.bf16.xpose.msra.mxu0 0
        %1564 = vmatpush.bf16.xpose.msra.mxu0 0
        %1565 = vmatpush.bf16.xpose.msra.mxu0 0
        %1566 = vmatpush.bf16.xpose.msra.mxu0 0
        %1567 = vmatpush.bf16.xpose.msra.mxu0 0
        %1568 = vmatpush.bf16.xpose.msra.mxu0 0
        %1569 = vmatpush.bf16.xpose.msra.mxu0 0
        %1570 = vmatpush.bf16.xpose.msra.mxu0 %v1561
        %1571 = vmatmul.bf16.gmra.mxu0 %v1558
        %v1572 = vpop.f32.mrf.mxu0
        %v1573 = vadd.f32 0.0, %v1572
        %v1574 = vpop.f32.mrf.mxu0
        %v1575 = vadd.f32 0.0, %v1574
        %1576 = vdwg.mxu0
        %v1577 = vunpack.c.l.b16 %v1020
        %v1578 = vunpack.c.l.b16 %v1032
        %v1579 = vpack.c.b16 %v1578, %v1577
        %v1580 = vunpack.c.l.b16 %v1264
        %v1581 = vunpack.c.l.b16 %v1276
        %v1582 = vpack.c.b16 %v1581, %v1580
        %v1584 = vsel %vm1530, %v1579, 0
        %v1587 = vsel %vm1530, %v1582, 0
        %1589 = vmatpush.bf16.xpose.msra.mxu0 0
        %1590 = vmatpush.bf16.xpose.msra.mxu0 0
        %1591 = vmatpush.bf16.xpose.msra.mxu0 0
        %1592 = vmatpush.bf16.xpose.msra.mxu0 0
        %1593 = vmatpush.bf16.xpose.msra.mxu0 0
        %1594 = vmatpush.bf16.xpose.msra.mxu0 0
        %1595 = vmatpush.bf16.xpose.msra.mxu0 0
        %1596 = vmatpush.bf16.xpose.msra.mxu0 %v1587
        %1597 = vmatmul.bf16.gmra.mxu0 %v1584
        %v1598 = vpop.f32.mrf.mxu0
        %v1599 = vadd.f32 0.0, %v1598
        %v1600 = vpop.f32.mrf.mxu0
        %v1601 = vadd.f32 0.0, %v1600
        %1602 = vdwg.mxu0
        %v1603 = vunpack.c.l.b16 %v1023
        %v1604 = vunpack.c.l.b16 %v1035
        %v1605 = vpack.c.b16 %v1604, %v1603
        %v1606 = vunpack.c.l.b16 %v1267
        %v1607 = vunpack.c.l.b16 %v1279
        %v1608 = vpack.c.b16 %v1607, %v1606
        %v1610 = vsel %vm1530, %v1605, 0
        %v1613 = vsel %vm1530, %v1608, 0
        %1615 = vmatpush.bf16.xpose.msra.mxu0 0
        %1616 = vmatpush.bf16.xpose.msra.mxu0 0
        %1617 = vmatpush.bf16.xpose.msra.mxu0 0
        %1618 = vmatpush.bf16.xpose.msra.mxu0 0
        %1619 = vmatpush.bf16.xpose.msra.mxu0 0
        %1620 = vmatpush.bf16.xpose.msra.mxu0 0
        %1621 = vmatpush.bf16.xpose.msra.mxu0 0
        %1622 = vmatpush.bf16.xpose.msra.mxu0 %v1613
        %1623 = vmatmul.bf16.gmra.mxu0 %v1610
        %v1624 = vpop.f32.mrf.mxu0
        %v1625 = vadd.f32 0.0, %v1624
        %v1626 = vpop.f32.mrf.mxu0
        %v1627 = vadd.f32 0.0, %v1626
        %1628 = vdwg.mxu0
        %v1629 = vmul.f32 %v1547, 0.35355338
        %v1630 = vmul.f32 %v1549, 0.35355338
        %v1631 = vmul.f32 %v1573, 0.35355338
        %v1632 = vmul.f32 %v1575, 0.35355338
        %v1633 = vmul.f32 %v1599, 0.35355338
        %v1634 = vmul.f32 %v1601, 0.35355338
        %v1635 = vmul.f32 %v1625, 0.35355338
        %v1636 = vmul.f32 %v1627, 0.35355338
        %vm1637 = vcmask 130048
        %v1638 = vsel %vm1637, %v1629, -inf
        %1639 = vmax.xlane.f32.xlu0 %v1638
        %v1640 = vpop.xlane.xlu0 %1639
        %v1641 = vsel %vm1637, %v1630, -inf
        %1642 = vmax.xlane.f32.xlu0 %v1641
        %v1643 = vpop.xlane.xlu0 %1642
        %v1644 = vsel %vm1637, %v1631, -inf
        %1645 = vmax.xlane.f32.xlu0 %v1644
        %v1646 = vpop.xlane.xlu0 %1645
        %v1647 = vsel %vm1637, %v1632, -inf
        %1648 = vmax.xlane.f32.xlu0 %v1647
        %v1649 = vpop.xlane.xlu0 %1648
        %v1650 = vsel %vm1637, %v1633, -inf
        %1651 = vmax.xlane.f32.xlu0 %v1650
        %v1652 = vpop.xlane.xlu0 %1651
        %v1653 = vsel %vm1637, %v1634, -inf
        %1654 = vmax.xlane.f32.xlu0 %v1653
        %v1655 = vpop.xlane.xlu0 %1654
        %v1656 = vsel %vm1637, %v1635, -inf
        %1657 = vmax.xlane.f32.xlu0 %v1656
        %v1658 = vpop.xlane.xlu0 %1657
        %v1659 = vsel %vm1637, %v1636, -inf
        %1660 = vmax.xlane.f32.xlu0 %v1659
        %v1661 = vpop.xlane.xlu0 %1660
        %v1662 = vsub.f32 %v1629, %v1640
        %v1663 = vsub.f32 %v1630, %v1643
        %v1664 = vsub.f32 %v1631, %v1646
        %v1665 = vsub.f32 %v1632, %v1649
        %v1666 = vsub.f32 %v1633, %v1652
        %v1667 = vsub.f32 %v1634, %v1655
        %v1668 = vsub.f32 %v1635, %v1658
        %v1669 = vsub.f32 %v1636, %v1661
        %v1670 = vmul.f32 %v1662, 1.442695
        %v1671 = vpow.pop %v1670
        %v1672 = vmul.f32 %v1663, 1.442695
        %v1673 = vpow.pop %v1672
        %v1674 = vmul.f32 %v1664, 1.442695
        %v1675 = vpow.pop %v1674
        %v1676 = vmul.f32 %v1665, 1.442695
        %v1677 = vpow.pop %v1676
        %v1678 = vmul.f32 %v1666, 1.442695
        %v1679 = vpow.pop %v1678
        %v1680 = vmul.f32 %v1667, 1.442695
        %v1681 = vpow.pop %v1680
        %v1682 = vmul.f32 %v1668, 1.442695
        %v1683 = vpow.pop %v1682
        %v1684 = vmul.f32 %v1669, 1.442695
        %v1685 = vpow.pop %v1684
        %v1686 = vsel %vm1637, %v1671, 0.0
        %1687 = vadd.xlane.f32.xlu0 %v1686
        %v1688 = vpop.xlane.xlu0 %1687
        %v1689 = vsel %vm1637, %v1673, 0.0
        %1690 = vadd.xlane.f32.xlu0 %v1689
        %v1691 = vpop.xlane.xlu0 %1690
        %v1692 = vsel %vm1637, %v1675, 0.0
        %1693 = vadd.xlane.f32.xlu0 %v1692
        %v1694 = vpop.xlane.xlu0 %1693
        %v1695 = vsel %vm1637, %v1677, 0.0
        %1696 = vadd.xlane.f32.xlu0 %v1695
        %v1697 = vpop.xlane.xlu0 %1696
        %v1698 = vsel %vm1637, %v1679, 0.0
        %1699 = vadd.xlane.f32.xlu0 %v1698
        %v1700 = vpop.xlane.xlu0 %1699
        %v1701 = vsel %vm1637, %v1681, 0.0
        %1702 = vadd.xlane.f32.xlu0 %v1701
        %v1703 = vpop.xlane.xlu0 %1702
        %v1704 = vsel %vm1637, %v1683, 0.0
        %1705 = vadd.xlane.f32.xlu0 %v1704
        %v1706 = vpop.xlane.xlu0 %1705
        %v1707 = vsel %vm1637, %v1685, 0.0
        %1708 = vadd.xlane.f32.xlu0 %v1707
        %v1709 = vpop.xlane.xlu0 %1708
        %v1710 = vrcp.pop %v1688
        %v1711 = vrcp.pop %v1691
        %v1712 = vrcp.pop %v1694
        %v1713 = vrcp.pop %v1697
        %v1714 = vrcp.pop %v1700
        %v1715 = vrcp.pop %v1703
        %v1716 = vrcp.pop %v1706
        %v1717 = vrcp.pop %v1709
        %v1718 = vmul.f32 %v1671, %v1710
        %v1719 = vmul.f32 %v1673, %v1711
        %v1720 = vmul.f32 %v1675, %v1712
        %v1721 = vmul.f32 %v1677, %v1713
        %v1722 = vmul.f32 %v1679, %v1714
        %v1723 = vmul.f32 %v1681, %v1715
        %v1724 = vmul.f32 %v1683, %v1716
        %v1725 = vmul.f32 %v1685, %v1717
        %v1726 = vpack.c.bf16 %v1718, %v1718
        %v1727 = vpack.c.bf16 %v1719, %v1719
        %v1728 = vpack.c.bf16 %v1720, %v1720
        %v1729 = vpack.c.bf16 %v1721, %v1721
        %v1730 = vpack.c.bf16 %v1722, %v1722
        %v1731 = vpack.c.bf16 %v1723, %v1723
        %v1732 = vpack.c.bf16 %v1724, %v1724
        %v1733 = vpack.c.bf16 %v1725, %v1725
        %v1736 = vunpack.c.l.b16 %v1726
        %v1737 = vunpack.c.l.b16 %v1727
        %v1738 = vpack.c.b16 %v1737, %v1736
        %v1739 = vunpack.c.l.b16 %v1502
        %v1740 = vunpack.c.l.b16 %v1514
        %v1741 = vpack.c.b16 %v1740, %v1739
        %v1744 = vsel %vm1637, %v1738, 0
        %1746 = vmatpush.bf16.msra.mxu0 0
        %1747 = vmatpush.bf16.msra.mxu0 0
        %1748 = vmatpush.bf16.msra.mxu0 0
        %1749 = vmatpush.bf16.msra.mxu0 0
        %1750 = vmatpush.bf16.msra.mxu0 0
        %1751 = vmatpush.bf16.msra.mxu0 0
        %1752 = vmatpush.bf16.msra.mxu0 0
        %1753 = vmatpush.bf16.msra.mxu0 %v1741
        %1754 = vmatmul.bf16.gmra.mxu0 %v1744
        %v1755 = vpop.f32.mrf.mxu0
        %v1756 = vadd.f32 0.0, %v1755
        %v1757 = vpop.f32.mrf.mxu0
        %v1758 = vadd.f32 0.0, %v1757
        %1759 = vdwg.mxu0
        %v1762 = vunpack.c.l.b16 %v1728
        %v1763 = vunpack.c.l.b16 %v1729
        %v1764 = vpack.c.b16 %v1763, %v1762
        %v1765 = vunpack.c.l.b16 %v1505
        %v1766 = vunpack.c.l.b16 %v1517
        %v1767 = vpack.c.b16 %v1766, %v1765
        %v1770 = vsel %vm1637, %v1764, 0
        %1772 = vmatpush.bf16.msra.mxu0 0
        %1773 = vmatpush.bf16.msra.mxu0 0
        %1774 = vmatpush.bf16.msra.mxu0 0
        %1775 = vmatpush.bf16.msra.mxu0 0
        %1776 = vmatpush.bf16.msra.mxu0 0
        %1777 = vmatpush.bf16.msra.mxu0 0
        %1778 = vmatpush.bf16.msra.mxu0 0
        %1779 = vmatpush.bf16.msra.mxu0 %v1767
        %1780 = vmatmul.bf16.gmra.mxu0 %v1770
        %v1781 = vpop.f32.mrf.mxu0
        %v1782 = vadd.f32 0.0, %v1781
        %v1783 = vpop.f32.mrf.mxu0
        %v1784 = vadd.f32 0.0, %v1783
        %1785 = vdwg.mxu0
        %v1788 = vunpack.c.l.b16 %v1730
        %v1789 = vunpack.c.l.b16 %v1731
        %v1790 = vpack.c.b16 %v1789, %v1788
        %v1791 = vunpack.c.l.b16 %v1508
        %v1792 = vunpack.c.l.b16 %v1520
        %v1793 = vpack.c.b16 %v1792, %v1791
        %v1796 = vsel %vm1637, %v1790, 0
        %1798 = vmatpush.bf16.msra.mxu0 0
        %1799 = vmatpush.bf16.msra.mxu0 0
        %1800 = vmatpush.bf16.msra.mxu0 0
        %1801 = vmatpush.bf16.msra.mxu0 0
        %1802 = vmatpush.bf16.msra.mxu0 0
        %1803 = vmatpush.bf16.msra.mxu0 0
        %1804 = vmatpush.bf16.msra.mxu0 0
        %1805 = vmatpush.bf16.msra.mxu0 %v1793
        %1806 = vmatmul.bf16.gmra.mxu0 %v1796
        %v1807 = vpop.f32.mrf.mxu0
        %v1808 = vadd.f32 0.0, %v1807
        %v1809 = vpop.f32.mrf.mxu0
        %v1810 = vadd.f32 0.0, %v1809
        %1811 = vdwg.mxu0
        %v1814 = vunpack.c.l.b16 %v1732
        %v1815 = vunpack.c.l.b16 %v1733
        %v1816 = vpack.c.b16 %v1815, %v1814
        %v1817 = vunpack.c.l.b16 %v1511
        %v1818 = vunpack.c.l.b16 %v1523
        %v1819 = vpack.c.b16 %v1818, %v1817
        %v1822 = vsel %vm1637, %v1816, 0
        %1824 = vmatpush.bf16.msra.mxu0 0
        %1825 = vmatpush.bf16.msra.mxu0 0
        %1826 = vmatpush.bf16.msra.mxu0 0
        %1827 = vmatpush.bf16.msra.mxu0 0
        %1828 = vmatpush.bf16.msra.mxu0 0
        %1829 = vmatpush.bf16.msra.mxu0 0
        %1830 = vmatpush.bf16.msra.mxu0 0
        %1831 = vmatpush.bf16.msra.mxu0 %v1819
        %1832 = vmatmul.bf16.gmra.mxu0 %v1822
        %v1833 = vpop.f32.mrf.mxu0
        %v1834 = vadd.f32 0.0, %v1833
        %v1835 = vpop.f32.mrf.mxu0
        %v1836 = vadd.f32 0.0, %v1835
        %1837 = vdwg.mxu0
        %v1838 = vrot.slane %v1808, 4
        %vm1839 = vcmask 1047556
        %v1840 = vsel %vm1839, %v1838, %v1756
        %v1841 = vrot.slane %v1756, 4
        %v1842 = vsel %vm1839, %v1808, %v1841
        %v1844 = vunpack.c.l.s4 1983009808
        %v1845 = vunpack.c.0.s8 %v1844
        %v1846 = vperm.slane %v1840, %v1845
        %v1848 = vunpack.c.l.s4 1983009808
        %v1849 = vunpack.c.0.s8 %v1848
        %v1850 = vperm.slane %v1842, %v1849
        %v1851 = vrot.slane %v1834, 4
        %v1852 = vsel %vm1839, %v1851, %v1782
        %v1853 = vrot.slane %v1782, 4
        %v1854 = vsel %vm1839, %v1834, %v1853
        %v1856 = vunpack.c.l.s4 1983009808
        %v1857 = vunpack.c.0.s8 %v1856
        %v1858 = vperm.slane %v1852, %v1857
        %v1860 = vunpack.c.l.s4 1983009808
        %v1861 = vunpack.c.0.s8 %v1860
        %v1862 = vperm.slane %v1854, %v1861
        %v1863 = vrot.slane %v1858, 4
        %v1864 = vsel %vm1839, %v1863, %v1846
        %v1865 = vrot.slane %v1846, 4
        %v1866 = vsel %vm1839, %v1858, %v1865
        %v1868 = vunpack.c.l.s4 1934713408
        %v1869 = vunpack.c.0.s8 %v1868
        %v1870 = vperm.slane %v1864, %v1869
        %v1872 = vunpack.c.l.s4 1934713408
        %v1873 = vunpack.c.0.s8 %v1872
        %v1874 = vperm.slane %v1866, %v1873
        %v1875 = vrot.slane %v1862, 4
        %v1876 = vsel %vm1839, %v1875, %v1850
        %v1877 = vrot.slane %v1850, 4
        %v1878 = vsel %vm1839, %v1862, %v1877
        %v1880 = vunpack.c.l.s4 1934713408
        %v1881 = vunpack.c.0.s8 %v1880
        %v1882 = vperm.slane %v1876, %v1881
        %v1884 = vunpack.c.l.s4 1934713408
        %v1885 = vunpack.c.0.s8 %v1884
        %v1886 = vperm.slane %v1878, %v1885
        %v1887 = vrot.slane %v1870, 4
        %v1888 = vsel %vm1839, 0.0, %v1887
        %v1889 = vrot.slane %v1874, 4
        %v1890 = vsel %vm1839, 0.0, %v1889
        %v1891 = vrot.slane %v1882, 4
        %v1892 = vsel %vm1839, 0.0, %v1891
        %v1893 = vrot.slane %v1886, 4
        %v1894 = vsel %vm1839, 0.0, %v1893
        %v1895 = vrot.slane %v1810, 4
        %v1896 = vsel %vm1839, %v1895, %v1758
        %v1897 = vrot.slane %v1758, 4
        %v1898 = vsel %vm1839, %v1810, %v1897
        %v1900 = vunpack.c.l.s4 1983009808
        %v1901 = vunpack.c.0.s8 %v1900
        %v1902 = vperm.slane %v1896, %v1901
        %v1904 = vunpack.c.l.s4 1983009808
        %v1905 = vunpack.c.0.s8 %v1904
        %v1906 = vperm.slane %v1898, %v1905
        %v1907 = vrot.slane %v1836, 4
        %v1908 = vsel %vm1839, %v1907, %v1784
        %v1909 = vrot.slane %v1784, 4
        %v1910 = vsel %vm1839, %v1836, %v1909
        %v1912 = vunpack.c.l.s4 1983009808
        %v1913 = vunpack.c.0.s8 %v1912
        %v1914 = vperm.slane %v1908, %v1913
        %v1916 = vunpack.c.l.s4 1983009808
        %v1917 = vunpack.c.0.s8 %v1916
        %v1918 = vperm.slane %v1910, %v1917
        %v1919 = vrot.slane %v1914, 4
        %v1920 = vsel %vm1839, %v1919, %v1902
        %v1921 = vrot.slane %v1902, 4
        %v1922 = vsel %vm1839, %v1914, %v1921
        %v1924 = vunpack.c.l.s4 1934713408
        %v1925 = vunpack.c.0.s8 %v1924
        %v1926 = vperm.slane %v1920, %v1925
        %v1928 = vunpack.c.l.s4 1934713408
        %v1929 = vunpack.c.0.s8 %v1928
        %v1930 = vperm.slane %v1922, %v1929
        %v1931 = vrot.slane %v1918, 4
        %v1932 = vsel %vm1839, %v1931, %v1906
        %v1933 = vrot.slane %v1906, 4
        %v1934 = vsel %vm1839, %v1918, %v1933
        %v1936 = vunpack.c.l.s4 1934713408
        %v1937 = vunpack.c.0.s8 %v1936
        %v1938 = vperm.slane %v1932, %v1937
        %v1940 = vunpack.c.l.s4 1934713408
        %v1941 = vunpack.c.0.s8 %v1940
        %v1942 = vperm.slane %v1934, %v1941
        %v1943 = vrot.slane %v1926, 4
        %v1944 = vsel %vm1839, 0.0, %v1943
        %v1945 = vrot.slane %v1930, 4
        %v1946 = vsel %vm1839, 0.0, %v1945
        %v1947 = vrot.slane %v1938, 4
        %v1948 = vsel %vm1839, 0.0, %v1947
        %v1949 = vrot.slane %v1942, 4
        %v1950 = vsel %vm1839, 0.0, %v1949
        %v1951 = vsel %vm1839, %v1889, %v1870
        %v1953 = vunpack.c.l.s4 1983009808
        %v1954 = vunpack.c.0.s8 %v1953
        %v1955 = vperm.slane %v1951, %v1954
        %v1956 = vrot.slane %v1890, 4
        %v1957 = vsel %vm1839, %v1956, %v1888
        %v1959 = vunpack.c.l.s4 1983009808
        %v1960 = vunpack.c.0.s8 %v1959
        %v1961 = vperm.slane %v1957, %v1960
        %v1962 = vsel %vm1839, %v1893, %v1882
        %v1964 = vunpack.c.l.s4 1983009808
        %v1965 = vunpack.c.0.s8 %v1964
        %v1966 = vperm.slane %v1962, %v1965
        %v1967 = vrot.slane %v1894, 4
        %v1968 = vsel %vm1839, %v1967, %v1892
        %v1970 = vunpack.c.l.s4 1983009808
        %v1971 = vunpack.c.0.s8 %v1970
        %v1972 = vperm.slane %v1968, %v1971
        %v1973 = vrot.slane %v1961, 4
        %v1974 = vsel %vm1839, %v1973, %v1955
        %v1975 = vrot.slane %v1955, 4
        %v1976 = vsel %vm1839, %v1961, %v1975
        %v1978 = vunpack.c.l.s4 1934713408
        %v1979 = vunpack.c.0.s8 %v1978
        %v1980 = vperm.slane %v1974, %v1979
        %v1982 = vunpack.c.l.s4 1934713408
        %v1983 = vunpack.c.0.s8 %v1982
        %v1984 = vperm.slane %v1976, %v1983
        %v1985 = vrot.slane %v1972, 4
        %v1986 = vsel %vm1839, %v1985, %v1966
        %v1987 = vrot.slane %v1966, 4
        %v1988 = vsel %vm1839, %v1972, %v1987
        %v1990 = vunpack.c.l.s4 1934713408
        %v1991 = vunpack.c.0.s8 %v1990
        %v1992 = vperm.slane %v1986, %v1991
        %v1994 = vunpack.c.l.s4 1934713408
        %v1995 = vunpack.c.0.s8 %v1994
        %v1996 = vperm.slane %v1988, %v1995
        %v1997 = vrot.slane %v1992, 4
        %v1998 = vsel %vm1839, %v1997, %v1980
        %v1999 = vrot.slane %v1980, 4
        %v2000 = vsel %vm1839, %v1992, %v1999
        %v2001 = vrot.slane %v1996, 4
        %v2002 = vsel %vm1839, %v2001, %v1984
        %v2003 = vrot.slane %v1984, 4
        %v2004 = vsel %vm1839, %v1996, %v2003
        %v2005 = vsel %vm1839, %v1945, %v1926
        %v2007 = vunpack.c.l.s4 1983009808
        %v2008 = vunpack.c.0.s8 %v2007
        %v2009 = vperm.slane %v2005, %v2008
        %v2010 = vrot.slane %v1946, 4
        %v2011 = vsel %vm1839, %v2010, %v1944
        %v2013 = vunpack.c.l.s4 1983009808
        %v2014 = vunpack.c.0.s8 %v2013
        %v2015 = vperm.slane %v2011, %v2014
        %v2016 = vsel %vm1839, %v1949, %v1938
        %v2018 = vunpack.c.l.s4 1983009808
        %v2019 = vunpack.c.0.s8 %v2018
        %v2020 = vperm.slane %v2016, %v2019
        %v2021 = vrot.slane %v1950, 4
        %v2022 = vsel %vm1839, %v2021, %v1948
        %v2024 = vunpack.c.l.s4 1983009808
        %v2025 = vunpack.c.0.s8 %v2024
        %v2026 = vperm.slane %v2022, %v2025
        %v2027 = vrot.slane %v2015, 4
        %v2028 = vsel %vm1839, %v2027, %v2009
        %v2029 = vrot.slane %v2009, 4
        %v2030 = vsel %vm1839, %v2015, %v2029
        %v2032 = vunpack.c.l.s4 1934713408
        %v2033 = vunpack.c.0.s8 %v2032
        %v2034 = vperm.slane %v2028, %v2033
        %v2036 = vunpack.c.l.s4 1934713408
        %v2037 = vunpack.c.0.s8 %v2036
        %v2038 = vperm.slane %v2030, %v2037
        %v2039 = vrot.slane %v2026, 4
        %v2040 = vsel %vm1839, %v2039, %v2020
        %v2041 = vrot.slane %v2020, 4
        %v2042 = vsel %vm1839, %v2026, %v2041
        %v2044 = vunpack.c.l.s4 1934713408
        %v2045 = vunpack.c.0.s8 %v2044
        %v2046 = vperm.slane %v2040, %v2045
        %v2048 = vunpack.c.l.s4 1934713408
        %v2049 = vunpack.c.0.s8 %v2048
        %v2050 = vperm.slane %v2042, %v2049
        %v2051 = vrot.slane %v2046, 4
        %v2052 = vsel %vm1839, %v2051, %v2034
        %v2053 = vrot.slane %v2034, 4
        %v2054 = vsel %vm1839, %v2046, %v2053
        %v2055 = vrot.slane %v2050, 4
        %v2056 = vsel %vm1839, %v2055, %v2038
        %v2057 = vrot.slane %v2038, 4
        %v2058 = vsel %vm1839, %v2050, %v2057
        %2061 = vrot.lane.b32.xlu0 %v2000, 8
        %v2062 = vpop.permute.xlu0 %2061
        %2063 = vrot.lane.b32.xlu0 %v2054, 8
        %v2064 = vpop.permute.xlu0 %2063
        %2069 = vrot.lane.b32.xlu0 %v2002, 16
        %v2070 = vpop.permute.xlu0 %2069
        %2071 = vrot.lane.b32.xlu0 %v2056, 16
        %v2072 = vpop.permute.xlu0 %2071
        %2077 = vrot.lane.b32.xlu0 %v2004, 24
        %v2078 = vpop.permute.xlu0 %2077
        %2079 = vrot.lane.b32.xlu0 %v2058, 24
        %v2080 = vpop.permute.xlu0 %2079
        %v2083 = vsel %vm1530, %v1998, %v2062
        %v2084 = vsel %vm1530, %v2052, %v2064
        %v2085 = vsel %vm1637, %v2083, %v2070
        %v2086 = vsel %vm1637, %v2084, %v2072
        %vm2087 = vcmask 195584
        %v2088 = vsel %vm2087, %v2085, %v2078
        %v2089 = vsel %vm2087, %v2086, %v2080
        %v2090 = vpack.c.bf16 %v2089, %v2088
        %v2091 = vld [vmem:[#allocation6] sm:$0xf]
        %v2092 = vld [vmem:[#allocation6 + $0x4] sm:$0xf]
        %v2093 = vld [vmem:[#allocation6 + $0x8] sm:$0xf]
        %v2094 = vld [vmem:[#allocation6 + $0xc] sm:$0xf]
        %v2095 = vld [vmem:[%s9] sm:$0x1]
        %v2097 = vperm.slane %v2095, 0
        %v2103 = vunpack.c.l.b16 %v2091
        %v2104 = vunpack.c.l.b16 %v2092
        %v2105 = vunpack.c.l.b16 %v2093
        %v2106 = vunpack.c.l.b16 %v2094
        %v2107 = vpack.c.b16 %v2104, %v2103
        %v2108 = vpack.c.b16 %v2106, %v2105
        %v2112 = vsel %vm702, %v2090, 0
        %2114 = vmatpush.bf16.msra.mxu0 0
        %2115 = vmatpush.bf16.msra.mxu0 0
        %2116 = vmatpush.bf16.msra.mxu0 0
        %2117 = vmatpush.bf16.msra.mxu0 0
        %2118 = vmatpush.bf16.msra.mxu0 0
        %2119 = vmatpush.bf16.msra.mxu0 0
        %2120 = vmatpush.bf16.msra.mxu0 %v2108
        %2121 = vmatpush.bf16.msra.mxu0 %v2107
        %2122 = vmatmul.bf16.gmra.mxu0 %v2112
        %v2123 = vpop.f32.mrf.mxu0
        %v2124 = vadd.f32 %v2097, %v2123
        %v2125 = vpop.f32.mrf.mxu0
        %v2126 = vadd.f32 %v2097, %v2125
        %2127 = vdwg.mxu0
        %v2128 = vadd.f32 %v2124, %v674
        %v2129 = vadd.f32 %v2126, %v675
        %v2130 = vsel %vm702, %v2128, 0.0
        %2131 = vadd.xlane.f32.xlu0 %v2130
        %v2132 = vpop.xlane.xlu0 %2131
        %v2133 = vsel %vm702, %v2129, 0.0
        %2134 = vadd.xlane.f32.xlu0 %v2133
        %v2135 = vpop.xlane.xlu0 %2134
        %v2136 = vrcp.pop 32.0
        %v2137 = vmul.f32 32.0, %v2136
        %v2138 = vsub.f32 1.0, %v2137
        %v2139 = vmul.f32 %v2136, %v2138
        %v2140 = vadd.f32 %v2136, %v2139
        %vm2141 = vweird.f32 %v2136
        %v2142 = vsel %vm2141, %v2136, %v2140
        %v2143 = vmul.f32 %v2132, %v2142
        %v2144 = vmul.f32 %v2135, %v2142
        %v2145 = vsub.f32 %v2128, %v2143
        %v2146 = vsub.f32 %v2129, %v2144
        %v2147 = vmul.f32 %v2145, %v2145
        %v2148 = vmul.f32 %v2146, %v2146
        %v2149 = vsel %vm702, %v2147, 0.0
        %2150 = vadd.xlane.f32.xlu0 %v2149
        %v2151 = vpop.xlane.xlu0 %2150
        %v2152 = vsel %vm702, %v2148, 0.0
        %2153 = vadd.xlane.f32.xlu0 %v2152
        %v2154 = vpop.xlane.xlu0 %2153
        %v2155 = vmul.f32 %v2151, %v2142
        %v2156 = vmul.f32 %v2154, %v2142
        %v2157 = vadd.f32 %v2155, 1e-05
        %v2158 = vadd.f32 %v2156, 1e-05
        %v2159 = vrsqrt.pop %v2157
        %v2160 = vmul.f32 %v2159, %v2157
        %v2161 = vmul.f32 %v2160, %v2159
        %v2162 = vmul.f32 0.5, %v2161
        %v2163 = vsub.f32 1.5, %v2162
        %v2164 = vmul.f32 %v2159, %v2163
        %vm2165 = vweird.f32 %v2157
        %vm2166 = vweird.f32 %v2159
        %vm2167 = vmor %vm2165, %vm2166
        %v2168 = vsel %vm2167, %v2159, %v2164
        %v2169 = vrsqrt.pop %v2158
        %v2170 = vmul.f32 %v2169, %v2158
        %v2171 = vmul.f32 %v2170, %v2169
        %v2172 = vmul.f32 0.5, %v2171
        %v2173 = vsub.f32 1.5, %v2172
        %v2174 = vmul.f32 %v2169, %v2173
        %vm2175 = vweird.f32 %v2158
        %vm2176 = vweird.f32 %v2169
        %vm2177 = vmor %vm2175, %vm2176
        %v2178 = vsel %vm2177, %v2169, %v2174
        %v2179 = vmul.f32 %v2145, %v2168
        %v2180 = vmul.f32 %v2146, %v2178
        %v2181 = vld [vmem:[%s10] sm:$0x1]
        %v2183 = vperm.slane %v2181, 0
        %v2185 = vmul.f32 %v2179, %v2183
        %v2186 = vmul.f32 %v2180, %v2183
        %v2187 = vld [vmem:[%s11] sm:$0x1]
        %v2189 = vperm.slane %v2187, 0
        %v2191 = vadd.f32 %v2185, %v2189
        %v2192 = vadd.f32 %v2186, %v2189
        %v2193 = vpack.c.bf16 %v2192, %v2191
        %v2194 = vld [vmem:[%s12] sm:$0xff]
        %v2195 = vld [vmem:[%s12 + $0x8] sm:$0xff]
        %v2196 = vld [vmem:[%s12 + $0x10] sm:$0xff]
        %v2197 = vld [vmem:[%s12 + $0x18] sm:$0xff]
        %v2198 = vld [vmem:[#allocation7] sm:$0x3]
        %v2200 = vperm.slane %v2198, 0
        %v2201 = vperm.slane %v2198, 1
        %v2208 = vunpack.c.l.b16 %v2194
        %v2209 = vunpack.c.h.b16 %v2194
        %v2210 = vunpack.c.l.b16 %v2195
        %v2211 = vunpack.c.h.b16 %v2195
        %v2212 = vunpack.c.l.b16 %v2196
        %v2213 = vunpack.c.h.b16 %v2196
        %v2214 = vunpack.c.l.b16 %v2197
        %v2215 = vunpack.c.h.b16 %v2197
        %v2216 = vpack.c.b16 %v2210, %v2208
        %v2217 = vpack.c.b16 %v2211, %v2209
        %v2218 = vpack.c.b16 %v2214, %v2212
        %v2219 = vpack.c.b16 %v2215, %v2213
        %v2225 = vsel %vm702, %v2193, 0
        %2227 = vmatpush.bf16.msra.mxu0 0
        %2228 = vmatpush.bf16.msra.mxu0 0
        %2229 = vmatpush.bf16.msra.mxu0 0
        %2230 = vmatpush.bf16.msra.mxu0 0
        %2231 = vmatpush.bf16.msra.mxu0 0
        %2232 = vmatpush.bf16.msra.mxu0 0
        %2233 = vmatpush.bf16.msra.mxu0 %v2218
        %2234 = vmatpush.bf16.msra.mxu0 %v2216
        %2235 = vmatmul.bf16.gmra.mxu0 %v2225
        %v2236 = vpop.f32.mrf.mxu0
        %v2237 = vadd.f32 %v2200, %v2236
        %v2238 = vpop.f32.mrf.mxu0
        %v2239 = vadd.f32 %v2200, %v2238
        %2240 = vdwg.mxu0
        %2241 = vmatpush.bf16.msra.mxu0 0
        %2242 = vmatpush.bf16.msra.mxu0 0
        %2243 = vmatpush.bf16.msra.mxu0 0
        %2244 = vmatpush.bf16.msra.mxu0 0
        %2245 = vmatpush.bf16.msra.mxu0 0
        %2246 = vmatpush.bf16.msra.mxu0 0
        %2247 = vmatpush.bf16.msra.mxu0 %v2219
        %2248 = vmatpush.bf16.msra.mxu0 %v2217
        %2249 = vmatmul.bf16.gmra.mxu0 %v2225
        %v2250 = vpop.f32.mrf.mxu0
        %v2251 = vadd.f32 %v2201, %v2250
        %v2252 = vpop.f32.mrf.mxu0
        %v2253 = vadd.f32 %v2201, %v2252
        %2254 = vdwg.mxu0
        %v2255 = vmax.f32 %v2237, 0.0
        %v2256 = vmax.f32 %v2251, 0.0
        %v2257 = vmax.f32 %v2239, 0.0
        %v2258 = vmax.f32 %v2253, 0.0
        %v2259 = vpack.c.bf16 %v2257, %v2255
        %v2260 = vpack.c.bf16 %v2258, %v2256
        %v2261 = vld [vmem:[%s14] sm:$0xf]
        %v2262 = vld [vmem:[%s14 + $0x4] sm:$0xf]
        %v2263 = vld [vmem:[%s14 + $0x8] sm:$0xf]
        %v2264 = vld [vmem:[%s14 + $0xc] sm:$0xf]
        %v2265 = vld [vmem:[%s14 + $0x10] sm:$0xf]
        %v2266 = vld [vmem:[%s14 + $0x14] sm:$0xf]
        %v2267 = vld [vmem:[%s14 + $0x18] sm:$0xf]
        %v2268 = vld [vmem:[%s14 + $0x1c] sm:$0xf]
        %v2269 = vld [vmem:[%s14 + $0x20] sm:$0xf]
        %v2270 = vld [vmem:[%s14 + $0x24] sm:$0xf]
        %v2271 = vld [vmem:[%s14 + $0x28] sm:$0xf]
        %v2272 = vld [vmem:[%s14 + $0x2c] sm:$0xf]
        %v2273 = vld [vmem:[%s14 + $0x30] sm:$0xf]
        %v2274 = vld [vmem:[%s14 + $0x34] sm:$0xf]
        %v2275 = vld [vmem:[%s14 + $0x38] sm:$0xf]
        %v2276 = vld [vmem:[%s14 + $0x3c] sm:$0xf]
        %v2277 = vld [vmem:[%s14 + $0x40] sm:$0xf]
        %v2278 = vld [vmem:[%s14 + $0x44] sm:$0xf]
        %v2279 = vld [vmem:[%s14 + $0x48] sm:$0xf]
        %v2280 = vld [vmem:[%s14 + $0x4c] sm:$0xf]
        %v2281 = vld [vmem:[%s14 + $0x50] sm:$0xf]
        %v2282 = vld [vmem:[%s14 + $0x54] sm:$0xf]
        %v2283 = vld [vmem:[%s14 + $0x58] sm:$0xf]
        %v2284 = vld [vmem:[%s14 + $0x5c] sm:$0xf]
        %v2285 = vld [vmem:[%s14 + $0x60] sm:$0xf]
        %v2286 = vld [vmem:[%s14 + $0x64] sm:$0xf]
        %v2287 = vld [vmem:[%s14 + $0x68] sm:$0xf]
        %v2288 = vld [vmem:[%s14 + $0x6c] sm:$0xf]
        %v2289 = vld [vmem:[%s14 + $0x70] sm:$0xf]
        %v2290 = vld [vmem:[%s14 + $0x74] sm:$0xf]
        %v2291 = vld [vmem:[%s14 + $0x78] sm:$0xf]
        %v2292 = vld [vmem:[%s14 + $0x7c] sm:$0xf]
        %v2293 = vld [vmem:[#allocation9] sm:$0x1]
        %v2295 = vperm.slane %v2293, 0
        %v2329 = vunpack.c.l.b16 %v2261
        %v2330 = vunpack.c.l.b16 %v2262
        %v2331 = vunpack.c.l.b16 %v2263
        %v2332 = vunpack.c.l.b16 %v2264
        %v2333 = vunpack.c.l.b16 %v2265
        %v2334 = vunpack.c.l.b16 %v2266
        %v2335 = vunpack.c.l.b16 %v2267
        %v2336 = vunpack.c.l.b16 %v2268
        %v2337 = vunpack.c.l.b16 %v2269
        %v2338 = vunpack.c.l.b16 %v2270
        %v2339 = vunpack.c.l.b16 %v2271
        %v2340 = vunpack.c.l.b16 %v2272
        %v2341 = vunpack.c.l.b16 %v2273
        %v2342 = vunpack.c.l.b16 %v2274
        %v2343 = vunpack.c.l.b16 %v2275
        %v2344 = vunpack.c.l.b16 %v2276
        %v2345 = vunpack.c.l.b16 %v2277
        %v2346 = vunpack.c.l.b16 %v2278
        %v2347 = vunpack.c.l.b16 %v2279
        %v2348 = vunpack.c.l.b16 %v2280
        %v2349 = vunpack.c.l.b16 %v2281
        %v2350 = vunpack.c.l.b16 %v2282
        %v2351 = vunpack.c.l.b16 %v2283
        %v2352 = vunpack.c.l.b16 %v2284
        %v2353 = vunpack.c.l.b16 %v2285
        %v2354 = vunpack.c.l.b16 %v2286
        %v2355 = vunpack.c.l.b16 %v2287
        %v2356 = vunpack.c.l.b16 %v2288
        %v2357 = vunpack.c.l.b16 %v2289
        %v2358 = vunpack.c.l.b16 %v2290
        %v2359 = vunpack.c.l.b16 %v2291
        %v2360 = vunpack.c.l.b16 %v2292
        %v2361 = vpack.c.b16 %v2330, %v2329
        %v2362 = vpack.c.b16 %v2332, %v2331
        %v2363 = vpack.c.b16 %v2334, %v2333
        %v2364 = vpack.c.b16 %v2336, %v2335
        %v2365 = vpack.c.b16 %v2338, %v2337
        %v2366 = vpack.c.b16 %v2340, %v2339
        %v2367 = vpack.c.b16 %v2342, %v2341
        %v2368 = vpack.c.b16 %v2344, %v2343
        %v2369 = vpack.c.b16 %v2346, %v2345
        %v2370 = vpack.c.b16 %v2348, %v2347
        %v2371 = vpack.c.b16 %v2350, %v2349
        %v2372 = vpack.c.b16 %v2352, %v2351
        %v2373 = vpack.c.b16 %v2354, %v2353
        %v2374 = vpack.c.b16 %v2356, %v2355
        %v2375 = vpack.c.b16 %v2358, %v2357
        %v2376 = vpack.c.b16 %v2360, %v2359
        %2393 = vmatpush.bf16.msra.mxu0 %v2368
        %2394 = vmatpush.bf16.msra.mxu0 %v2367
        %2395 = vmatpush.bf16.msra.mxu0 %v2366
        %2396 = vmatpush.bf16.msra.mxu0 %v2365
        %2397 = vmatpush.bf16.msra.mxu0 %v2364
        %2398 = vmatpush.bf16.msra.mxu0 %v2363
        %2399 = vmatpush.bf16.msra.mxu0 %v2362
        %2400 = vmatpush.bf16.msra.mxu0 %v2361
        %2401 = vmatmul.bf16.gmra.mxu0 %v2259
        %v2402 = vpop.f32.mrf.mxu0
        %v2403 = vadd.f32 %v2295, %v2402
        %v2404 = vpop.f32.mrf.mxu0
        %v2405 = vadd.f32 %v2295, %v2404
        %2406 = vdwg.mxu0
        %2407 = vmatpush.bf16.msra.mxu0 %v2376
        %2408 = vmatpush.bf16.msra.mxu0 %v2375
        %2409 = vmatpush.bf16.msra.mxu0 %v2374
        %2410 = vmatpush.bf16.msra.mxu0 %v2373
        %2411 = vmatpush.bf16.msra.mxu0 %v2372
        %2412 = vmatpush.bf16.msra.mxu0 %v2371
        %2413 = vmatpush.bf16.msra.mxu0 %v2370
        %2414 = vmatpush.bf16.msra.mxu0 %v2369
        %2415 = vmatmul.bf16.gmra.mxu0 %v2260
        %v2416 = vpop.f32.mrf.mxu0
        %v2417 = vadd.f32 %v2403, %v2416
        %v2418 = vpop.f32.mrf.mxu0
        %v2419 = vadd.f32 %v2405, %v2418
        %2420 = vdwg.mxu0
        %v2421 = vadd.f32 %v2191, %v2417
        %v2422 = vadd.f32 %v2192, %v2419
        %v2423 = vsel %vm702, %v2421, 0.0
        %2424 = vadd.xlane.f32.xlu0 %v2423
        %v2425 = vpop.xlane.xlu0 %2424
        %v2426 = vsel %vm702, %v2422, 0.0
        %2427 = vadd.xlane.f32.xlu0 %v2426
        %v2428 = vpop.xlane.xlu0 %2427
        %v2429 = vmul.f32 %v2425, %v2142
        %v2430 = vmul.f32 %v2428, %v2142
        %v2431 = vsub.f32 %v2421, %v2429
        %v2432 = vsub.f32 %v2422, %v2430
        %v2433 = vmul.f32 %v2431, %v2431
        %v2434 = vmul.f32 %v2432, %v2432
        %v2435 = vsel %vm702, %v2433, 0.0
        %2436 = vadd.xlane.f32.xlu0 %v2435
        %v2437 = vpop.xlane.xlu0 %2436
        %v2438 = vsel %vm702, %v2434, 0.0
        %2439 = vadd.xlane.f32.xlu0 %v2438
        %v2440 = vpop.xlane.xlu0 %2439
        %v2441 = vmul.f32 %v2437, %v2142
        %v2442 = vmul.f32 %v2440, %v2142
        %v2443 = vadd.f32 %v2441, 1e-05
        %v2444 = vadd.f32 %v2442, 1e-05
        %v2445 = vrsqrt.pop %v2443
        %v2446 = vmul.f32 %v2445, %v2443
        %v2447 = vmul.f32 %v2446, %v2445
        %v2448 = vmul.f32 0.5, %v2447
        %v2449 = vsub.f32 1.5, %v2448
        %v2450 = vmul.f32 %v2445, %v2449
        %vm2451 = vweird.f32 %v2443
        %vm2452 = vweird.f32 %v2445
        %vm2453 = vmor %vm2451, %vm2452
        %v2454 = vsel %vm2453, %v2445, %v2450
        %v2455 = vrsqrt.pop %v2444
        %v2456 = vmul.f32 %v2455, %v2444
        %v2457 = vmul.f32 %v2456, %v2455
        %v2458 = vmul.f32 0.5, %v2457
        %v2459 = vsub.f32 1.5, %v2458
        %v2460 = vmul.f32 %v2455, %v2459
        %vm2461 = vweird.f32 %v2444
        %vm2462 = vweird.f32 %v2455
        %vm2463 = vmor %vm2461, %vm2462
        %v2464 = vsel %vm2463, %v2455, %v2460
        %v2465 = vmul.f32 %v2431, %v2454
        %v2466 = vmul.f32 %v2432, %v2464
        %v2467 = vld [vmem:[%s16] sm:$0x1]
        %v2469 = vperm.slane %v2467, 0
        %v2471 = vmul.f32 %v2465, %v2469
        %v2472 = vmul.f32 %v2466, %v2469
        %v2473 = vld [vmem:[%s17] sm:$0x1]
        %v2475 = vperm.slane %v2473, 0
        %v2477 = vadd.f32 %v2471, %v2475
        %v2478 = vadd.f32 %v2472, %v2475
        %2479 = vst.msk [vmem:[%s672] sm:$0xff] %vm702, %v2477
        %2480 = vst.msk [vmem:[%s672 + $0x8] sm:$0xff] %vm702, %v2478
        %p2481 = scmp.lt.s32.totalorder %s32, 1
        %s2482 = scalar_select %p2481, %s32, 1
        %s2483 = smul.addr %s2482, 2
        %s2484 = smul.addr %s2483, 8
        %s2485 = scalar_lea.vmem %s18, %s2484
        // Predicated region
        $region113: #{transformer_encoder.2} parent=91 // pred_check
          %p2486 = pneg %p438
        $region114: #{transformer_encoder.2} parent=91 // pred_check_branch
          %2488 = sbr.rel (%p2486) target = $region116
        $region115: #{transformer_encoder.2} parent=91 // pred_region
          _
        $region116: #{transformer_encoder.2} parent=91 // pred_fallthru
          _
      $region92: #{transformer_encoder.2} parent=5 // pred_fallthru
        _
      %p2489 = scmp.le.s32.totalorder 2, %s27
      // Predicated region
      $region117: #{transformer_encoder.2} parent=5 // pred_check
        %p2490 = pneg %p2489
      $region118: #{transformer_encoder.2} parent=5 // pred_check_branch
        %2492 = sbr.rel (%p2490) target = $region120
      $region119: #{transformer_encoder.2} parent=5 // pred_region
        %s2493 = ssub.s32 %s27, 2
        // Predicated region
        $region121: #{transformer_encoder.2} parent=119 // pred_check
          %p2494 = pneg %p444
        $region122: #{transformer_encoder.2} parent=119 // pred_check_branch
          %2496 = sbr.rel (%p2494) target = $region124
        $region123: #{transformer_encoder.2} parent=119 // pred_region
          %p2497 = scmp.lt.s32.totalorder %s33, 1
          %s2498 = scalar_select %p2497, %s33, 1
          %s2499 = smul.addr %s2498, 2
          %s2500 = smul.addr %s2499, 8
          %s2501 = scalar_lea.vmem %s18, %s2500
        $region124: #{transformer_encoder.2} parent=119 // pred_fallthru
          _
      $region120: #{transformer_encoder.2} parent=5 // pred_fallthru
        _
    $region6: #{transformer_encoder.2} parent=1 // loop_footer
      %s31 = sadd.s32 1, %s27
    $region7: #{transformer_encoder.2} parent=1 // loop_footer_branch
      %26 = sbr.rel target = $region3
    $region8: #{transformer_encoder.2} parent=1 // loop_exit
      _
    %2502 = vsyncpa [#allocation3], 1
    %s2503 = scalar_lea.sflag [#allocation3], 1
    %2504 = vsyncpa %s2503, 1
    %2505 = vsyncpa [#allocation5], 1
    %2506 = vsyncpa [#allocation8], 1

</llo_original>
